<compile_context>
chip_gen: v7x
topology: tpu7x:2x2x1
jax: 0.10.0
libtpu: 0.0.40
codegen_flags: <defaults>
</compile_context>

<pallas_src>
import math
import functools

import jax
import jax.numpy as jnp
from jax.experimental import pallas as pl
from jax.experimental.pallas import tpu as pltpu

# ----- model hyper-parameters (small, consistent with the module) -----
D_MODEL = 32
N_HEADS = 4
D_HEAD = D_MODEL // N_HEADS
D_FF = 64
N_LAYERS = 2
EPS = 1e-6
NEG_INF = -1e9


def _pre_norm(x, ln_ref, idx):
    """LayerNorm with gain/bias read from the LN-parameter ref at the use site."""
    g = ln_ref[pl.ds(idx, 1), :]          # (1, D)
    b = ln_ref[pl.ds(idx + 1, 1), :]      # (1, D)
    mu = jnp.mean(x, axis=-1, keepdims=True)
    var = jnp.mean((x - mu) ** 2, axis=-1, keepdims=True)
    return (x - mu) * jax.lax.rsqrt(var + EPS) * g + b


# ---------------------------------------------------------------------------
# Fully fused encoder kernel: all layers + final LayerNorm in one invocation.
# ---------------------------------------------------------------------------
def _encoder_kernel(x_ref, mask_ref, ln_ref, wqkv_ref, bqkv_ref, wo_ref, bo_ref,
                    w1_ref, b1_ref, w2_ref, b2_ref, out_ref, *, batch, seq):
    B, S, D, H, DH = batch, seq, D_MODEL, N_HEADS, D_HEAD
    x = x_ref[...]                                           # (B*S, D) f32
    scale = 1.0 / math.sqrt(DH)

    # Additive attention bias: computed ONCE and pre-broadcast to the full
    # (H*B, S, S) score shape (hoisted out of the layer loop).
    bias = jnp.where(mask_ref[...] != 0.0, 0.0, NEG_INF)     # (B, 1, S)
    bias = jnp.concatenate([bias] * H, axis=0)               # (H*B, 1, S), n = h*B + b
    bias = jnp.broadcast_to(bias, (H * B, S, S))             # (H*B, S, S)

    for l in range(N_LAYERS):        # static unroll; all weights stay resident in VMEM
        # --- sublayer 1: pre-norm + fused-QKV multi-head self-attention + residual ---
        xn = _pre_norm(x, ln_ref, 4 * l)
        # Single fused QKV projection: (B*S, D) @ (D, 3D) -> (B*S, 3D).
        qkv = jnp.dot(xn, wqkv_ref[l],
                      preferred_element_type=jnp.float32) + bqkv_ref[l]
        qkv3 = qkv.reshape(B, S, 3 * D)

        # Head-major stacking along the leading (batch) axis so the score /
        # softmax / context steps are each ONE batched op over all H*B heads.
        def heads(base):
            return jnp.concatenate(
                [qkv3[:, :, base + h * DH: base + (h + 1) * DH] for h in range(H)],
                axis=0)                                       # (H*B, S, DH)

        qh, kh, vh = heads(0), heads(D), heads(2 * D)

        s = jnp.einsum('nqd,nkd->nqk', qh, kh,
                       preferred_element_type=jnp.float32) * scale      # (H*B, S, S)
        s = s + bias
        m = jnp.max(s, axis=-1, keepdims=True)
        e = jnp.exp(s - m)
        p = e * pl.reciprocal(jnp.sum(e, axis=-1, keepdims=True), approx=True)
        ctx = jnp.einsum('nqk,nkd->nqd', p, vh,
                         preferred_element_type=jnp.float32)             # (H*B, S, DH)

        # Re-assemble heads along lanes and apply W_o with ONE full matmul.
        ctx2d = jnp.concatenate(
            [ctx[h * B:(h + 1) * B].reshape(B * S, DH) for h in range(H)], axis=-1)
        x = x + jnp.dot(ctx2d, wo_ref[l],
                        preferred_element_type=jnp.float32) + bo_ref[l]

        # --- sublayer 2: pre-norm + position-wise feed-forward + residual ---
        xn2 = _pre_norm(x, ln_ref, 4 * l + 2)
        h1 = jnp.maximum(
            jnp.dot(xn2, w1_ref[l], preferred_element_type=jnp.float32) + b1_ref[l],
            0.0)
        x = x + jnp.dot(h1, w2_ref[l], preferred_element_type=jnp.float32) + b2_ref[l]

    # --- final encoder LayerNorm ---
    final = _pre_norm(x, ln_ref, 4 * N_LAYERS)

    # Lane-dense store (v5e: single vector-store slot): pack the (B*S, 32)
    # result into a (B*S*32/128, 128) slab so writeback is unmasked full-lane
    # vst.  Row-major flattening is preserved; the wrapper reshapes back.
    if out_ref.shape != final.shape:
        grp = out_ref.shape[1] // D
        f3 = final.reshape(out_ref.shape[0], grp, D)
        final = jnp.concatenate([f3[:, i, :] for i in range(grp)], axis=-1)
    out_ref[...] = final


# ---------------------------------------------------------------------------
# Wrapper
# ---------------------------------------------------------------------------
def _full_spec(shape):
    rank = len(shape)
    return pl.BlockSpec(shape, lambda i, _r=rank: (0,) * _r)


@jax.jit
def encoder_forward(x, mask, params):
    ln, wqkv, bqkv, wo, bo, w1, b1, w2, b2 = params
    B, S, D = x.shape
    x2d = x.reshape(B * S, D)              # free, wrapper-side reshape

    # Lane-dense output layout when it tiles evenly into 128 lanes.
    if D < 128 and 128 % D == 0 and (B * S) % (128 // D) == 0:
        out_shape = ((B * S) // (128 // D), 128)
    else:
        out_shape = (B * S, D)

    kernel = functools.partial(_encoder_kernel, batch=B, seq=S)
    inputs = (x2d, mask, ln, wqkv, bqkv, wo, bo, w1, b1, w2, b2)
    out = pl.pallas_call(
        kernel,
        out_shape=jax.ShapeDtypeStruct(out_shape, jnp.float32),
        grid=(1,),                          # single block: everything fits in VMEM
        in_specs=[_full_spec(a.shape) for a in inputs],
        out_specs=_full_spec(out_shape),
        compiler_params=pltpu.CompilerParams(dimension_semantics=("arbitrary",)),
    )(*inputs)
    return out.reshape(B, S, D)


# ---------------------------------------------------------------------------
# Pure-JAX reference (same math, exact division) for a correctness check.
# ---------------------------------------------------------------------------
def encoder_reference(x, mask, params):
    ln, wqkv, bqkv, wo, bo, w1, b1, w2, b2 = params
    B, S, D = x.shape
    H, DH = N_HEADS, D_HEAD
    bias = jnp.where(mask != 0.0, 0.0, NEG_INF)               # (B,1,S)
    scale = 1.0 / math.sqrt(DH)

    def lnorm(v, g, b):
        mu = v.mean(-1, keepdims=True)
        var = ((v - mu) ** 2).mean(-1, keepdims=True)
        return (v - mu) / jnp.sqrt(var + EPS) * g + b

    for l in range(N_LAYERS):
        xn = lnorm(x, ln[4 * l], ln[4 * l + 1])
        qkv = xn @ wqkv[l] + bqkv[l]
        q, k, v = qkv[..., :D], qkv[..., D:2 * D], qkv[..., 2 * D:]
        qh = q.reshape(B, S, H, DH).transpose(0, 2, 1, 3)
        kh = k.reshape(B, S, H, DH).transpose(0, 2, 1, 3)
        vh = v.reshape(B, S, H, DH).transpose(0, 2, 1, 3)
        s = jnp.einsum('bhqd,bhkd->bhqk', qh, kh) * scale + bias[:, None, :, :]
        p = jax.nn.softmax(s, axis=-1)
        ctx = jnp.einsum('bhqk,bhkd->bhqd', p, vh).transpose(0, 2, 1, 3).reshape(B, S, D)
        x = x + ctx @ wo[l] + bo[l]
        xn2 = lnorm(x, ln[4 * l + 2], ln[4 * l + 3])
        h1 = jnp.maximum(xn2 @ w1[l] + b1[l], 0.0)
        x = x + h1 @ w2[l] + b2[l]
    return lnorm(x, ln[4 * N_LAYERS], ln[4 * N_LAYERS + 1])


# ---------------------------------------------------------------------------
# Deterministic parameter init (synthetic — shapes follow the module's __init__),
# packed into a handful of stacked arrays (Q/K/V fused wrapper-side).
# ---------------------------------------------------------------------------
def init_params(key):
    ks = iter(jax.random.split(key, N_LAYERS * 8))

    def lin_w(din, dout):
        return jax.random.normal(next(ks), (din, dout), jnp.float32) / math.sqrt(din)

    def lin_b(dout):
        return jax.random.normal(next(ks), (1, dout), jnp.float32) * 0.02

    ln_rows, wqkv, bqkv, wo, bo, w1, b1, w2, b2 = [], [], [], [], [], [], [], [], []
    for _ in range(N_LAYERS):
        wqkv.append(lin_w(D_MODEL, 3 * D_MODEL))
        bqkv.append(lin_b(3 * D_MODEL))
        wo.append(lin_w(D_MODEL, D_MODEL))
        bo.append(lin_b(D_MODEL))
        w1.append(lin_w(D_MODEL, D_FF))
        b1.append(lin_b(D_FF))
        w2.append(lin_w(D_FF, D_MODEL))
        b2.append(lin_b(D_MODEL))
        ln_rows += [jnp.ones((D_MODEL,), jnp.float32), jnp.zeros((D_MODEL,), jnp.float32),
                    jnp.ones((D_MODEL,), jnp.float32), jnp.zeros((D_MODEL,), jnp.float32)]
    ln_rows += [jnp.ones((D_MODEL,), jnp.float32), jnp.zeros((D_MODEL,), jnp.float32)]

    return (jnp.stack(ln_rows),          # (4*N_LAYERS + 2, D)
            jnp.stack(wqkv),             # (N_LAYERS, D, 3*D)   fused W_q|W_k|W_v
            jnp.stack(bqkv),             # (N_LAYERS, 1, 3*D)
            jnp.stack(wo),               # (N_LAYERS, D, D)
            jnp.stack(bo),               # (N_LAYERS, 1, D)
            jnp.stack(w1),               # (N_LAYERS, D, D_FF)
            jnp.stack(b1),               # (N_LAYERS, 1, D_FF)
            jnp.stack(w2),               # (N_LAYERS, D_FF, D)
            jnp.stack(b2))               # (N_LAYERS, 1, D)


if __name__ == "__main__":
    key = jax.random.PRNGKey(0)
    kx, kp = jax.random.split(key)

    B, S = 2, 8
    x = jax.random.normal(kx, (B, S, D_MODEL), jnp.float32)

    # padding mask: batch 0 uses all 8 positions, batch 1 uses 6
    lengths = jnp.array([S, S - 2])
    mask = (jnp.arange(S)[None, :] < lengths[:, None]).astype(jnp.float32)
    mask = mask[:, None, :]                                   # (B, 1, S)

    params = init_params(kp)

    out = jax.block_until_ready(encoder_forward(x, mask, params))
    ref = encoder_reference(x, mask, params)

    assert out.shape == (B, S, D_MODEL) and out.dtype == jnp.float32
    assert bool(jnp.all(jnp.isfinite(out)))
    assert float(jnp.max(jnp.abs(out - ref))) < 2e-2   # approx-reciprocal tolerance
    print("KERNEL_OK")
</pallas_src>

<mosaic_0001>
module attributes {stable_mosaic.version = 11 : i64} {
  func.func @_encoder_kernel(%arg0: i32, %arg1: memref<16x32xf32, #tpu.memory_space<vmem>>, %arg2: memref<2x1x8xf32, #tpu.memory_space<vmem>>, %arg3: memref<10x32xf32, #tpu.memory_space<vmem>>, %arg4: memref<2x32x96xf32, #tpu.memory_space<vmem>>, %arg5: memref<2x1x96xf32, #tpu.memory_space<vmem>>, %arg6: memref<2x32x32xf32, #tpu.memory_space<vmem>>, %arg7: memref<2x1x32xf32, #tpu.memory_space<vmem>>, %arg8: memref<2x32x64xf32, #tpu.memory_space<vmem>>, %arg9: memref<2x1x64xf32, #tpu.memory_space<vmem>>, %arg10: memref<2x64x32xf32, #tpu.memory_space<vmem>>, %arg11: memref<2x1x32xf32, #tpu.memory_space<vmem>>, %arg12: memref<4x128xf32, #tpu.memory_space<vmem>>) attributes {dimension_semantics = [#tpu.dimension_semantics<arbitrary>], iteration_bounds = array<i64: 1>, scalar_prefetch = 0 : i64, scratch_operands = 0 : i64, tpu.core_type = #tpu.core_type<tc>, window_params = [{pipeline_mode = #tpu.pipeline_mode<synchronous>, transform_indices = @transform_0, window_bounds = array<i64: 16, 32>}, {pipeline_mode = #tpu.pipeline_mode<synchronous>, transform_indices = @transform_1, window_bounds = array<i64: 2, 1, 8>}, {pipeline_mode = #tpu.pipeline_mode<synchronous>, transform_indices = @transform_2, window_bounds = array<i64: 10, 32>}, {pipeline_mode = #tpu.pipeline_mode<synchronous>, transform_indices = @transform_3, window_bounds = array<i64: 2, 32, 96>}, {pipeline_mode = #tpu.pipeline_mode<synchronous>, transform_indices = @transform_4, window_bounds = array<i64: 2, 1, 96>}, {pipeline_mode = #tpu.pipeline_mode<synchronous>, transform_indices = @transform_5, window_bounds = array<i64: 2, 32, 32>}, {pipeline_mode = #tpu.pipeline_mode<synchronous>, transform_indices = @transform_6, window_bounds = array<i64: 2, 1, 32>}, {pipeline_mode = #tpu.pipeline_mode<synchronous>, transform_indices = @transform_7, window_bounds = array<i64: 2, 32, 64>}, {pipeline_mode = #tpu.pipeline_mode<synchronous>, transform_indices = @transform_8, window_bounds = array<i64: 2, 1, 64>}, {pipeline_mode = #tpu.pipeline_mode<synchronous>, transform_indices = @transform_9, window_bounds = array<i64: 2, 64, 32>}, {pipeline_mode = #tpu.pipeline_mode<synchronous>, transform_indices = @transform_10, window_bounds = array<i64: 2, 1, 32>}, {pipeline_mode = #tpu.pipeline_mode<synchronous>, transform_indices = @transform_11, window_bounds = array<i64: 4, 128>}]} {
    %c0 = arith.constant 0 : index
    %c0_0 = arith.constant 0 : index
    %0 = vector.load %arg1[%c0, %c0_0] : memref<16x32xf32, #tpu.memory_space<vmem>>, vector<16x32xf32>
    %c0_1 = arith.constant 0 : index
    %c0_2 = arith.constant 0 : index
    %c0_3 = arith.constant 0 : index
    %1 = vector.load %arg2[%c0_1, %c0_2, %c0_3] : memref<2x1x8xf32, #tpu.memory_space<vmem>>, vector<2x1x8xf32>
    %cst = arith.constant 0.000000e+00 : f32
    %2 = vector.broadcast %cst : f32 to vector<2x1x8xf32>
    %3 = arith.cmpf one, %1, %2 : vector<2x1x8xf32>
    %cst_4 = arith.constant 0.000000e+00 : f32
    %cst_5 = arith.constant -1.000000e+09 : f32
    %4 = vector.broadcast %cst_4 : f32 to vector<2x1x8xf32>
    %5 = vector.broadcast %cst_5 : f32 to vector<2x1x8xf32>
    %6 = arith.select %3, %4, %5 : vector<2x1x8xi1>, vector<2x1x8xf32>
    %7 = tpu.concatenate %6, %6, %6, %6 in 0 : vector<2x1x8xf32>, vector<2x1x8xf32>, vector<2x1x8xf32>, vector<2x1x8xf32> -> vector<8x1x8xf32>
    %8 = vector.shape_cast %7 : vector<8x1x8xf32> to vector<8x1x8xf32>
    %9 = vector.broadcast %8 : vector<8x1x8xf32> to vector<8x8x8xf32>
    %c0_6 = arith.constant 0 : index
    %c0_7 = arith.constant 0 : index
    %10 = vector.load %arg3[%c0_6, %c0_7] : memref<10x32xf32, #tpu.memory_space<vmem>>, vector<1x32xf32>
    %c1 = arith.constant 1 : index
    %c0_8 = arith.constant 0 : index
    %11 = vector.load %arg3[%c1, %c0_8] : memref<10x32xf32, #tpu.memory_space<vmem>>, vector<1x32xf32>
    %cst_9 = arith.constant dense<0.000000e+00> : vector<16xf32>
    %12 = vector.multi_reduction <add>, %0, %cst_9 [1] : vector<16x32xf32> to vector<16xf32>
    %13 = vector.shape_cast %12 : vector<16xf32> to vector<16x1xf32>
    %cst_10 = arith.constant 3.200000e+01 : f32
    %14 = vector.broadcast %cst_10 : f32 to vector<16x1xf32>
    %15 = arith.divf %13, %14 : vector<16x1xf32>
    %16 = vector.broadcast %15 : vector<16x1xf32> to vector<16x32xf32>
    %17 = arith.subf %0, %16 : vector<16x32xf32>
    %18 = arith.mulf %17, %17 : vector<16x32xf32>
    %cst_11 = arith.constant dense<0.000000e+00> : vector<16xf32>
    %19 = vector.multi_reduction <add>, %18, %cst_11 [1] : vector<16x32xf32> to vector<16xf32>
    %20 = vector.shape_cast %19 : vector<16xf32> to vector<16x1xf32>
    %cst_12 = arith.constant 3.200000e+01 : f32
    %21 = vector.broadcast %cst_12 : f32 to vector<16x1xf32>
    %22 = arith.divf %20, %21 : vector<16x1xf32>
    %23 = vector.broadcast %15 : vector<16x1xf32> to vector<16x32xf32>
    %24 = arith.subf %0, %23 : vector<16x32xf32>
    %cst_13 = arith.constant 9.99999997E-7 : f32
    %25 = vector.broadcast %cst_13 : f32 to vector<16x1xf32>
    %26 = arith.addf %22, %25 : vector<16x1xf32>
    %27 = math.rsqrt %26 : vector<16x1xf32>
    %28 = vector.broadcast %27 : vector<16x1xf32> to vector<16x32xf32>
    %29 = arith.mulf %24, %28 : vector<16x32xf32>
    %30 = vector.broadcast %10 : vector<1x32xf32> to vector<16x32xf32>
    %31 = arith.mulf %29, %30 : vector<16x32xf32>
    %32 = vector.broadcast %11 : vector<1x32xf32> to vector<16x32xf32>
    %33 = arith.addf %31, %32 : vector<16x32xf32>
    %c0_14 = arith.constant 0 : index
    %c0_15 = arith.constant 0 : index
    %c0_16 = arith.constant 0 : index
    %34 = vector.load %arg4[%c0_14, %c0_15, %c0_16] : memref<2x32x96xf32, #tpu.memory_space<vmem>>, vector<1x32x96xf32>
    %35 = vector.shape_cast %34 : vector<1x32x96xf32> to vector<32x96xf32>
    %cst_17 = arith.constant dense<0.000000e+00> : vector<16x96xf32>
    %36 = tpu.matmul %33, %35, %cst_17 {dimension_numbers = #tpu.dot_dimension_numbers<[1], [0], [0], [1], [0, 0, 1, 1], [], []>} : vector<16x32xf32>, vector<32x96xf32>, vector<16x96xf32> -> vector<16x96xf32>
    %c0_18 = arith.constant 0 : index
    %c0_19 = arith.constant 0 : index
    %c0_20 = arith.constant 0 : index
    %37 = vector.load %arg5[%c0_18, %c0_19, %c0_20] : memref<2x1x96xf32, #tpu.memory_space<vmem>>, vector<1x1x96xf32>
    %38 = vector.shape_cast %37 : vector<1x1x96xf32> to vector<1x96xf32>
    %39 = vector.broadcast %38 : vector<1x96xf32> to vector<16x96xf32>
    %40 = arith.addf %36, %39 : vector<16x96xf32>
    %41 = vector.shape_cast %40 : vector<16x96xf32> to vector<2x8x96xf32>
    %42 = vector.extract_strided_slice %41 {offsets = [0, 0, 0], sizes = [2, 8, 8], strides = [1, 1, 1]} : vector<2x8x96xf32> to vector<2x8x8xf32>
    %43 = vector.extract_strided_slice %41 {offsets = [0, 0, 8], sizes = [2, 8, 8], strides = [1, 1, 1]} : vector<2x8x96xf32> to vector<2x8x8xf32>
    %44 = vector.extract_strided_slice %41 {offsets = [0, 0, 16], sizes = [2, 8, 8], strides = [1, 1, 1]} : vector<2x8x96xf32> to vector<2x8x8xf32>
    %45 = vector.extract_strided_slice %41 {offsets = [0, 0, 24], sizes = [2, 8, 8], strides = [1, 1, 1]} : vector<2x8x96xf32> to vector<2x8x8xf32>
    %46 = tpu.concatenate %42, %43, %44, %45 in 0 : vector<2x8x8xf32>, vector<2x8x8xf32>, vector<2x8x8xf32>, vector<2x8x8xf32> -> vector<8x8x8xf32>
    %47 = vector.extract_strided_slice %41 {offsets = [0, 0, 32], sizes = [2, 8, 8], strides = [1, 1, 1]} : vector<2x8x96xf32> to vector<2x8x8xf32>
    %48 = vector.extract_strided_slice %41 {offsets = [0, 0, 40], sizes = [2, 8, 8], strides = [1, 1, 1]} : vector<2x8x96xf32> to vector<2x8x8xf32>
    %49 = vector.extract_strided_slice %41 {offsets = [0, 0, 48], sizes = [2, 8, 8], strides = [1, 1, 1]} : vector<2x8x96xf32> to vector<2x8x8xf32>
    %50 = vector.extract_strided_slice %41 {offsets = [0, 0, 56], sizes = [2, 8, 8], strides = [1, 1, 1]} : vector<2x8x96xf32> to vector<2x8x8xf32>
    %51 = tpu.concatenate %47, %48, %49, %50 in 0 : vector<2x8x8xf32>, vector<2x8x8xf32>, vector<2x8x8xf32>, vector<2x8x8xf32> -> vector<8x8x8xf32>
    %52 = vector.extract_strided_slice %41 {offsets = [0, 0, 64], sizes = [2, 8, 8], strides = [1, 1, 1]} : vector<2x8x96xf32> to vector<2x8x8xf32>
    %53 = vector.extract_strided_slice %41 {offsets = [0, 0, 72], sizes = [2, 8, 8], strides = [1, 1, 1]} : vector<2x8x96xf32> to vector<2x8x8xf32>
    %54 = vector.extract_strided_slice %41 {offsets = [0, 0, 80], sizes = [2, 8, 8], strides = [1, 1, 1]} : vector<2x8x96xf32> to vector<2x8x8xf32>
    %55 = vector.extract_strided_slice %41 {offsets = [0, 0, 88], sizes = [2, 8, 8], strides = [1, 1, 1]} : vector<2x8x96xf32> to vector<2x8x8xf32>
    %56 = tpu.concatenate %52, %53, %54, %55 in 0 : vector<2x8x8xf32>, vector<2x8x8xf32>, vector<2x8x8xf32>, vector<2x8x8xf32> -> vector<8x8x8xf32>
    "tpu.trace_start"() <{level = 10 : i32, message = "nqd,nkd->nqk"}> : () -> ()
    %cst_21 = arith.constant dense<0.000000e+00> : vector<8x8x8xf32>
    %57 = tpu.matmul %46, %51, %cst_21 {dimension_numbers = #tpu.dot_dimension_numbers<[2], [2], [1], [1], [0, 0, 0, 1, 1, 1], [0], [0]>} : vector<8x8x8xf32>, vector<8x8x8xf32>, vector<8x8x8xf32> -> vector<8x8x8xf32>
    "tpu.trace_stop"() : () -> ()
    %cst_22 = arith.constant 0.353553385 : f32
    %58 = vector.broadcast %cst_22 : f32 to vector<8x8x8xf32>
    %59 = arith.mulf %57, %58 : vector<8x8x8xf32>
    %60 = arith.addf %59, %9 : vector<8x8x8xf32>
    %cst_23 = arith.constant dense<0xFF800000> : vector<8x8xf32>
    %61 = vector.multi_reduction <maximumf>, %60, %cst_23 [2] : vector<8x8x8xf32> to vector<8x8xf32>
    %62 = vector.shape_cast %61 : vector<8x8xf32> to vector<8x8x1xf32>
    %63 = vector.broadcast %62 : vector<8x8x1xf32> to vector<8x8x8xf32>
    %64 = arith.subf %60, %63 : vector<8x8x8xf32>
    %65 = math.exp %64 : vector<8x8x8xf32>
    %cst_24 = arith.constant dense<0.000000e+00> : vector<8x8xf32>
    %66 = vector.multi_reduction <add>, %65, %cst_24 [2] : vector<8x8x8xf32> to vector<8x8xf32>
    %67 = vector.shape_cast %66 : vector<8x8xf32> to vector<8x8x1xf32>
    %68 = tpu.reciprocal %67 {approx = true} : vector<8x8x1xf32> -> vector<8x8x1xf32>
    %69 = vector.broadcast %68 : vector<8x8x1xf32> to vector<8x8x8xf32>
    %70 = arith.mulf %65, %69 : vector<8x8x8xf32>
    "tpu.trace_start"() <{level = 10 : i32, message = "nqk,nkd->nqd"}> : () -> ()
    %cst_25 = arith.constant dense<0.000000e+00> : vector<8x8x8xf32>
    %71 = tpu.matmul %70, %56, %cst_25 {dimension_numbers = #tpu.dot_dimension_numbers<[2], [1], [1], [2], [0, 0, 0, 1, 1, 2], [0], [0]>} : vector<8x8x8xf32>, vector<8x8x8xf32>, vector<8x8x8xf32> -> vector<8x8x8xf32>
    "tpu.trace_stop"() : () -> ()
    %72 = vector.extract_strided_slice %71 {offsets = [0, 0, 0], sizes = [2, 8, 8], strides = [1, 1, 1]} : vector<8x8x8xf32> to vector<2x8x8xf32>
    %73 = vector.shape_cast %72 : vector<2x8x8xf32> to vector<16x8xf32>
    %74 = vector.extract_strided_slice %71 {offsets = [2, 0, 0], sizes = [2, 8, 8], strides = [1, 1, 1]} : vector<8x8x8xf32> to vector<2x8x8xf32>
    %75 = vector.shape_cast %74 : vector<2x8x8xf32> to vector<16x8xf32>
    %76 = vector.extract_strided_slice %71 {offsets = [4, 0, 0], sizes = [2, 8, 8], strides = [1, 1, 1]} : vector<8x8x8xf32> to vector<2x8x8xf32>
    %77 = vector.shape_cast %76 : vector<2x8x8xf32> to vector<16x8xf32>
    %78 = vector.extract_strided_slice %71 {offsets = [6, 0, 0], sizes = [2, 8, 8], strides = [1, 1, 1]} : vector<8x8x8xf32> to vector<2x8x8xf32>
    %79 = vector.shape_cast %78 : vector<2x8x8xf32> to vector<16x8xf32>
    %80 = tpu.concatenate %73, %75, %77, %79 in 1 : vector<16x8xf32>, vector<16x8xf32>, vector<16x8xf32>, vector<16x8xf32> -> vector<16x32xf32>
    %c0_26 = arith.constant 0 : index
    %c0_27 = arith.constant 0 : index
    %c0_28 = arith.constant 0 : index
    %81 = vector.load %arg6[%c0_26, %c0_27, %c0_28] : memref<2x32x32xf32, #tpu.memory_space<vmem>>, vector<1x32x32xf32>
    %82 = vector.shape_cast %81 : vector<1x32x32xf32> to vector<32x32xf32>
    %cst_29 = arith.constant dense<0.000000e+00> : vector<16x32xf32>
    %83 = tpu.matmul %80, %82, %cst_29 {dimension_numbers = #tpu.dot_dimension_numbers<[1], [0], [0], [1], [0, 0, 1, 1], [], []>} : vector<16x32xf32>, vector<32x32xf32>, vector<16x32xf32> -> vector<16x32xf32>
    %84 = arith.addf %0, %83 : vector<16x32xf32>
    %c0_30 = arith.constant 0 : index
    %c0_31 = arith.constant 0 : index
    %c0_32 = arith.constant 0 : index
    %85 = vector.load %arg7[%c0_30, %c0_31, %c0_32] : memref<2x1x32xf32, #tpu.memory_space<vmem>>, vector<1x1x32xf32>
    %86 = vector.shape_cast %85 : vector<1x1x32xf32> to vector<1x32xf32>
    %87 = vector.broadcast %86 : vector<1x32xf32> to vector<16x32xf32>
    %88 = arith.addf %84, %87 : vector<16x32xf32>
    %c2 = arith.constant 2 : index
    %c0_33 = arith.constant 0 : index
    %89 = vector.load %arg3[%c2, %c0_33] : memref<10x32xf32, #tpu.memory_space<vmem>>, vector<1x32xf32>
    %c3 = arith.constant 3 : index
    %c0_34 = arith.constant 0 : index
    %90 = vector.load %arg3[%c3, %c0_34] : memref<10x32xf32, #tpu.memory_space<vmem>>, vector<1x32xf32>
    %cst_35 = arith.constant dense<0.000000e+00> : vector<16xf32>
    %91 = vector.multi_reduction <add>, %88, %cst_35 [1] : vector<16x32xf32> to vector<16xf32>
    %92 = vector.shape_cast %91 : vector<16xf32> to vector<16x1xf32>
    %cst_36 = arith.constant 3.200000e+01 : f32
    %93 = vector.broadcast %cst_36 : f32 to vector<16x1xf32>
    %94 = arith.divf %92, %93 : vector<16x1xf32>
    %95 = vector.broadcast %94 : vector<16x1xf32> to vector<16x32xf32>
    %96 = arith.subf %88, %95 : vector<16x32xf32>
    %97 = arith.mulf %96, %96 : vector<16x32xf32>
    %cst_37 = arith.constant dense<0.000000e+00> : vector<16xf32>
    %98 = vector.multi_reduction <add>, %97, %cst_37 [1] : vector<16x32xf32> to vector<16xf32>
    %99 = vector.shape_cast %98 : vector<16xf32> to vector<16x1xf32>
    %cst_38 = arith.constant 3.200000e+01 : f32
    %100 = vector.broadcast %cst_38 : f32 to vector<16x1xf32>
    %101 = arith.divf %99, %100 : vector<16x1xf32>
    %102 = vector.broadcast %94 : vector<16x1xf32> to vector<16x32xf32>
    %103 = arith.subf %88, %102 : vector<16x32xf32>
    %cst_39 = arith.constant 9.99999997E-7 : f32
    %104 = vector.broadcast %cst_39 : f32 to vector<16x1xf32>
    %105 = arith.addf %101, %104 : vector<16x1xf32>
    %106 = math.rsqrt %105 : vector<16x1xf32>
    %107 = vector.broadcast %106 : vector<16x1xf32> to vector<16x32xf32>
    %108 = arith.mulf %103, %107 : vector<16x32xf32>
    %109 = vector.broadcast %89 : vector<1x32xf32> to vector<16x32xf32>
    %110 = arith.mulf %108, %109 : vector<16x32xf32>
    %111 = vector.broadcast %90 : vector<1x32xf32> to vector<16x32xf32>
    %112 = arith.addf %110, %111 : vector<16x32xf32>
    %c0_40 = arith.constant 0 : index
    %c0_41 = arith.constant 0 : index
    %c0_42 = arith.constant 0 : index
    %113 = vector.load %arg8[%c0_40, %c0_41, %c0_42] : memref<2x32x64xf32, #tpu.memory_space<vmem>>, vector<1x32x64xf32>
    %114 = vector.shape_cast %113 : vector<1x32x64xf32> to vector<32x64xf32>
    %cst_43 = arith.constant dense<0.000000e+00> : vector<16x64xf32>
    %115 = tpu.matmul %112, %114, %cst_43 {dimension_numbers = #tpu.dot_dimension_numbers<[1], [0], [0], [1], [0, 0, 1, 1], [], []>} : vector<16x32xf32>, vector<32x64xf32>, vector<16x64xf32> -> vector<16x64xf32>
    %c0_44 = arith.constant 0 : index
    %c0_45 = arith.constant 0 : index
    %c0_46 = arith.constant 0 : index
    %116 = vector.load %arg9[%c0_44, %c0_45, %c0_46] : memref<2x1x64xf32, #tpu.memory_space<vmem>>, vector<1x1x64xf32>
    %117 = vector.shape_cast %116 : vector<1x1x64xf32> to vector<1x64xf32>
    %118 = vector.broadcast %117 : vector<1x64xf32> to vector<16x64xf32>
    %119 = arith.addf %115, %118 : vector<16x64xf32>
    %cst_47 = arith.constant 0.000000e+00 : f32
    %120 = vector.broadcast %cst_47 : f32 to vector<16x64xf32>
    %121 = arith.maximumf %119, %120 : vector<16x64xf32>
    %c0_48 = arith.constant 0 : index
    %c0_49 = arith.constant 0 : index
    %c0_50 = arith.constant 0 : index
    %122 = vector.load %arg10[%c0_48, %c0_49, %c0_50] : memref<2x64x32xf32, #tpu.memory_space<vmem>>, vector<1x64x32xf32>
    %123 = vector.shape_cast %122 : vector<1x64x32xf32> to vector<64x32xf32>
    %cst_51 = arith.constant dense<0.000000e+00> : vector<16x32xf32>
    %124 = tpu.matmul %121, %123, %cst_51 {dimension_numbers = #tpu.dot_dimension_numbers<[1], [0], [0], [1], [0, 0, 1, 1], [], []>} : vector<16x64xf32>, vector<64x32xf32>, vector<16x32xf32> -> vector<16x32xf32>
    %125 = arith.addf %88, %124 : vector<16x32xf32>
    %c0_52 = arith.constant 0 : index
    %c0_53 = arith.constant 0 : index
    %c0_54 = arith.constant 0 : index
    %126 = vector.load %arg11[%c0_52, %c0_53, %c0_54] : memref<2x1x32xf32, #tpu.memory_space<vmem>>, vector<1x1x32xf32>
    %127 = vector.shape_cast %126 : vector<1x1x32xf32> to vector<1x32xf32>
    %128 = vector.broadcast %127 : vector<1x32xf32> to vector<16x32xf32>
    %129 = arith.addf %125, %128 : vector<16x32xf32>
    %c4 = arith.constant 4 : index
    %c0_55 = arith.constant 0 : index
    %130 = vector.load %arg3[%c4, %c0_55] : memref<10x32xf32, #tpu.memory_space<vmem>>, vector<1x32xf32>
    %c5 = arith.constant 5 : index
    %c0_56 = arith.constant 0 : index
    %131 = vector.load %arg3[%c5, %c0_56] : memref<10x32xf32, #tpu.memory_space<vmem>>, vector<1x32xf32>
    %cst_57 = arith.constant dense<0.000000e+00> : vector<16xf32>
    %132 = vector.multi_reduction <add>, %129, %cst_57 [1] : vector<16x32xf32> to vector<16xf32>
    %133 = vector.shape_cast %132 : vector<16xf32> to vector<16x1xf32>
    %cst_58 = arith.constant 3.200000e+01 : f32
    %134 = vector.broadcast %cst_58 : f32 to vector<16x1xf32>
    %135 = arith.divf %133, %134 : vector<16x1xf32>
    %136 = vector.broadcast %135 : vector<16x1xf32> to vector<16x32xf32>
    %137 = arith.subf %129, %136 : vector<16x32xf32>
    %138 = arith.mulf %137, %137 : vector<16x32xf32>
    %cst_59 = arith.constant dense<0.000000e+00> : vector<16xf32>
    %139 = vector.multi_reduction <add>, %138, %cst_59 [1] : vector<16x32xf32> to vector<16xf32>
    %140 = vector.shape_cast %139 : vector<16xf32> to vector<16x1xf32>
    %cst_60 = arith.constant 3.200000e+01 : f32
    %141 = vector.broadcast %cst_60 : f32 to vector<16x1xf32>
    %142 = arith.divf %140, %141 : vector<16x1xf32>
    %143 = vector.broadcast %135 : vector<16x1xf32> to vector<16x32xf32>
    %144 = arith.subf %129, %143 : vector<16x32xf32>
    %cst_61 = arith.constant 9.99999997E-7 : f32
    %145 = vector.broadcast %cst_61 : f32 to vector<16x1xf32>
    %146 = arith.addf %142, %145 : vector<16x1xf32>
    %147 = math.rsqrt %146 : vector<16x1xf32>
    %148 = vector.broadcast %147 : vector<16x1xf32> to vector<16x32xf32>
    %149 = arith.mulf %144, %148 : vector<16x32xf32>
    %150 = vector.broadcast %130 : vector<1x32xf32> to vector<16x32xf32>
    %151 = arith.mulf %149, %150 : vector<16x32xf32>
    %152 = vector.broadcast %131 : vector<1x32xf32> to vector<16x32xf32>
    %153 = arith.addf %151, %152 : vector<16x32xf32>
    %c1_62 = arith.constant 1 : index
    %c0_63 = arith.constant 0 : index
    %c0_64 = arith.constant 0 : index
    %154 = vector.load %arg4[%c1_62, %c0_63, %c0_64] : memref<2x32x96xf32, #tpu.memory_space<vmem>>, vector<1x32x96xf32>
    %155 = vector.shape_cast %154 : vector<1x32x96xf32> to vector<32x96xf32>
    %cst_65 = arith.constant dense<0.000000e+00> : vector<16x96xf32>
    %156 = tpu.matmul %153, %155, %cst_65 {dimension_numbers = #tpu.dot_dimension_numbers<[1], [0], [0], [1], [0, 0, 1, 1], [], []>} : vector<16x32xf32>, vector<32x96xf32>, vector<16x96xf32> -> vector<16x96xf32>
    %c1_66 = arith.constant 1 : index
    %c0_67 = arith.constant 0 : index
    %c0_68 = arith.constant 0 : index
    %157 = vector.load %arg5[%c1_66, %c0_67, %c0_68] : memref<2x1x96xf32, #tpu.memory_space<vmem>>, vector<1x1x96xf32>
    %158 = vector.shape_cast %157 : vector<1x1x96xf32> to vector<1x96xf32>
    %159 = vector.broadcast %158 : vector<1x96xf32> to vector<16x96xf32>
    %160 = arith.addf %156, %159 : vector<16x96xf32>
    %161 = vector.shape_cast %160 : vector<16x96xf32> to vector<2x8x96xf32>
    %162 = vector.extract_strided_slice %161 {offsets = [0, 0, 0], sizes = [2, 8, 8], strides = [1, 1, 1]} : vector<2x8x96xf32> to vector<2x8x8xf32>
    %163 = vector.extract_strided_slice %161 {offsets = [0, 0, 8], sizes = [2, 8, 8], strides = [1, 1, 1]} : vector<2x8x96xf32> to vector<2x8x8xf32>
    %164 = vector.extract_strided_slice %161 {offsets = [0, 0, 16], sizes = [2, 8, 8], strides = [1, 1, 1]} : vector<2x8x96xf32> to vector<2x8x8xf32>
    %165 = vector.extract_strided_slice %161 {offsets = [0, 0, 24], sizes = [2, 8, 8], strides = [1, 1, 1]} : vector<2x8x96xf32> to vector<2x8x8xf32>
    %166 = tpu.concatenate %162, %163, %164, %165 in 0 : vector<2x8x8xf32>, vector<2x8x8xf32>, vector<2x8x8xf32>, vector<2x8x8xf32> -> vector<8x8x8xf32>
    %167 = vector.extract_strided_slice %161 {offsets = [0, 0, 32], sizes = [2, 8, 8], strides = [1, 1, 1]} : vector<2x8x96xf32> to vector<2x8x8xf32>
    %168 = vector.extract_strided_slice %161 {offsets = [0, 0, 40], sizes = [2, 8, 8], strides = [1, 1, 1]} : vector<2x8x96xf32> to vector<2x8x8xf32>
    %169 = vector.extract_strided_slice %161 {offsets = [0, 0, 48], sizes = [2, 8, 8], strides = [1, 1, 1]} : vector<2x8x96xf32> to vector<2x8x8xf32>
    %170 = vector.extract_strided_slice %161 {offsets = [0, 0, 56], sizes = [2, 8, 8], strides = [1, 1, 1]} : vector<2x8x96xf32> to vector<2x8x8xf32>
    %171 = tpu.concatenate %167, %168, %169, %170 in 0 : vector<2x8x8xf32>, vector<2x8x8xf32>, vector<2x8x8xf32>, vector<2x8x8xf32> -> vector<8x8x8xf32>
    %172 = vector.extract_strided_slice %161 {offsets = [0, 0, 64], sizes = [2, 8, 8], strides = [1, 1, 1]} : vector<2x8x96xf32> to vector<2x8x8xf32>
    %173 = vector.extract_strided_slice %161 {offsets = [0, 0, 72], sizes = [2, 8, 8], strides = [1, 1, 1]} : vector<2x8x96xf32> to vector<2x8x8xf32>
    %174 = vector.extract_strided_slice %161 {offsets = [0, 0, 80], sizes = [2, 8, 8], strides = [1, 1, 1]} : vector<2x8x96xf32> to vector<2x8x8xf32>
    %175 = vector.extract_strided_slice %161 {offsets = [0, 0, 88], sizes = [2, 8, 8], strides = [1, 1, 1]} : vector<2x8x96xf32> to vector<2x8x8xf32>
    %176 = tpu.concatenate %172, %173, %174, %175 in 0 : vector<2x8x8xf32>, vector<2x8x8xf32>, vector<2x8x8xf32>, vector<2x8x8xf32> -> vector<8x8x8xf32>
    "tpu.trace_start"() <{level = 10 : i32, message = "nqd,nkd->nqk"}> : () -> ()
    %cst_69 = arith.constant dense<0.000000e+00> : vector<8x8x8xf32>
    %177 = tpu.matmul %166, %171, %cst_69 {dimension_numbers = #tpu.dot_dimension_numbers<[2], [2], [1], [1], [0, 0, 0, 1, 1, 1], [0], [0]>} : vector<8x8x8xf32>, vector<8x8x8xf32>, vector<8x8x8xf32> -> vector<8x8x8xf32>
    "tpu.trace_stop"() : () -> ()
    %cst_70 = arith.constant 0.353553385 : f32
    %178 = vector.broadcast %cst_70 : f32 to vector<8x8x8xf32>
    %179 = arith.mulf %177, %178 : vector<8x8x8xf32>
    %180 = arith.addf %179, %9 : vector<8x8x8xf32>
    %cst_71 = arith.constant dense<0xFF800000> : vector<8x8xf32>
    %181 = vector.multi_reduction <maximumf>, %180, %cst_71 [2] : vector<8x8x8xf32> to vector<8x8xf32>
    %182 = vector.shape_cast %181 : vector<8x8xf32> to vector<8x8x1xf32>
    %183 = vector.broadcast %182 : vector<8x8x1xf32> to vector<8x8x8xf32>
    %184 = arith.subf %180, %183 : vector<8x8x8xf32>
    %185 = math.exp %184 : vector<8x8x8xf32>
    %cst_72 = arith.constant dense<0.000000e+00> : vector<8x8xf32>
    %186 = vector.multi_reduction <add>, %185, %cst_72 [2] : vector<8x8x8xf32> to vector<8x8xf32>
    %187 = vector.shape_cast %186 : vector<8x8xf32> to vector<8x8x1xf32>
    %188 = tpu.reciprocal %187 {approx = true} : vector<8x8x1xf32> -> vector<8x8x1xf32>
    %189 = vector.broadcast %188 : vector<8x8x1xf32> to vector<8x8x8xf32>
    %190 = arith.mulf %185, %189 : vector<8x8x8xf32>
    "tpu.trace_start"() <{level = 10 : i32, message = "nqk,nkd->nqd"}> : () -> ()
    %cst_73 = arith.constant dense<0.000000e+00> : vector<8x8x8xf32>
    %191 = tpu.matmul %190, %176, %cst_73 {dimension_numbers = #tpu.dot_dimension_numbers<[2], [1], [1], [2], [0, 0, 0, 1, 1, 2], [0], [0]>} : vector<8x8x8xf32>, vector<8x8x8xf32>, vector<8x8x8xf32> -> vector<8x8x8xf32>
    "tpu.trace_stop"() : () -> ()
    %192 = vector.extract_strided_slice %191 {offsets = [0, 0, 0], sizes = [2, 8, 8], strides = [1, 1, 1]} : vector<8x8x8xf32> to vector<2x8x8xf32>
    %193 = vector.shape_cast %192 : vector<2x8x8xf32> to vector<16x8xf32>
    %194 = vector.extract_strided_slice %191 {offsets = [2, 0, 0], sizes = [2, 8, 8], strides = [1, 1, 1]} : vector<8x8x8xf32> to vector<2x8x8xf32>
    %195 = vector.shape_cast %194 : vector<2x8x8xf32> to vector<16x8xf32>
    %196 = vector.extract_strided_slice %191 {offsets = [4, 0, 0], sizes = [2, 8, 8], strides = [1, 1, 1]} : vector<8x8x8xf32> to vector<2x8x8xf32>
    %197 = vector.shape_cast %196 : vector<2x8x8xf32> to vector<16x8xf32>
    %198 = vector.extract_strided_slice %191 {offsets = [6, 0, 0], sizes = [2, 8, 8], strides = [1, 1, 1]} : vector<8x8x8xf32> to vector<2x8x8xf32>
    %199 = vector.shape_cast %198 : vector<2x8x8xf32> to vector<16x8xf32>
    %200 = tpu.concatenate %193, %195, %197, %199 in 1 : vector<16x8xf32>, vector<16x8xf32>, vector<16x8xf32>, vector<16x8xf32> -> vector<16x32xf32>
    %c1_74 = arith.constant 1 : index
    %c0_75 = arith.constant 0 : index
    %c0_76 = arith.constant 0 : index
    %201 = vector.load %arg6[%c1_74, %c0_75, %c0_76] : memref<2x32x32xf32, #tpu.memory_space<vmem>>, vector<1x32x32xf32>
    %202 = vector.shape_cast %201 : vector<1x32x32xf32> to vector<32x32xf32>
    %cst_77 = arith.constant dense<0.000000e+00> : vector<16x32xf32>
    %203 = tpu.matmul %200, %202, %cst_77 {dimension_numbers = #tpu.dot_dimension_numbers<[1], [0], [0], [1], [0, 0, 1, 1], [], []>} : vector<16x32xf32>, vector<32x32xf32>, vector<16x32xf32> -> vector<16x32xf32>
    %204 = arith.addf %129, %203 : vector<16x32xf32>
    %c1_78 = arith.constant 1 : index
    %c0_79 = arith.constant 0 : index
    %c0_80 = arith.constant 0 : index
    %205 = vector.load %arg7[%c1_78, %c0_79, %c0_80] : memref<2x1x32xf32, #tpu.memory_space<vmem>>, vector<1x1x32xf32>
    %206 = vector.shape_cast %205 : vector<1x1x32xf32> to vector<1x32xf32>
    %207 = vector.broadcast %206 : vector<1x32xf32> to vector<16x32xf32>
    %208 = arith.addf %204, %207 : vector<16x32xf32>
    %c6 = arith.constant 6 : index
    %c0_81 = arith.constant 0 : index
    %209 = vector.load %arg3[%c6, %c0_81] : memref<10x32xf32, #tpu.memory_space<vmem>>, vector<1x32xf32>
    %c7 = arith.constant 7 : index
    %c0_82 = arith.constant 0 : index
    %210 = vector.load %arg3[%c7, %c0_82] : memref<10x32xf32, #tpu.memory_space<vmem>>, vector<1x32xf32>
    %cst_83 = arith.constant dense<0.000000e+00> : vector<16xf32>
    %211 = vector.multi_reduction <add>, %208, %cst_83 [1] : vector<16x32xf32> to vector<16xf32>
    %212 = vector.shape_cast %211 : vector<16xf32> to vector<16x1xf32>
    %cst_84 = arith.constant 3.200000e+01 : f32
    %213 = vector.broadcast %cst_84 : f32 to vector<16x1xf32>
    %214 = arith.divf %212, %213 : vector<16x1xf32>
    %215 = vector.broadcast %214 : vector<16x1xf32> to vector<16x32xf32>
    %216 = arith.subf %208, %215 : vector<16x32xf32>
    %217 = arith.mulf %216, %216 : vector<16x32xf32>
    %cst_85 = arith.constant dense<0.000000e+00> : vector<16xf32>
    %218 = vector.multi_reduction <add>, %217, %cst_85 [1] : vector<16x32xf32> to vector<16xf32>
    %219 = vector.shape_cast %218 : vector<16xf32> to vector<16x1xf32>
    %cst_86 = arith.constant 3.200000e+01 : f32
    %220 = vector.broadcast %cst_86 : f32 to vector<16x1xf32>
    %221 = arith.divf %219, %220 : vector<16x1xf32>
    %222 = vector.broadcast %214 : vector<16x1xf32> to vector<16x32xf32>
    %223 = arith.subf %208, %222 : vector<16x32xf32>
    %cst_87 = arith.constant 9.99999997E-7 : f32
    %224 = vector.broadcast %cst_87 : f32 to vector<16x1xf32>
    %225 = arith.addf %221, %224 : vector<16x1xf32>
    %226 = math.rsqrt %225 : vector<16x1xf32>
    %227 = vector.broadcast %226 : vector<16x1xf32> to vector<16x32xf32>
    %228 = arith.mulf %223, %227 : vector<16x32xf32>
    %229 = vector.broadcast %209 : vector<1x32xf32> to vector<16x32xf32>
    %230 = arith.mulf %228, %229 : vector<16x32xf32>
    %231 = vector.broadcast %210 : vector<1x32xf32> to vector<16x32xf32>
    %232 = arith.addf %230, %231 : vector<16x32xf32>
    %c1_88 = arith.constant 1 : index
    %c0_89 = arith.constant 0 : index
    %c0_90 = arith.constant 0 : index
    %233 = vector.load %arg8[%c1_88, %c0_89, %c0_90] : memref<2x32x64xf32, #tpu.memory_space<vmem>>, vector<1x32x64xf32>
    %234 = vector.shape_cast %233 : vector<1x32x64xf32> to vector<32x64xf32>
    %cst_91 = arith.constant dense<0.000000e+00> : vector<16x64xf32>
    %235 = tpu.matmul %232, %234, %cst_91 {dimension_numbers = #tpu.dot_dimension_numbers<[1], [0], [0], [1], [0, 0, 1, 1], [], []>} : vector<16x32xf32>, vector<32x64xf32>, vector<16x64xf32> -> vector<16x64xf32>
    %c1_92 = arith.constant 1 : index
    %c0_93 = arith.constant 0 : index
    %c0_94 = arith.constant 0 : index
    %236 = vector.load %arg9[%c1_92, %c0_93, %c0_94] : memref<2x1x64xf32, #tpu.memory_space<vmem>>, vector<1x1x64xf32>
    %237 = vector.shape_cast %236 : vector<1x1x64xf32> to vector<1x64xf32>
    %238 = vector.broadcast %237 : vector<1x64xf32> to vector<16x64xf32>
    %239 = arith.addf %235, %238 : vector<16x64xf32>
    %cst_95 = arith.constant 0.000000e+00 : f32
    %240 = vector.broadcast %cst_95 : f32 to vector<16x64xf32>
    %241 = arith.maximumf %239, %240 : vector<16x64xf32>
    %c1_96 = arith.constant 1 : index
    %c0_97 = arith.constant 0 : index
    %c0_98 = arith.constant 0 : index
    %242 = vector.load %arg10[%c1_96, %c0_97, %c0_98] : memref<2x64x32xf32, #tpu.memory_space<vmem>>, vector<1x64x32xf32>
    %243 = vector.shape_cast %242 : vector<1x64x32xf32> to vector<64x32xf32>
    %cst_99 = arith.constant dense<0.000000e+00> : vector<16x32xf32>
    %244 = tpu.matmul %241, %243, %cst_99 {dimension_numbers = #tpu.dot_dimension_numbers<[1], [0], [0], [1], [0, 0, 1, 1], [], []>} : vector<16x64xf32>, vector<64x32xf32>, vector<16x32xf32> -> vector<16x32xf32>
    %245 = arith.addf %208, %244 : vector<16x32xf32>
    %c1_100 = arith.constant 1 : index
    %c0_101 = arith.constant 0 : index
    %c0_102 = arith.constant 0 : index
    %246 = vector.load %arg11[%c1_100, %c0_101, %c0_102] : memref<2x1x32xf32, #tpu.memory_space<vmem>>, vector<1x1x32xf32>
    %247 = vector.shape_cast %246 : vector<1x1x32xf32> to vector<1x32xf32>
    %248 = vector.broadcast %247 : vector<1x32xf32> to vector<16x32xf32>
    %249 = arith.addf %245, %248 : vector<16x32xf32>
    %c8 = arith.constant 8 : index
    %c0_103 = arith.constant 0 : index
    %250 = vector.load %arg3[%c8, %c0_103] : memref<10x32xf32, #tpu.memory_space<vmem>>, vector<1x32xf32>
    %c9 = arith.constant 9 : index
    %c0_104 = arith.constant 0 : index
    %251 = vector.load %arg3[%c9, %c0_104] : memref<10x32xf32, #tpu.memory_space<vmem>>, vector<1x32xf32>
    %cst_105 = arith.constant dense<0.000000e+00> : vector<16xf32>
    %252 = vector.multi_reduction <add>, %249, %cst_105 [1] : vector<16x32xf32> to vector<16xf32>
    %253 = vector.shape_cast %252 : vector<16xf32> to vector<16x1xf32>
    %cst_106 = arith.constant 3.200000e+01 : f32
    %254 = vector.broadcast %cst_106 : f32 to vector<16x1xf32>
    %255 = arith.divf %253, %254 : vector<16x1xf32>
    %256 = vector.broadcast %255 : vector<16x1xf32> to vector<16x32xf32>
    %257 = arith.subf %249, %256 : vector<16x32xf32>
    %258 = arith.mulf %257, %257 : vector<16x32xf32>
    %cst_107 = arith.constant dense<0.000000e+00> : vector<16xf32>
    %259 = vector.multi_reduction <add>, %258, %cst_107 [1] : vector<16x32xf32> to vector<16xf32>
    %260 = vector.shape_cast %259 : vector<16xf32> to vector<16x1xf32>
    %cst_108 = arith.constant 3.200000e+01 : f32
    %261 = vector.broadcast %cst_108 : f32 to vector<16x1xf32>
    %262 = arith.divf %260, %261 : vector<16x1xf32>
    %263 = vector.broadcast %255 : vector<16x1xf32> to vector<16x32xf32>
    %264 = arith.subf %249, %263 : vector<16x32xf32>
    %cst_109 = arith.constant 9.99999997E-7 : f32
    %265 = vector.broadcast %cst_109 : f32 to vector<16x1xf32>
    %266 = arith.addf %262, %265 : vector<16x1xf32>
    %267 = math.rsqrt %266 : vector<16x1xf32>
    %268 = vector.broadcast %267 : vector<16x1xf32> to vector<16x32xf32>
    %269 = arith.mulf %264, %268 : vector<16x32xf32>
    %270 = vector.broadcast %250 : vector<1x32xf32> to vector<16x32xf32>
    %271 = arith.mulf %269, %270 : vector<16x32xf32>
    %272 = vector.broadcast %251 : vector<1x32xf32> to vector<16x32xf32>
    %273 = arith.addf %271, %272 : vector<16x32xf32>
    %274 = vector.shape_cast %273 : vector<16x32xf32> to vector<4x4x32xf32>
    %275 = vector.extract_strided_slice %274 {offsets = [0, 0, 0], sizes = [4, 1, 32], strides = [1, 1, 1]} : vector<4x4x32xf32> to vector<4x1x32xf32>
    %276 = vector.shape_cast %275 : vector<4x1x32xf32> to vector<4x32xf32>
    %277 = vector.extract_strided_slice %274 {offsets = [0, 1, 0], sizes = [4, 1, 32], strides = [1, 1, 1]} : vector<4x4x32xf32> to vector<4x1x32xf32>
    %278 = vector.shape_cast %277 : vector<4x1x32xf32> to vector<4x32xf32>
    %279 = vector.extract_strided_slice %274 {offsets = [0, 2, 0], sizes = [4, 1, 32], strides = [1, 1, 1]} : vector<4x4x32xf32> to vector<4x1x32xf32>
    %280 = vector.shape_cast %279 : vector<4x1x32xf32> to vector<4x32xf32>
    %281 = vector.extract_strided_slice %274 {offsets = [0, 3, 0], sizes = [4, 1, 32], strides = [1, 1, 1]} : vector<4x4x32xf32> to vector<4x1x32xf32>
    %282 = vector.shape_cast %281 : vector<4x1x32xf32> to vector<4x32xf32>
    %283 = tpu.concatenate %276, %278, %280, %282 in 1 : vector<4x32xf32>, vector<4x32xf32>, vector<4x32xf32>, vector<4x32xf32> -> vector<4x128xf32>
    %c0_110 = arith.constant 0 : index
    %c0_111 = arith.constant 0 : index
    %284 = vector.load %arg12[%c0_110, %c0_111] : memref<4x128xf32, #tpu.memory_space<vmem>>, vector<4x128xf32>
    tpu.vector_store %arg12[%c0_110, %c0_111], %283 {strides = array<i32>} : memref<4x128xf32, #tpu.memory_space<vmem>>, vector<4x128xf32>,
    return
  }
  func.func @transform_0(%arg0: i32) -> (i32, i32) {
    %c0_i32 = arith.constant 0 : i32
    %c0_i32_0 = arith.constant 0 : i32
    %c0_i32_1 = arith.constant 0 : i32
    return %c0_i32, %c0_i32_0 : i32, i32
  }
  func.func @transform_1(%arg0: i32) -> (i32, i32, i32) {
    %c0_i32 = arith.constant 0 : i32
    %c0_i32_0 = arith.constant 0 : i32
    %c0_i32_1 = arith.constant 0 : i32
    %c0_i32_2 = arith.constant 0 : i32
    return %c0_i32, %c0_i32_0, %c0_i32_1 : i32, i32, i32
  }
  func.func @transform_2(%arg0: i32) -> (i32, i32) {
    %c0_i32 = arith.constant 0 : i32
    %c0_i32_0 = arith.constant 0 : i32
    %c0_i32_1 = arith.constant 0 : i32
    return %c0_i32, %c0_i32_0 : i32, i32
  }
  func.func @transform_3(%arg0: i32) -> (i32, i32, i32) {
    %c0_i32 = arith.constant 0 : i32
    %c0_i32_0 = arith.constant 0 : i32
    %c0_i32_1 = arith.constant 0 : i32
    %c0_i32_2 = arith.constant 0 : i32
    return %c0_i32, %c0_i32_0, %c0_i32_1 : i32, i32, i32
  }
  func.func @transform_4(%arg0: i32) -> (i32, i32, i32) {
    %c0_i32 = arith.constant 0 : i32
    %c0_i32_0 = arith.constant 0 : i32
    %c0_i32_1 = arith.constant 0 : i32
    %c0_i32_2 = arith.constant 0 : i32
    return %c0_i32, %c0_i32_0, %c0_i32_1 : i32, i32, i32
  }
  func.func @transform_5(%arg0: i32) -> (i32, i32, i32) {
    %c0_i32 = arith.constant 0 : i32
    %c0_i32_0 = arith.constant 0 : i32
    %c0_i32_1 = arith.constant 0 : i32
    %c0_i32_2 = arith.constant 0 : i32
    return %c0_i32, %c0_i32_0, %c0_i32_1 : i32, i32, i32
  }
  func.func @transform_6(%arg0: i32) -> (i32, i32, i32) {
    %c0_i32 = arith.constant 0 : i32
    %c0_i32_0 = arith.constant 0 : i32
    %c0_i32_1 = arith.constant 0 : i32
    %c0_i32_2 = arith.constant 0 : i32
    return %c0_i32, %c0_i32_0, %c0_i32_1 : i32, i32, i32
  }
  func.func @transform_7(%arg0: i32) -> (i32, i32, i32) {
    %c0_i32 = arith.constant 0 : i32
    %c0_i32_0 = arith.constant 0 : i32
    %c0_i32_1 = arith.constant 0 : i32
    %c0_i32_2 = arith.constant 0 : i32
    return %c0_i32, %c0_i32_0, %c0_i32_1 : i32, i32, i32
  }
  func.func @transform_8(%arg0: i32) -> (i32, i32, i32) {
    %c0_i32 = arith.constant 0 : i32
    %c0_i32_0 = arith.constant 0 : i32
    %c0_i32_1 = arith.constant 0 : i32
    %c0_i32_2 = arith.constant 0 : i32
    return %c0_i32, %c0_i32_0, %c0_i32_1 : i32, i32, i32
  }
  func.func @transform_9(%arg0: i32) -> (i32, i32, i32) {
    %c0_i32 = arith.constant 0 : i32
    %c0_i32_0 = arith.constant 0 : i32
    %c0_i32_1 = arith.constant 0 : i32
    %c0_i32_2 = arith.constant 0 : i32
    return %c0_i32, %c0_i32_0, %c0_i32_1 : i32, i32, i32
  }
  func.func @transform_10(%arg0: i32) -> (i32, i32, i32) {
    %c0_i32 = arith.constant 0 : i32
    %c0_i32_0 = arith.constant 0 : i32
    %c0_i32_1 = arith.constant 0 : i32
    %c0_i32_2 = arith.constant 0 : i32
    return %c0_i32, %c0_i32_0, %c0_i32_1 : i32, i32, i32
  }
  func.func @transform_11(%arg0: i32) -> (i32, i32) {
    %c0_i32 = arith.constant 0 : i32
    %c0_i32_0 = arith.constant 0 : i32
    %c0_i32_1 = arith.constant 0 : i32
    return %c0_i32, %c0_i32_0 : i32, i32
  }
}

</mosaic_0001>

<llo_original>
// kernel: encoder_forward.1
$region0: #{encoder_forward.1}
  #allocation0 [shape = 'u32[]', space=smem, size = 0x4, offset = 0x4, fixed_abs, tag = 'smem constant byte address 0x4 - core index']
  #allocation1 [shape = 'u32[144,128]{1,0:T(1,128)}', space=vmem, size = 0x12000, scoped, tag = 'internal scratch']
  %s0 = inlined_call_operand.hbm [shape: f32[16,32], index: 0, kind: input, shape index: {}]
  %s1 = inlined_call_operand.vmem [shape: f32[2,1,8], index: 1, kind: input, shape index: {}]
  %s2 = inlined_call_operand.hbm [shape: f32[10,32], index: 2, kind: input, shape index: {}]
  %s3 = inlined_call_operand.vmem [shape: f32[2,32,96], index: 3, kind: input, shape index: {}]
  %s4 = inlined_call_operand.vmem [shape: f32[2,1,96], index: 4, kind: input, shape index: {}]
  %s5 = inlined_call_operand.vmem [shape: f32[2,32,32], index: 5, kind: input, shape index: {}]
  %s6 = inlined_call_operand.vmem [shape: f32[2,1,32], index: 6, kind: input, shape index: {}]
  %s7 = inlined_call_operand.vmem [shape: f32[2,32,64], index: 7, kind: input, shape index: {}]
  %s8 = inlined_call_operand.vmem [shape: f32[2,1,64], index: 8, kind: input, shape index: {}]
  %s9 = inlined_call_operand.vmem [shape: f32[2,64,32], index: 9, kind: input, shape index: {}]
  %s10 = inlined_call_operand.vmem [shape: f32[2,1,32], index: 10, kind: input, shape index: {}]
  %s11 = inlined_call_operand.vmem [shape: f32[4,128], index: 11, kind: output, shape index: {}]
  %s12 = sld [smem:[#allocation0]]
  $region62: #{encoder_forward.1} parent=0
    _
  %s14 = ssub.s32 1, %s12
  %s15 = scalar_select 0, %s14, %s12
  $region1: #{encoder_forward.1} parent=0
    #allocation2 [shape = 'u8[8192]{0}', space=vmem, size = 0x2000, scoped, tag = 'input window, operand 0, single buffered']
    #allocation3 [shape = 's32[1]{0}', space=sflag, size = 0x4, scoped, tag = 'scoped memory for encoder_forward.1']
    #allocation4 [shape = 'u8[8192]{0}', space=vmem, size = 0x2000, scoped, tag = 'input window, operand 2, single buffered']
    #allocation5 [shape = 's32[1]{0}', space=sflag, size = 0x4, scoped, tag = 'scoped memory for encoder_forward.1']
    %16 = vsyncpa [#allocation3], 0
    %17 = vsyncpa [#allocation5], 0
    // Predicated region
    $region2: #{encoder_forward.1} parent=1 // pred_check
      _
    $region3: #{encoder_forward.1} parent=1 // pred_check_branch
      %19 = sbr.rel (0) target = $region5
    $region4: #{encoder_forward.1} parent=1 // pred_region
      %s21 = ssub.s32 256, 256
      %22 = vsyncadd [#allocation3], %s21
      %s23 = sshll.u32 [#allocation2], 4
      %s24 = int_to_ptr.vmem [resolvable:$true] %s23
      %29 = dma.hbm_to_vmem [thread:$0]  %s0, 256, %s24, [#allocation3], 128, 128, 8
    $region5: #{encoder_forward.1} parent=1 // pred_fallthru
      _
    // Predicated region
    $region6: #{encoder_forward.1} parent=1 // pred_check
      _
    $region7: #{encoder_forward.1} parent=1 // pred_check_branch
      %31 = sbr.rel (0) target = $region9
    $region8: #{encoder_forward.1} parent=1 // pred_region
      _
    $region9: #{encoder_forward.1} parent=1 // pred_fallthru
      _
    // Predicated region
    $region10: #{encoder_forward.1} parent=1 // pred_check
      _
    $region11: #{encoder_forward.1} parent=1 // pred_check_branch
      %33 = sbr.rel (0) target = $region13
    $region12: #{encoder_forward.1} parent=1 // pred_region
      %s35 = ssub.s32 256, 256
      %36 = vsyncadd [#allocation5], %s35
      %s37 = sshll.u32 [#allocation4], 4
      %s38 = int_to_ptr.vmem [resolvable:$true] %s37
      %43 = dma.hbm_to_vmem [thread:$0]  %s2, 256, %s38, [#allocation5], 128, 128, 8
    $region13: #{encoder_forward.1} parent=1 // pred_fallthru
      _
    // Predicated region
    $region14: #{encoder_forward.1} parent=1 // pred_check
      _
    $region15: #{encoder_forward.1} parent=1 // pred_check_branch
      %45 = sbr.rel (0) target = $region17
    $region16: #{encoder_forward.1} parent=1 // pred_region
      _
    $region17: #{encoder_forward.1} parent=1 // pred_fallthru
      _
    // Predicated region
    $region18: #{encoder_forward.1} parent=1 // pred_check
      _
    $region19: #{encoder_forward.1} parent=1 // pred_check_branch
      %47 = sbr.rel (0) target = $region21
    $region20: #{encoder_forward.1} parent=1 // pred_region
      _
    $region21: #{encoder_forward.1} parent=1 // pred_fallthru
      _
    // Predicated region
    $region22: #{encoder_forward.1} parent=1 // pred_check
      _
    $region23: #{encoder_forward.1} parent=1 // pred_check_branch
      %49 = sbr.rel (0) target = $region25
    $region24: #{encoder_forward.1} parent=1 // pred_region
      _
    $region25: #{encoder_forward.1} parent=1 // pred_fallthru
      _
    // Predicated region
    $region26: #{encoder_forward.1} parent=1 // pred_check
      _
    $region27: #{encoder_forward.1} parent=1 // pred_check_branch
      %51 = sbr.rel (0) target = $region29
    $region28: #{encoder_forward.1} parent=1 // pred_region
      _
    $region29: #{encoder_forward.1} parent=1 // pred_fallthru
      _
    // Predicated region
    $region30: #{encoder_forward.1} parent=1 // pred_check
      _
    $region31: #{encoder_forward.1} parent=1 // pred_check_branch
      %53 = sbr.rel (0) target = $region33
    $region32: #{encoder_forward.1} parent=1 // pred_region
      _
    $region33: #{encoder_forward.1} parent=1 // pred_fallthru
      _
    // Predicated region
    $region34: #{encoder_forward.1} parent=1 // pred_check
      _
    $region35: #{encoder_forward.1} parent=1 // pred_check_branch
      %55 = sbr.rel (0) target = $region37
    $region36: #{encoder_forward.1} parent=1 // pred_region
      _
    $region37: #{encoder_forward.1} parent=1 // pred_fallthru
      _
    // Predicated region
    $region38: #{encoder_forward.1} parent=1 // pred_check
      _
    $region39: #{encoder_forward.1} parent=1 // pred_check_branch
      %57 = sbr.rel (0) target = $region41
    $region40: #{encoder_forward.1} parent=1 // pred_region
      _
    $region41: #{encoder_forward.1} parent=1 // pred_fallthru
      _
    // Predicated region
    $region42: #{encoder_forward.1} parent=1 // pred_check
      _
    $region43: #{encoder_forward.1} parent=1 // pred_check_branch
      %59 = sbr.rel (0) target = $region45
    $region44: #{encoder_forward.1} parent=1 // pred_region
      _
    $region45: #{encoder_forward.1} parent=1 // pred_fallthru
      _
    // Predicated region
    $region46: #{encoder_forward.1} parent=1 // pred_check
      _
    $region47: #{encoder_forward.1} parent=1 // pred_check_branch
      %61 = sbr.rel (0) target = $region49
    $region48: #{encoder_forward.1} parent=1 // pred_region
      %62 = dma.done [#allocation3], 256
    $region49: #{encoder_forward.1} parent=1 // pred_fallthru
      _
    // Predicated region
    $region50: #{encoder_forward.1} parent=1 // pred_check
      _
    $region51: #{encoder_forward.1} parent=1 // pred_check_branch
      %64 = sbr.rel (0) target = $region53
    $region52: #{encoder_forward.1} parent=1 // pred_region
      %65 = dma.done [#allocation5], 256
    $region53: #{encoder_forward.1} parent=1 // pred_fallthru
      _
    %v66 = vld [vmem:[#allocation2] sm:$0xff]
    %v67 = vld [vmem:[#allocation2 + $0x8] sm:$0xff]
    %v68 = vld [vmem:[%s1] sm:$0x1]
    %v69 = vld [vmem:[%s1 + $0x1] sm:$0x1]
    %vm70 = vcmp.ne.f32.partialorder %v68, 0.0
    %vm71 = vcmp.ne.f32.partialorder %v69, 0.0
    %v72 = vsel %vm70, 0.0, -1e+09
    %v73 = vsel %vm71, 0.0, -1e+09
    %v76 = vlaneseq
    %v77 = vshrl.u32 %v76, 7
    %v78 = vsub.s32 0, %v77
    %v79 = vrot.slane %v72, %v78
    %v80 = vlaneseq
    %v81 = vshrl.u32 %v80, 7
    %v82 = vsub.s32 0, %v81
    %v83 = vrot.slane %v73, %v82
    %v86 = vld [vmem:[#allocation4] sm:$0x1]
    %v87 = vld [vmem:[#allocation4 + $0x1] sm:$0x1]
    %vm88 = vcmask 261120
    %v89 = vsel %vm88, %v66, 0.0
    %90 = vadd.xlane.f32.xlu0 %v89
    %v91 = vpop.xlane.xlu0 %90
    %v92 = vsel %vm88, %v67, 0.0
    %93 = vadd.xlane.f32.xlu0 %v92
    %v94 = vpop.xlane.xlu0 %93
    %v95 = vrcp.pop 32.0
    %v96 = vmul.f32 %v91, %v95
    %v97 = vmul.f32 %v94, %v95
    %v98 = vsub.f32 %v66, %v96
    %v99 = vsub.f32 %v67, %v97
    %v100 = vmul.f32 %v98, %v98
    %v101 = vmul.f32 %v99, %v99
    %v102 = vsel %vm88, %v100, 0.0
    %103 = vadd.xlane.f32.xlu0 %v102
    %v104 = vpop.xlane.xlu0 %103
    %v105 = vsel %vm88, %v101, 0.0
    %106 = vadd.xlane.f32.xlu0 %v105
    %v107 = vpop.xlane.xlu0 %106
    %v108 = vmul.f32 %v104, %v95
    %v109 = vmul.f32 %v107, %v95
    %v110 = vadd.f32 %v108, 1e-06
    %v111 = vadd.f32 %v109, 1e-06
    %v112 = vrsqrt.pop %v110
    %v113 = vrsqrt.pop %v111
    %v114 = vmul.f32 %v98, %v112
    %v115 = vmul.f32 %v99, %v113
    %v116 = vlaneseq
    %v117 = vshrl.u32 %v116, 7
    %v118 = vsub.s32 0, %v117
    %v119 = vrot.slane %v86, %v118
    %v120 = vmul.f32 %v114, %v119
    %v121 = vmul.f32 %v115, %v119
    %v122 = vlaneseq
    %v123 = vshrl.u32 %v122, 7
    %v124 = vsub.s32 0, %v123
    %v125 = vrot.slane %v87, %v124
    %v126 = vadd.f32 %v120, %v125
    %v127 = vadd.f32 %v121, %v125
    %v128 = vld [vmem:[%s3] sm:$0xff]
    %v129 = vld [vmem:[%s3 + $0x8] sm:$0xff]
    %v130 = vld [vmem:[%s3 + $0x10] sm:$0xff]
    %v131 = vld [vmem:[%s3 + $0x18] sm:$0xff]
    %v132 = vld [vmem:[%s4] sm:$0x1]
    %v134 = vlaneseq
    %v135 = vshrl.u32 %v134, 7
    %v136 = vsub.s32 0, %v135
    %v137 = vrot.slane %v132, %v136
    %v140 = vsel %vm88, %v126, 0
    %v143 = vsel %vm88, %v127, 0
    %145 = vmatprep.subr.mxu0 0.0
    %146 = vmatpush1.msra.mxu0 %v128
    %147 = vmatprep.subr.mxu0 0.0
    %148 = vmatpush1.msra.mxu0 %v129
    %149 = vmatprep.subr.mxu0 0.0
    %150 = vmatpush1.msra.mxu0 %v130
    %151 = vmatprep.subr.mxu0 0.0
    %152 = vmatpush1.msra.mxu0 %v131
    %153 = vmatprep.subr.mxu0 0.0
    %154 = vmatpush1.msra.mxu0 0.0
    %155 = vmatprep.subr.mxu0 0.0
    %156 = vmatpush1.msra.mxu0 0.0
    %157 = vmatprep.subr.mxu0 0.0
    %158 = vmatpush1.msra.mxu0 0.0
    %159 = vmatprep.subr.mxu0 0.0
    %160 = vmatpush1.msra.mxu0 0.0
    %161 = vmatprep.subr.mxu0 0.0
    %162 = vmatpush1.msra.mxu0 0.0
    %163 = vmatprep.subr.mxu0 0.0
    %164 = vmatpush1.msra.mxu0 0.0
    %165 = vmatprep.subr.mxu0 0.0
    %166 = vmatpush1.msra.mxu0 0.0
    %167 = vmatprep.subr.mxu0 0.0
    %168 = vmatpush1.msra.mxu0 0.0
    %169 = vmatprep.subr.mxu0 0.0
    %170 = vmatpush1.msra.mxu0 0.0
    %171 = vmatprep.subr.mxu0 0.0
    %172 = vmatpush1.msra.mxu0 0.0
    %173 = vmatprep.subr.mxu0 0.0
    %174 = vmatpush1.msra.mxu0 0.0
    %175 = vmatprep.subr.mxu0 0.0
    %176 = vmatpush1.msra.mxu0 0.0
    %177 = vmatprep.subr.mxu0 0.0
    %178 = vmatpush1.msra.mxu0 0.0
    %179 = vmatprep.subr.mxu0 0.0
    %180 = vmatpush1.msra.mxu0 0.0
    %181 = vmatprep.subr.mxu0 0.0
    %182 = vmatpush1.msra.mxu0 0.0
    %183 = vmatprep.subr.mxu0 0.0
    %184 = vmatpush1.msra.mxu0 0.0
    %185 = vmatprep.subr.mxu0 0.0
    %186 = vmatpush1.msra.mxu0 0.0
    %187 = vmatprep.subr.mxu0 0.0
    %188 = vmatpush1.msra.mxu0 0.0
    %189 = vmatprep.subr.mxu0 0.0
    %190 = vmatpush1.msra.mxu0 0.0
    %191 = vmatprep.subr.mxu0 0.0
    %192 = vmatpush1.msra.mxu0 0.0
    %193 = vmatprep.subr.mxu0 0.0
    %194 = vmatpush1.msra.mxu0 0.0
    %195 = vmatprep.subr.mxu0 0.0
    %196 = vmatpush1.msra.mxu0 0.0
    %197 = vmatprep.subr.mxu0 0.0
    %198 = vmatpush1.msra.mxu0 0.0
    %199 = vmatprep.subr.mxu0 0.0
    %200 = vmatpush1.msra.mxu0 0.0
    %201 = vmatprep.subr.mxu0 0.0
    %202 = vmatpush1.msra.mxu0 0.0
    %203 = vmatprep.subr.mxu0 0.0
    %204 = vmatpush1.msra.mxu0 0.0
    %205 = vmatprep.subr.mxu0 0.0
    %206 = vmatpush1.msra.mxu0 0.0
    %207 = vmatprep.subr.mxu0 0.0
    %208 = vmatpush1.msra.mxu0 0.0
    %209 = vmatprep.mubr.f32.mxu0 0.0
    %210 = vmatmul.mubr.f32.gmra.mrb[0].mxu0 %v140
    %v211 = vpop.f32.mrb[0].mxu0
    %v212 = vadd.f32 %v137, %v211
    %v213 = vpop.f32.mrb[0].mxu0
    %214 = vmatprep.mubr.f32.mxu0 0.0
    %215 = vmatmul.mubr.f32.gmra.mrb[0].mxu0 %v143
    %v216 = vpop.f32.mrb[0].mxu0
    %v217 = vadd.f32 %v137, %v216
    %v218 = vpop.f32.mrb[0].mxu0
    %219 = vdwg.mxu0
    %222 = vrot.lane.b32.xlu0 %v212, 120
    %v223 = vpop.permute.xlu0 %222
    %224 = vrot.lane.b32.xlu0 %v217, 120
    %v225 = vpop.permute.xlu0 %224
    %226 = vrot.lane.b32.xlu0 %v212, 112
    %v227 = vpop.permute.xlu0 %226
    %228 = vrot.lane.b32.xlu0 %v217, 112
    %v229 = vpop.permute.xlu0 %228
    %230 = vrot.lane.b32.xlu0 %v212, 104
    %v231 = vpop.permute.xlu0 %230
    %232 = vrot.lane.b32.xlu0 %v217, 104
    %v233 = vpop.permute.xlu0 %232
    %234 = vrot.lane.b32.xlu0 %v212, 96
    %v235 = vpop.permute.xlu0 %234
    %vm236 = vcmask 64512
    %v237 = vsel %vm236, %v212, 0
    %v239 = vsel %vm236, %v235, 0
    %241 = vmatprep.subr.mxu0 0.0
    %242 = vmatpush1.xpose.msra.mxu0 %v239
    %243 = vmatprep.subr.mxu0 0.0
    %244 = vmatpush1.xpose.msra.mxu0 0.0
    %245 = vmatprep.subr.mxu0 0.0
    %246 = vmatpush1.xpose.msra.mxu0 0.0
    %247 = vmatprep.subr.mxu0 0.0
    %248 = vmatpush1.xpose.msra.mxu0 0.0
    %249 = vmatprep.subr.mxu0 0.0
    %250 = vmatpush1.xpose.msra.mxu0 0.0
    %251 = vmatprep.subr.mxu0 0.0
    %252 = vmatpush1.xpose.msra.mxu0 0.0
    %253 = vmatprep.subr.mxu0 0.0
    %254 = vmatpush1.xpose.msra.mxu0 0.0
    %255 = vmatprep.subr.mxu0 0.0
    %256 = vmatpush1.xpose.msra.mxu0 0.0
    %257 = vmatprep.subr.mxu0 0.0
    %258 = vmatpush1.xpose.msra.mxu0 0.0
    %259 = vmatprep.subr.mxu0 0.0
    %260 = vmatpush1.xpose.msra.mxu0 0.0
    %261 = vmatprep.subr.mxu0 0.0
    %262 = vmatpush1.xpose.msra.mxu0 0.0
    %263 = vmatprep.subr.mxu0 0.0
    %264 = vmatpush1.xpose.msra.mxu0 0.0
    %265 = vmatprep.subr.mxu0 0.0
    %266 = vmatpush1.xpose.msra.mxu0 0.0
    %267 = vmatprep.subr.mxu0 0.0
    %268 = vmatpush1.xpose.msra.mxu0 0.0
    %269 = vmatprep.subr.mxu0 0.0
    %270 = vmatpush1.xpose.msra.mxu0 0.0
    %271 = vmatprep.subr.mxu0 0.0
    %272 = vmatpush1.xpose.msra.mxu0 0.0
    %273 = vmatprep.subr.mxu0 0.0
    %274 = vmatpush1.xpose.msra.mxu0 0.0
    %275 = vmatprep.subr.mxu0 0.0
    %276 = vmatpush1.xpose.msra.mxu0 0.0
    %277 = vmatprep.subr.mxu0 0.0
    %278 = vmatpush1.xpose.msra.mxu0 0.0
    %279 = vmatprep.subr.mxu0 0.0
    %280 = vmatpush1.xpose.msra.mxu0 0.0
    %281 = vmatprep.subr.mxu0 0.0
    %282 = vmatpush1.xpose.msra.mxu0 0.0
    %283 = vmatprep.subr.mxu0 0.0
    %284 = vmatpush1.xpose.msra.mxu0 0.0
    %285 = vmatprep.subr.mxu0 0.0
    %286 = vmatpush1.xpose.msra.mxu0 0.0
    %287 = vmatprep.subr.mxu0 0.0
    %288 = vmatpush1.xpose.msra.mxu0 0.0
    %289 = vmatprep.subr.mxu0 0.0
    %290 = vmatpush1.xpose.msra.mxu0 0.0
    %291 = vmatprep.subr.mxu0 0.0
    %292 = vmatpush1.xpose.msra.mxu0 0.0
    %293 = vmatprep.subr.mxu0 0.0
    %294 = vmatpush1.xpose.msra.mxu0 0.0
    %295 = vmatprep.subr.mxu0 0.0
    %296 = vmatpush1.xpose.msra.mxu0 0.0
    %297 = vmatprep.subr.mxu0 0.0
    %298 = vmatpush1.xpose.msra.mxu0 0.0
    %299 = vmatprep.subr.mxu0 0.0
    %300 = vmatpush1.xpose.msra.mxu0 0.0
    %301 = vmatprep.subr.mxu0 0.0
    %302 = vmatpush1.xpose.msra.mxu0 0.0
    %303 = vmatprep.subr.mxu0 0.0
    %304 = vmatpush1.xpose.msra.mxu0 0.0
    %305 = vmatprep.mubr.f32.mxu0 0.0
    %306 = vmatmul.mubr.f32.gmra.mrb[0].mxu0 %v237
    %v307 = vpop.f32.mrb[0].mxu0
    %v308 = vadd.f32 0.0, %v307
    %v309 = vpop.f32.mrb[0].mxu0
    %310 = vdwg.mxu0
    %311 = vrot.lane.b32.xlu0 %v217, 96
    %v312 = vpop.permute.xlu0 %311
    %v313 = vsel %vm236, %v217, 0
    %v315 = vsel %vm236, %v312, 0
    %317 = vmatprep.subr.mxu0 0.0
    %318 = vmatpush1.xpose.msra.mxu0 %v315
    %319 = vmatprep.subr.mxu0 0.0
    %320 = vmatpush1.xpose.msra.mxu0 0.0
    %321 = vmatprep.subr.mxu0 0.0
    %322 = vmatpush1.xpose.msra.mxu0 0.0
    %323 = vmatprep.subr.mxu0 0.0
    %324 = vmatpush1.xpose.msra.mxu0 0.0
    %325 = vmatprep.subr.mxu0 0.0
    %326 = vmatpush1.xpose.msra.mxu0 0.0
    %327 = vmatprep.subr.mxu0 0.0
    %328 = vmatpush1.xpose.msra.mxu0 0.0
    %329 = vmatprep.subr.mxu0 0.0
    %330 = vmatpush1.xpose.msra.mxu0 0.0
    %331 = vmatprep.subr.mxu0 0.0
    %332 = vmatpush1.xpose.msra.mxu0 0.0
    %333 = vmatprep.subr.mxu0 0.0
    %334 = vmatpush1.xpose.msra.mxu0 0.0
    %335 = vmatprep.subr.mxu0 0.0
    %336 = vmatpush1.xpose.msra.mxu0 0.0
    %337 = vmatprep.subr.mxu0 0.0
    %338 = vmatpush1.xpose.msra.mxu0 0.0
    %339 = vmatprep.subr.mxu0 0.0
    %340 = vmatpush1.xpose.msra.mxu0 0.0
    %341 = vmatprep.subr.mxu0 0.0
    %342 = vmatpush1.xpose.msra.mxu0 0.0
    %343 = vmatprep.subr.mxu0 0.0
    %344 = vmatpush1.xpose.msra.mxu0 0.0
    %345 = vmatprep.subr.mxu0 0.0
    %346 = vmatpush1.xpose.msra.mxu0 0.0
    %347 = vmatprep.subr.mxu0 0.0
    %348 = vmatpush1.xpose.msra.mxu0 0.0
    %349 = vmatprep.subr.mxu0 0.0
    %350 = vmatpush1.xpose.msra.mxu0 0.0
    %351 = vmatprep.subr.mxu0 0.0
    %352 = vmatpush1.xpose.msra.mxu0 0.0
    %353 = vmatprep.subr.mxu0 0.0
    %354 = vmatpush1.xpose.msra.mxu0 0.0
    %355 = vmatprep.subr.mxu0 0.0
    %356 = vmatpush1.xpose.msra.mxu0 0.0
    %357 = vmatprep.subr.mxu0 0.0
    %358 = vmatpush1.xpose.msra.mxu0 0.0
    %359 = vmatprep.subr.mxu0 0.0
    %360 = vmatpush1.xpose.msra.mxu0 0.0
    %361 = vmatprep.subr.mxu0 0.0
    %362 = vmatpush1.xpose.msra.mxu0 0.0
    %363 = vmatprep.subr.mxu0 0.0
    %364 = vmatpush1.xpose.msra.mxu0 0.0
    %365 = vmatprep.subr.mxu0 0.0
    %366 = vmatpush1.xpose.msra.mxu0 0.0
    %367 = vmatprep.subr.mxu0 0.0
    %368 = vmatpush1.xpose.msra.mxu0 0.0
    %369 = vmatprep.subr.mxu0 0.0
    %370 = vmatpush1.xpose.msra.mxu0 0.0
    %371 = vmatprep.subr.mxu0 0.0
    %372 = vmatpush1.xpose.msra.mxu0 0.0
    %373 = vmatprep.subr.mxu0 0.0
    %374 = vmatpush1.xpose.msra.mxu0 0.0
    %375 = vmatprep.subr.mxu0 0.0
    %376 = vmatpush1.xpose.msra.mxu0 0.0
    %377 = vmatprep.subr.mxu0 0.0
    %378 = vmatpush1.xpose.msra.mxu0 0.0
    %379 = vmatprep.subr.mxu0 0.0
    %380 = vmatpush1.xpose.msra.mxu0 0.0
    %381 = vmatprep.mubr.f32.mxu0 0.0
    %382 = vmatmul.mubr.f32.gmra.mrb[0].mxu0 %v313
    %v383 = vpop.f32.mrb[0].mxu0
    %v384 = vadd.f32 0.0, %v383
    %v385 = vpop.f32.mrb[0].mxu0
    %386 = vdwg.mxu0
    %387 = vrot.lane.b32.xlu0 %v223, 96
    %v388 = vpop.permute.xlu0 %387
    %v389 = vsel %vm236, %v223, 0
    %v391 = vsel %vm236, %v388, 0
    %393 = vmatprep.subr.mxu0 0.0
    %394 = vmatpush1.xpose.msra.mxu0 %v391
    %395 = vmatprep.subr.mxu0 0.0
    %396 = vmatpush1.xpose.msra.mxu0 0.0
    %397 = vmatprep.subr.mxu0 0.0
    %398 = vmatpush1.xpose.msra.mxu0 0.0
    %399 = vmatprep.subr.mxu0 0.0
    %400 = vmatpush1.xpose.msra.mxu0 0.0
    %401 = vmatprep.subr.mxu0 0.0
    %402 = vmatpush1.xpose.msra.mxu0 0.0
    %403 = vmatprep.subr.mxu0 0.0
    %404 = vmatpush1.xpose.msra.mxu0 0.0
    %405 = vmatprep.subr.mxu0 0.0
    %406 = vmatpush1.xpose.msra.mxu0 0.0
    %407 = vmatprep.subr.mxu0 0.0
    %408 = vmatpush1.xpose.msra.mxu0 0.0
    %409 = vmatprep.subr.mxu0 0.0
    %410 = vmatpush1.xpose.msra.mxu0 0.0
    %411 = vmatprep.subr.mxu0 0.0
    %412 = vmatpush1.xpose.msra.mxu0 0.0
    %413 = vmatprep.subr.mxu0 0.0
    %414 = vmatpush1.xpose.msra.mxu0 0.0
    %415 = vmatprep.subr.mxu0 0.0
    %416 = vmatpush1.xpose.msra.mxu0 0.0
    %417 = vmatprep.subr.mxu0 0.0
    %418 = vmatpush1.xpose.msra.mxu0 0.0
    %419 = vmatprep.subr.mxu0 0.0
    %420 = vmatpush1.xpose.msra.mxu0 0.0
    %421 = vmatprep.subr.mxu0 0.0
    %422 = vmatpush1.xpose.msra.mxu0 0.0
    %423 = vmatprep.subr.mxu0 0.0
    %424 = vmatpush1.xpose.msra.mxu0 0.0
    %425 = vmatprep.subr.mxu0 0.0
    %426 = vmatpush1.xpose.msra.mxu0 0.0
    %427 = vmatprep.subr.mxu0 0.0
    %428 = vmatpush1.xpose.msra.mxu0 0.0
    %429 = vmatprep.subr.mxu0 0.0
    %430 = vmatpush1.xpose.msra.mxu0 0.0
    %431 = vmatprep.subr.mxu0 0.0
    %432 = vmatpush1.xpose.msra.mxu0 0.0
    %433 = vmatprep.subr.mxu0 0.0
    %434 = vmatpush1.xpose.msra.mxu0 0.0
    %435 = vmatprep.subr.mxu0 0.0
    %436 = vmatpush1.xpose.msra.mxu0 0.0
    %437 = vmatprep.subr.mxu0 0.0
    %438 = vmatpush1.xpose.msra.mxu0 0.0
    %439 = vmatprep.subr.mxu0 0.0
    %440 = vmatpush1.xpose.msra.mxu0 0.0
    %441 = vmatprep.subr.mxu0 0.0
    %442 = vmatpush1.xpose.msra.mxu0 0.0
    %443 = vmatprep.subr.mxu0 0.0
    %444 = vmatpush1.xpose.msra.mxu0 0.0
    %445 = vmatprep.subr.mxu0 0.0
    %446 = vmatpush1.xpose.msra.mxu0 0.0
    %447 = vmatprep.subr.mxu0 0.0
    %448 = vmatpush1.xpose.msra.mxu0 0.0
    %449 = vmatprep.subr.mxu0 0.0
    %450 = vmatpush1.xpose.msra.mxu0 0.0
    %451 = vmatprep.subr.mxu0 0.0
    %452 = vmatpush1.xpose.msra.mxu0 0.0
    %453 = vmatprep.subr.mxu0 0.0
    %454 = vmatpush1.xpose.msra.mxu0 0.0
    %455 = vmatprep.subr.mxu0 0.0
    %456 = vmatpush1.xpose.msra.mxu0 0.0
    %457 = vmatprep.mubr.f32.mxu0 0.0
    %458 = vmatmul.mubr.f32.gmra.mrb[0].mxu0 %v389
    %v459 = vpop.f32.mrb[0].mxu0
    %v460 = vadd.f32 0.0, %v459
    %v461 = vpop.f32.mrb[0].mxu0
    %462 = vdwg.mxu0
    %463 = vrot.lane.b32.xlu0 %v225, 96
    %v464 = vpop.permute.xlu0 %463
    %v465 = vsel %vm236, %v225, 0
    %v467 = vsel %vm236, %v464, 0
    %469 = vmatprep.subr.mxu0 0.0
    %470 = vmatpush1.xpose.msra.mxu0 %v467
    %471 = vmatprep.subr.mxu0 0.0
    %472 = vmatpush1.xpose.msra.mxu0 0.0
    %473 = vmatprep.subr.mxu0 0.0
    %474 = vmatpush1.xpose.msra.mxu0 0.0
    %475 = vmatprep.subr.mxu0 0.0
    %476 = vmatpush1.xpose.msra.mxu0 0.0
    %477 = vmatprep.subr.mxu0 0.0
    %478 = vmatpush1.xpose.msra.mxu0 0.0
    %479 = vmatprep.subr.mxu0 0.0
    %480 = vmatpush1.xpose.msra.mxu0 0.0
    %481 = vmatprep.subr.mxu0 0.0
    %482 = vmatpush1.xpose.msra.mxu0 0.0
    %483 = vmatprep.subr.mxu0 0.0
    %484 = vmatpush1.xpose.msra.mxu0 0.0
    %485 = vmatprep.subr.mxu0 0.0
    %486 = vmatpush1.xpose.msra.mxu0 0.0
    %487 = vmatprep.subr.mxu0 0.0
    %488 = vmatpush1.xpose.msra.mxu0 0.0
    %489 = vmatprep.subr.mxu0 0.0
    %490 = vmatpush1.xpose.msra.mxu0 0.0
    %491 = vmatprep.subr.mxu0 0.0
    %492 = vmatpush1.xpose.msra.mxu0 0.0
    %493 = vmatprep.subr.mxu0 0.0
    %494 = vmatpush1.xpose.msra.mxu0 0.0
    %495 = vmatprep.subr.mxu0 0.0
    %496 = vmatpush1.xpose.msra.mxu0 0.0
    %497 = vmatprep.subr.mxu0 0.0
    %498 = vmatpush1.xpose.msra.mxu0 0.0
    %499 = vmatprep.subr.mxu0 0.0
    %500 = vmatpush1.xpose.msra.mxu0 0.0
    %501 = vmatprep.subr.mxu0 0.0
    %502 = vmatpush1.xpose.msra.mxu0 0.0
    %503 = vmatprep.subr.mxu0 0.0
    %504 = vmatpush1.xpose.msra.mxu0 0.0
    %505 = vmatprep.subr.mxu0 0.0
    %506 = vmatpush1.xpose.msra.mxu0 0.0
    %507 = vmatprep.subr.mxu0 0.0
    %508 = vmatpush1.xpose.msra.mxu0 0.0
    %509 = vmatprep.subr.mxu0 0.0
    %510 = vmatpush1.xpose.msra.mxu0 0.0
    %511 = vmatprep.subr.mxu0 0.0
    %512 = vmatpush1.xpose.msra.mxu0 0.0
    %513 = vmatprep.subr.mxu0 0.0
    %514 = vmatpush1.xpose.msra.mxu0 0.0
    %515 = vmatprep.subr.mxu0 0.0
    %516 = vmatpush1.xpose.msra.mxu0 0.0
    %517 = vmatprep.subr.mxu0 0.0
    %518 = vmatpush1.xpose.msra.mxu0 0.0
    %519 = vmatprep.subr.mxu0 0.0
    %520 = vmatpush1.xpose.msra.mxu0 0.0
    %521 = vmatprep.subr.mxu0 0.0
    %522 = vmatpush1.xpose.msra.mxu0 0.0
    %523 = vmatprep.subr.mxu0 0.0
    %524 = vmatpush1.xpose.msra.mxu0 0.0
    %525 = vmatprep.subr.mxu0 0.0
    %526 = vmatpush1.xpose.msra.mxu0 0.0
    %527 = vmatprep.subr.mxu0 0.0
    %528 = vmatpush1.xpose.msra.mxu0 0.0
    %529 = vmatprep.subr.mxu0 0.0
    %530 = vmatpush1.xpose.msra.mxu0 0.0
    %531 = vmatprep.subr.mxu0 0.0
    %532 = vmatpush1.xpose.msra.mxu0 0.0
    %533 = vmatprep.mubr.f32.mxu0 0.0
    %534 = vmatmul.mubr.f32.gmra.mrb[0].mxu0 %v465
    %v535 = vpop.f32.mrb[0].mxu0
    %v536 = vadd.f32 0.0, %v535
    %v537 = vpop.f32.mrb[0].mxu0
    %538 = vdwg.mxu0
    %539 = vrot.lane.b32.xlu0 %v227, 96
    %v540 = vpop.permute.xlu0 %539
    %v541 = vsel %vm236, %v227, 0
    %v543 = vsel %vm236, %v540, 0
    %545 = vmatprep.subr.mxu0 0.0
    %546 = vmatpush1.xpose.msra.mxu0 %v543
    %547 = vmatprep.subr.mxu0 0.0
    %548 = vmatpush1.xpose.msra.mxu0 0.0
    %549 = vmatprep.subr.mxu0 0.0
    %550 = vmatpush1.xpose.msra.mxu0 0.0
    %551 = vmatprep.subr.mxu0 0.0
    %552 = vmatpush1.xpose.msra.mxu0 0.0
    %553 = vmatprep.subr.mxu0 0.0
    %554 = vmatpush1.xpose.msra.mxu0 0.0
    %555 = vmatprep.subr.mxu0 0.0
    %556 = vmatpush1.xpose.msra.mxu0 0.0
    %557 = vmatprep.subr.mxu0 0.0
    %558 = vmatpush1.xpose.msra.mxu0 0.0
    %559 = vmatprep.subr.mxu0 0.0
    %560 = vmatpush1.xpose.msra.mxu0 0.0
    %561 = vmatprep.subr.mxu0 0.0
    %562 = vmatpush1.xpose.msra.mxu0 0.0
    %563 = vmatprep.subr.mxu0 0.0
    %564 = vmatpush1.xpose.msra.mxu0 0.0
    %565 = vmatprep.subr.mxu0 0.0
    %566 = vmatpush1.xpose.msra.mxu0 0.0
    %567 = vmatprep.subr.mxu0 0.0
    %568 = vmatpush1.xpose.msra.mxu0 0.0
    %569 = vmatprep.subr.mxu0 0.0
    %570 = vmatpush1.xpose.msra.mxu0 0.0
    %571 = vmatprep.subr.mxu0 0.0
    %572 = vmatpush1.xpose.msra.mxu0 0.0
    %573 = vmatprep.subr.mxu0 0.0
    %574 = vmatpush1.xpose.msra.mxu0 0.0
    %575 = vmatprep.subr.mxu0 0.0
    %576 = vmatpush1.xpose.msra.mxu0 0.0
    %577 = vmatprep.subr.mxu0 0.0
    %578 = vmatpush1.xpose.msra.mxu0 0.0
    %579 = vmatprep.subr.mxu0 0.0
    %580 = vmatpush1.xpose.msra.mxu0 0.0
    %581 = vmatprep.subr.mxu0 0.0
    %582 = vmatpush1.xpose.msra.mxu0 0.0
    %583 = vmatprep.subr.mxu0 0.0
    %584 = vmatpush1.xpose.msra.mxu0 0.0
    %585 = vmatprep.subr.mxu0 0.0
    %586 = vmatpush1.xpose.msra.mxu0 0.0
    %587 = vmatprep.subr.mxu0 0.0
    %588 = vmatpush1.xpose.msra.mxu0 0.0
    %589 = vmatprep.subr.mxu0 0.0
    %590 = vmatpush1.xpose.msra.mxu0 0.0
    %591 = vmatprep.subr.mxu0 0.0
    %592 = vmatpush1.xpose.msra.mxu0 0.0
    %593 = vmatprep.subr.mxu0 0.0
    %594 = vmatpush1.xpose.msra.mxu0 0.0
    %595 = vmatprep.subr.mxu0 0.0
    %596 = vmatpush1.xpose.msra.mxu0 0.0
    %597 = vmatprep.subr.mxu0 0.0
    %598 = vmatpush1.xpose.msra.mxu0 0.0
    %599 = vmatprep.subr.mxu0 0.0
    %600 = vmatpush1.xpose.msra.mxu0 0.0
    %601 = vmatprep.subr.mxu0 0.0
    %602 = vmatpush1.xpose.msra.mxu0 0.0
    %603 = vmatprep.subr.mxu0 0.0
    %604 = vmatpush1.xpose.msra.mxu0 0.0
    %605 = vmatprep.subr.mxu0 0.0
    %606 = vmatpush1.xpose.msra.mxu0 0.0
    %607 = vmatprep.subr.mxu0 0.0
    %608 = vmatpush1.xpose.msra.mxu0 0.0
    %609 = vmatprep.mubr.f32.mxu0 0.0
    %610 = vmatmul.mubr.f32.gmra.mrb[0].mxu0 %v541
    %v611 = vpop.f32.mrb[0].mxu0
    %v612 = vadd.f32 0.0, %v611
    %v613 = vpop.f32.mrb[0].mxu0
    %614 = vdwg.mxu0
    %615 = vrot.lane.b32.xlu0 %v229, 96
    %v616 = vpop.permute.xlu0 %615
    %v617 = vsel %vm236, %v229, 0
    %v619 = vsel %vm236, %v616, 0
    %621 = vmatprep.subr.mxu0 0.0
    %622 = vmatpush1.xpose.msra.mxu0 %v619
    %623 = vmatprep.subr.mxu0 0.0
    %624 = vmatpush1.xpose.msra.mxu0 0.0
    %625 = vmatprep.subr.mxu0 0.0
    %626 = vmatpush1.xpose.msra.mxu0 0.0
    %627 = vmatprep.subr.mxu0 0.0
    %628 = vmatpush1.xpose.msra.mxu0 0.0
    %629 = vmatprep.subr.mxu0 0.0
    %630 = vmatpush1.xpose.msra.mxu0 0.0
    %631 = vmatprep.subr.mxu0 0.0
    %632 = vmatpush1.xpose.msra.mxu0 0.0
    %633 = vmatprep.subr.mxu0 0.0
    %634 = vmatpush1.xpose.msra.mxu0 0.0
    %635 = vmatprep.subr.mxu0 0.0
    %636 = vmatpush1.xpose.msra.mxu0 0.0
    %637 = vmatprep.subr.mxu0 0.0
    %638 = vmatpush1.xpose.msra.mxu0 0.0
    %639 = vmatprep.subr.mxu0 0.0
    %640 = vmatpush1.xpose.msra.mxu0 0.0
    %641 = vmatprep.subr.mxu0 0.0
    %642 = vmatpush1.xpose.msra.mxu0 0.0
    %643 = vmatprep.subr.mxu0 0.0
    %644 = vmatpush1.xpose.msra.mxu0 0.0
    %645 = vmatprep.subr.mxu0 0.0
    %646 = vmatpush1.xpose.msra.mxu0 0.0
    %647 = vmatprep.subr.mxu0 0.0
    %648 = vmatpush1.xpose.msra.mxu0 0.0
    %649 = vmatprep.subr.mxu0 0.0
    %650 = vmatpush1.xpose.msra.mxu0 0.0
    %651 = vmatprep.subr.mxu0 0.0
    %652 = vmatpush1.xpose.msra.mxu0 0.0
    %653 = vmatprep.subr.mxu0 0.0
    %654 = vmatpush1.xpose.msra.mxu0 0.0
    %655 = vmatprep.subr.mxu0 0.0
    %656 = vmatpush1.xpose.msra.mxu0 0.0
    %657 = vmatprep.subr.mxu0 0.0
    %658 = vmatpush1.xpose.msra.mxu0 0.0
    %659 = vmatprep.subr.mxu0 0.0
    %660 = vmatpush1.xpose.msra.mxu0 0.0
    %661 = vmatprep.subr.mxu0 0.0
    %662 = vmatpush1.xpose.msra.mxu0 0.0
    %663 = vmatprep.subr.mxu0 0.0
    %664 = vmatpush1.xpose.msra.mxu0 0.0
    %665 = vmatprep.subr.mxu0 0.0
    %666 = vmatpush1.xpose.msra.mxu0 0.0
    %667 = vmatprep.subr.mxu0 0.0
    %668 = vmatpush1.xpose.msra.mxu0 0.0
    %669 = vmatprep.subr.mxu0 0.0
    %670 = vmatpush1.xpose.msra.mxu0 0.0
    %671 = vmatprep.subr.mxu0 0.0
    %672 = vmatpush1.xpose.msra.mxu0 0.0
    %673 = vmatprep.subr.mxu0 0.0
    %674 = vmatpush1.xpose.msra.mxu0 0.0
    %675 = vmatprep.subr.mxu0 0.0
    %676 = vmatpush1.xpose.msra.mxu0 0.0
    %677 = vmatprep.subr.mxu0 0.0
    %678 = vmatpush1.xpose.msra.mxu0 0.0
    %679 = vmatprep.subr.mxu0 0.0
    %680 = vmatpush1.xpose.msra.mxu0 0.0
    %681 = vmatprep.subr.mxu0 0.0
    %682 = vmatpush1.xpose.msra.mxu0 0.0
    %683 = vmatprep.subr.mxu0 0.0
    %684 = vmatpush1.xpose.msra.mxu0 0.0
    %685 = vmatprep.mubr.f32.mxu0 0.0
    %686 = vmatmul.mubr.f32.gmra.mrb[0].mxu0 %v617
    %v687 = vpop.f32.mrb[0].mxu0
    %v688 = vadd.f32 0.0, %v687
    %v689 = vpop.f32.mrb[0].mxu0
    %690 = vdwg.mxu0
    %691 = vrot.lane.b32.xlu0 %v231, 96
    %v692 = vpop.permute.xlu0 %691
    %v693 = vsel %vm236, %v231, 0
    %v695 = vsel %vm236, %v692, 0
    %697 = vmatprep.subr.mxu0 0.0
    %698 = vmatpush1.xpose.msra.mxu0 %v695
    %699 = vmatprep.subr.mxu0 0.0
    %700 = vmatpush1.xpose.msra.mxu0 0.0
    %701 = vmatprep.subr.mxu0 0.0
    %702 = vmatpush1.xpose.msra.mxu0 0.0
    %703 = vmatprep.subr.mxu0 0.0
    %704 = vmatpush1.xpose.msra.mxu0 0.0
    %705 = vmatprep.subr.mxu0 0.0
    %706 = vmatpush1.xpose.msra.mxu0 0.0
    %707 = vmatprep.subr.mxu0 0.0
    %708 = vmatpush1.xpose.msra.mxu0 0.0
    %709 = vmatprep.subr.mxu0 0.0
    %710 = vmatpush1.xpose.msra.mxu0 0.0
    %711 = vmatprep.subr.mxu0 0.0
    %712 = vmatpush1.xpose.msra.mxu0 0.0
    %713 = vmatprep.subr.mxu0 0.0
    %714 = vmatpush1.xpose.msra.mxu0 0.0
    %715 = vmatprep.subr.mxu0 0.0
    %716 = vmatpush1.xpose.msra.mxu0 0.0
    %717 = vmatprep.subr.mxu0 0.0
    %718 = vmatpush1.xpose.msra.mxu0 0.0
    %719 = vmatprep.subr.mxu0 0.0
    %720 = vmatpush1.xpose.msra.mxu0 0.0
    %721 = vmatprep.subr.mxu0 0.0
    %722 = vmatpush1.xpose.msra.mxu0 0.0
    %723 = vmatprep.subr.mxu0 0.0
    %724 = vmatpush1.xpose.msra.mxu0 0.0
    %725 = vmatprep.subr.mxu0 0.0
    %726 = vmatpush1.xpose.msra.mxu0 0.0
    %727 = vmatprep.subr.mxu0 0.0
    %728 = vmatpush1.xpose.msra.mxu0 0.0
    %729 = vmatprep.subr.mxu0 0.0
    %730 = vmatpush1.xpose.msra.mxu0 0.0
    %731 = vmatprep.subr.mxu0 0.0
    %732 = vmatpush1.xpose.msra.mxu0 0.0
    %733 = vmatprep.subr.mxu0 0.0
    %734 = vmatpush1.xpose.msra.mxu0 0.0
    %735 = vmatprep.subr.mxu0 0.0
    %736 = vmatpush1.xpose.msra.mxu0 0.0
    %737 = vmatprep.subr.mxu0 0.0
    %738 = vmatpush1.xpose.msra.mxu0 0.0
    %739 = vmatprep.subr.mxu0 0.0
    %740 = vmatpush1.xpose.msra.mxu0 0.0
    %741 = vmatprep.subr.mxu0 0.0
    %742 = vmatpush1.xpose.msra.mxu0 0.0
    %743 = vmatprep.subr.mxu0 0.0
    %744 = vmatpush1.xpose.msra.mxu0 0.0
    %745 = vmatprep.subr.mxu0 0.0
    %746 = vmatpush1.xpose.msra.mxu0 0.0
    %747 = vmatprep.subr.mxu0 0.0
    %748 = vmatpush1.xpose.msra.mxu0 0.0
    %749 = vmatprep.subr.mxu0 0.0
    %750 = vmatpush1.xpose.msra.mxu0 0.0
    %751 = vmatprep.subr.mxu0 0.0
    %752 = vmatpush1.xpose.msra.mxu0 0.0
    %753 = vmatprep.subr.mxu0 0.0
    %754 = vmatpush1.xpose.msra.mxu0 0.0
    %755 = vmatprep.subr.mxu0 0.0
    %756 = vmatpush1.xpose.msra.mxu0 0.0
    %757 = vmatprep.subr.mxu0 0.0
    %758 = vmatpush1.xpose.msra.mxu0 0.0
    %759 = vmatprep.subr.mxu0 0.0
    %760 = vmatpush1.xpose.msra.mxu0 0.0
    %761 = vmatprep.mubr.f32.mxu0 0.0
    %762 = vmatmul.mubr.f32.gmra.mrb[0].mxu0 %v693
    %v763 = vpop.f32.mrb[0].mxu0
    %v764 = vadd.f32 0.0, %v763
    %v765 = vpop.f32.mrb[0].mxu0
    %766 = vdwg.mxu0
    %767 = vrot.lane.b32.xlu0 %v233, 96
    %v768 = vpop.permute.xlu0 %767
    %v769 = vsel %vm236, %v233, 0
    %v771 = vsel %vm236, %v768, 0
    %773 = vmatprep.subr.mxu0 0.0
    %774 = vmatpush1.xpose.msra.mxu0 %v771
    %775 = vmatprep.subr.mxu0 0.0
    %776 = vmatpush1.xpose.msra.mxu0 0.0
    %777 = vmatprep.subr.mxu0 0.0
    %778 = vmatpush1.xpose.msra.mxu0 0.0
    %779 = vmatprep.subr.mxu0 0.0
    %780 = vmatpush1.xpose.msra.mxu0 0.0
    %781 = vmatprep.subr.mxu0 0.0
    %782 = vmatpush1.xpose.msra.mxu0 0.0
    %783 = vmatprep.subr.mxu0 0.0
    %784 = vmatpush1.xpose.msra.mxu0 0.0
    %785 = vmatprep.subr.mxu0 0.0
    %786 = vmatpush1.xpose.msra.mxu0 0.0
    %787 = vmatprep.subr.mxu0 0.0
    %788 = vmatpush1.xpose.msra.mxu0 0.0
    %789 = vmatprep.subr.mxu0 0.0
    %790 = vmatpush1.xpose.msra.mxu0 0.0
    %791 = vmatprep.subr.mxu0 0.0
    %792 = vmatpush1.xpose.msra.mxu0 0.0
    %793 = vmatprep.subr.mxu0 0.0
    %794 = vmatpush1.xpose.msra.mxu0 0.0
    %795 = vmatprep.subr.mxu0 0.0
    %796 = vmatpush1.xpose.msra.mxu0 0.0
    %797 = vmatprep.subr.mxu0 0.0
    %798 = vmatpush1.xpose.msra.mxu0 0.0
    %799 = vmatprep.subr.mxu0 0.0
    %800 = vmatpush1.xpose.msra.mxu0 0.0
    %801 = vmatprep.subr.mxu0 0.0
    %802 = vmatpush1.xpose.msra.mxu0 0.0
    %803 = vmatprep.subr.mxu0 0.0
    %804 = vmatpush1.xpose.msra.mxu0 0.0
    %805 = vmatprep.subr.mxu0 0.0
    %806 = vmatpush1.xpose.msra.mxu0 0.0
    %807 = vmatprep.subr.mxu0 0.0
    %808 = vmatpush1.xpose.msra.mxu0 0.0
    %809 = vmatprep.subr.mxu0 0.0
    %810 = vmatpush1.xpose.msra.mxu0 0.0
    %811 = vmatprep.subr.mxu0 0.0
    %812 = vmatpush1.xpose.msra.mxu0 0.0
    %813 = vmatprep.subr.mxu0 0.0
    %814 = vmatpush1.xpose.msra.mxu0 0.0
    %815 = vmatprep.subr.mxu0 0.0
    %816 = vmatpush1.xpose.msra.mxu0 0.0
    %817 = vmatprep.subr.mxu0 0.0
    %818 = vmatpush1.xpose.msra.mxu0 0.0
    %819 = vmatprep.subr.mxu0 0.0
    %820 = vmatpush1.xpose.msra.mxu0 0.0
    %821 = vmatprep.subr.mxu0 0.0
    %822 = vmatpush1.xpose.msra.mxu0 0.0
    %823 = vmatprep.subr.mxu0 0.0
    %824 = vmatpush1.xpose.msra.mxu0 0.0
    %825 = vmatprep.subr.mxu0 0.0
    %826 = vmatpush1.xpose.msra.mxu0 0.0
    %827 = vmatprep.subr.mxu0 0.0
    %828 = vmatpush1.xpose.msra.mxu0 0.0
    %829 = vmatprep.subr.mxu0 0.0
    %830 = vmatpush1.xpose.msra.mxu0 0.0
    %831 = vmatprep.subr.mxu0 0.0
    %832 = vmatpush1.xpose.msra.mxu0 0.0
    %833 = vmatprep.subr.mxu0 0.0
    %834 = vmatpush1.xpose.msra.mxu0 0.0
    %835 = vmatprep.subr.mxu0 0.0
    %836 = vmatpush1.xpose.msra.mxu0 0.0
    %837 = vmatprep.mubr.f32.mxu0 0.0
    %838 = vmatmul.mubr.f32.gmra.mrb[0].mxu0 %v769
    %v839 = vpop.f32.mrb[0].mxu0
    %v840 = vadd.f32 0.0, %v839
    %v841 = vpop.f32.mrb[0].mxu0
    %842 = vdwg.mxu0
    %v843 = vmul.f32 %v308, 0.35355338
    %v844 = vmul.f32 %v384, 0.35355338
    %v845 = vmul.f32 %v460, 0.35355338
    %v846 = vmul.f32 %v536, 0.35355338
    %v847 = vmul.f32 %v612, 0.35355338
    %v848 = vmul.f32 %v688, 0.35355338
    %v849 = vmul.f32 %v764, 0.35355338
    %v850 = vmul.f32 %v840, 0.35355338
    %v851 = vadd.f32 %v843, %v79
    %v852 = vadd.f32 %v844, %v83
    %v853 = vadd.f32 %v845, %v79
    %v854 = vadd.f32 %v846, %v83
    %v855 = vadd.f32 %v847, %v79
    %v856 = vadd.f32 %v848, %v83
    %v857 = vadd.f32 %v849, %v79
    %v858 = vadd.f32 %v850, %v83
    %v859 = vsel %vm236, %v851, -inf
    %860 = vmax.xlane.f32.xlu0 %v859
    %v861 = vpop.xlane.xlu0 %860
    %v862 = vsel %vm236, %v852, -inf
    %863 = vmax.xlane.f32.xlu0 %v862
    %v864 = vpop.xlane.xlu0 %863
    %v865 = vsel %vm236, %v853, -inf
    %866 = vmax.xlane.f32.xlu0 %v865
    %v867 = vpop.xlane.xlu0 %866
    %v868 = vsel %vm236, %v854, -inf
    %869 = vmax.xlane.f32.xlu0 %v868
    %v870 = vpop.xlane.xlu0 %869
    %v871 = vsel %vm236, %v855, -inf
    %872 = vmax.xlane.f32.xlu0 %v871
    %v873 = vpop.xlane.xlu0 %872
    %v874 = vsel %vm236, %v856, -inf
    %875 = vmax.xlane.f32.xlu0 %v874
    %v876 = vpop.xlane.xlu0 %875
    %v877 = vsel %vm236, %v857, -inf
    %878 = vmax.xlane.f32.xlu0 %v877
    %v879 = vpop.xlane.xlu0 %878
    %v880 = vsel %vm236, %v858, -inf
    %881 = vmax.xlane.f32.xlu0 %v880
    %v882 = vpop.xlane.xlu0 %881
    %v883 = vsub.f32 %v851, %v861
    %v884 = vsub.f32 %v852, %v864
    %v885 = vsub.f32 %v853, %v867
    %v886 = vsub.f32 %v854, %v870
    %v887 = vsub.f32 %v855, %v873
    %v888 = vsub.f32 %v856, %v876
    %v889 = vsub.f32 %v857, %v879
    %v890 = vsub.f32 %v858, %v882
    %v891 = vmul.f32 %v883, 1.442695
    %v892 = vpow.pop %v891
    %v893 = vmul.f32 %v884, 1.442695
    %v894 = vpow.pop %v893
    %v895 = vmul.f32 %v885, 1.442695
    %v896 = vpow.pop %v895
    %v897 = vmul.f32 %v886, 1.442695
    %v898 = vpow.pop %v897
    %v899 = vmul.f32 %v887, 1.442695
    %v900 = vpow.pop %v899
    %v901 = vmul.f32 %v888, 1.442695
    %v902 = vpow.pop %v901
    %v903 = vmul.f32 %v889, 1.442695
    %v904 = vpow.pop %v903
    %v905 = vmul.f32 %v890, 1.442695
    %v906 = vpow.pop %v905
    %v907 = vsel %vm236, %v892, 0.0
    %908 = vadd.xlane.f32.xlu0 %v907
    %v909 = vpop.xlane.xlu0 %908
    %v910 = vsel %vm236, %v894, 0.0
    %911 = vadd.xlane.f32.xlu0 %v910
    %v912 = vpop.xlane.xlu0 %911
    %v913 = vsel %vm236, %v896, 0.0
    %914 = vadd.xlane.f32.xlu0 %v913
    %v915 = vpop.xlane.xlu0 %914
    %v916 = vsel %vm236, %v898, 0.0
    %917 = vadd.xlane.f32.xlu0 %v916
    %v918 = vpop.xlane.xlu0 %917
    %v919 = vsel %vm236, %v900, 0.0
    %920 = vadd.xlane.f32.xlu0 %v919
    %v921 = vpop.xlane.xlu0 %920
    %v922 = vsel %vm236, %v902, 0.0
    %923 = vadd.xlane.f32.xlu0 %v922
    %v924 = vpop.xlane.xlu0 %923
    %v925 = vsel %vm236, %v904, 0.0
    %926 = vadd.xlane.f32.xlu0 %v925
    %v927 = vpop.xlane.xlu0 %926
    %v928 = vsel %vm236, %v906, 0.0
    %929 = vadd.xlane.f32.xlu0 %v928
    %v930 = vpop.xlane.xlu0 %929
    %v931 = vrcp.pop %v909
    %v932 = vrcp.pop %v912
    %v933 = vrcp.pop %v915
    %v934 = vrcp.pop %v918
    %v935 = vrcp.pop %v921
    %v936 = vrcp.pop %v924
    %v937 = vrcp.pop %v927
    %v938 = vrcp.pop %v930
    %v939 = vmul.f32 %v892, %v931
    %v940 = vmul.f32 %v894, %v932
    %v941 = vmul.f32 %v896, %v933
    %v942 = vmul.f32 %v898, %v934
    %v943 = vmul.f32 %v900, %v935
    %v944 = vmul.f32 %v902, %v936
    %v945 = vmul.f32 %v904, %v937
    %v946 = vmul.f32 %v906, %v938
    %947 = vrot.lane.b32.xlu0 %v212, 64
    %v948 = vpop.permute.xlu0 %947
    %v951 = vsel %vm236, %v939, 0
    %953 = vmatprep.subr.mxu0 0.0
    %954 = vmatpush1.msra.mxu0 %v948
    %955 = vmatprep.subr.mxu0 0.0
    %956 = vmatpush1.msra.mxu0 0.0
    %957 = vmatprep.subr.mxu0 0.0
    %958 = vmatpush1.msra.mxu0 0.0
    %959 = vmatprep.subr.mxu0 0.0
    %960 = vmatpush1.msra.mxu0 0.0
    %961 = vmatprep.subr.mxu0 0.0
    %962 = vmatpush1.msra.mxu0 0.0
    %963 = vmatprep.subr.mxu0 0.0
    %964 = vmatpush1.msra.mxu0 0.0
    %965 = vmatprep.subr.mxu0 0.0
    %966 = vmatpush1.msra.mxu0 0.0
    %967 = vmatprep.subr.mxu0 0.0
    %968 = vmatpush1.msra.mxu0 0.0
    %969 = vmatprep.subr.mxu0 0.0
    %970 = vmatpush1.msra.mxu0 0.0
    %971 = vmatprep.subr.mxu0 0.0
    %972 = vmatpush1.msra.mxu0 0.0
    %973 = vmatprep.subr.mxu0 0.0
    %974 = vmatpush1.msra.mxu0 0.0
    %975 = vmatprep.subr.mxu0 0.0
    %976 = vmatpush1.msra.mxu0 0.0
    %977 = vmatprep.subr.mxu0 0.0
    %978 = vmatpush1.msra.mxu0 0.0
    %979 = vmatprep.subr.mxu0 0.0
    %980 = vmatpush1.msra.mxu0 0.0
    %981 = vmatprep.subr.mxu0 0.0
    %982 = vmatpush1.msra.mxu0 0.0
    %983 = vmatprep.subr.mxu0 0.0
    %984 = vmatpush1.msra.mxu0 0.0
    %985 = vmatprep.subr.mxu0 0.0
    %986 = vmatpush1.msra.mxu0 0.0
    %987 = vmatprep.subr.mxu0 0.0
    %988 = vmatpush1.msra.mxu0 0.0
    %989 = vmatprep.subr.mxu0 0.0
    %990 = vmatpush1.msra.mxu0 0.0
    %991 = vmatprep.subr.mxu0 0.0
    %992 = vmatpush1.msra.mxu0 0.0
    %993 = vmatprep.subr.mxu0 0.0
    %994 = vmatpush1.msra.mxu0 0.0
    %995 = vmatprep.subr.mxu0 0.0
    %996 = vmatpush1.msra.mxu0 0.0
    %997 = vmatprep.subr.mxu0 0.0
    %998 = vmatpush1.msra.mxu0 0.0
    %999 = vmatprep.subr.mxu0 0.0
    %1000 = vmatpush1.msra.mxu0 0.0
    %1001 = vmatprep.subr.mxu0 0.0
    %1002 = vmatpush1.msra.mxu0 0.0
    %1003 = vmatprep.subr.mxu0 0.0
    %1004 = vmatpush1.msra.mxu0 0.0
    %1005 = vmatprep.subr.mxu0 0.0
    %1006 = vmatpush1.msra.mxu0 0.0
    %1007 = vmatprep.subr.mxu0 0.0
    %1008 = vmatpush1.msra.mxu0 0.0
    %1009 = vmatprep.subr.mxu0 0.0
    %1010 = vmatpush1.msra.mxu0 0.0
    %1011 = vmatprep.subr.mxu0 0.0
    %1012 = vmatpush1.msra.mxu0 0.0
    %1013 = vmatprep.subr.mxu0 0.0
    %1014 = vmatpush1.msra.mxu0 0.0
    %1015 = vmatprep.subr.mxu0 0.0
    %1016 = vmatpush1.msra.mxu0 0.0
    %1017 = vmatprep.mubr.f32.mxu0 0.0
    %1018 = vmatmul.mubr.f32.gmra.mrb[0].mxu0 %v951
    %v1019 = vpop.f32.mrb[0].mxu0
    %v1020 = vadd.f32 0.0, %v1019
    %v1021 = vpop.f32.mrb[0].mxu0
    %1022 = vdwg.mxu0
    %1023 = vrot.lane.b32.xlu0 %v217, 64
    %v1024 = vpop.permute.xlu0 %1023
    %v1027 = vsel %vm236, %v940, 0
    %1029 = vmatprep.subr.mxu0 0.0
    %1030 = vmatpush1.msra.mxu0 %v1024
    %1031 = vmatprep.subr.mxu0 0.0
    %1032 = vmatpush1.msra.mxu0 0.0
    %1033 = vmatprep.subr.mxu0 0.0
    %1034 = vmatpush1.msra.mxu0 0.0
    %1035 = vmatprep.subr.mxu0 0.0
    %1036 = vmatpush1.msra.mxu0 0.0
    %1037 = vmatprep.subr.mxu0 0.0
    %1038 = vmatpush1.msra.mxu0 0.0
    %1039 = vmatprep.subr.mxu0 0.0
    %1040 = vmatpush1.msra.mxu0 0.0
    %1041 = vmatprep.subr.mxu0 0.0
    %1042 = vmatpush1.msra.mxu0 0.0
    %1043 = vmatprep.subr.mxu0 0.0
    %1044 = vmatpush1.msra.mxu0 0.0
    %1045 = vmatprep.subr.mxu0 0.0
    %1046 = vmatpush1.msra.mxu0 0.0
    %1047 = vmatprep.subr.mxu0 0.0
    %1048 = vmatpush1.msra.mxu0 0.0
    %1049 = vmatprep.subr.mxu0 0.0
    %1050 = vmatpush1.msra.mxu0 0.0
    %1051 = vmatprep.subr.mxu0 0.0
    %1052 = vmatpush1.msra.mxu0 0.0
    %1053 = vmatprep.subr.mxu0 0.0
    %1054 = vmatpush1.msra.mxu0 0.0
    %1055 = vmatprep.subr.mxu0 0.0
    %1056 = vmatpush1.msra.mxu0 0.0
    %1057 = vmatprep.subr.mxu0 0.0
    %1058 = vmatpush1.msra.mxu0 0.0
    %1059 = vmatprep.subr.mxu0 0.0
    %1060 = vmatpush1.msra.mxu0 0.0
    %1061 = vmatprep.subr.mxu0 0.0
    %1062 = vmatpush1.msra.mxu0 0.0
    %1063 = vmatprep.subr.mxu0 0.0
    %1064 = vmatpush1.msra.mxu0 0.0
    %1065 = vmatprep.subr.mxu0 0.0
    %1066 = vmatpush1.msra.mxu0 0.0
    %1067 = vmatprep.subr.mxu0 0.0
    %1068 = vmatpush1.msra.mxu0 0.0
    %1069 = vmatprep.subr.mxu0 0.0
    %1070 = vmatpush1.msra.mxu0 0.0
    %1071 = vmatprep.subr.mxu0 0.0
    %1072 = vmatpush1.msra.mxu0 0.0
    %1073 = vmatprep.subr.mxu0 0.0
    %1074 = vmatpush1.msra.mxu0 0.0
    %1075 = vmatprep.subr.mxu0 0.0
    %1076 = vmatpush1.msra.mxu0 0.0
    %1077 = vmatprep.subr.mxu0 0.0
    %1078 = vmatpush1.msra.mxu0 0.0
    %1079 = vmatprep.subr.mxu0 0.0
    %1080 = vmatpush1.msra.mxu0 0.0
    %1081 = vmatprep.subr.mxu0 0.0
    %1082 = vmatpush1.msra.mxu0 0.0
    %1083 = vmatprep.subr.mxu0 0.0
    %1084 = vmatpush1.msra.mxu0 0.0
    %1085 = vmatprep.subr.mxu0 0.0
    %1086 = vmatpush1.msra.mxu0 0.0
    %1087 = vmatprep.subr.mxu0 0.0
    %1088 = vmatpush1.msra.mxu0 0.0
    %1089 = vmatprep.subr.mxu0 0.0
    %1090 = vmatpush1.msra.mxu0 0.0
    %1091 = vmatprep.subr.mxu0 0.0
    %1092 = vmatpush1.msra.mxu0 0.0
    %1093 = vmatprep.mubr.f32.mxu0 0.0
    %1094 = vmatmul.mubr.f32.gmra.mrb[0].mxu0 %v1027
    %v1095 = vpop.f32.mrb[0].mxu0
    %v1096 = vadd.f32 0.0, %v1095
    %v1097 = vpop.f32.mrb[0].mxu0
    %1098 = vdwg.mxu0
    %1099 = vrot.lane.b32.xlu0 %v223, 64
    %v1100 = vpop.permute.xlu0 %1099
    %v1103 = vsel %vm236, %v941, 0
    %1105 = vmatprep.subr.mxu0 0.0
    %1106 = vmatpush1.msra.mxu0 %v1100
    %1107 = vmatprep.subr.mxu0 0.0
    %1108 = vmatpush1.msra.mxu0 0.0
    %1109 = vmatprep.subr.mxu0 0.0
    %1110 = vmatpush1.msra.mxu0 0.0
    %1111 = vmatprep.subr.mxu0 0.0
    %1112 = vmatpush1.msra.mxu0 0.0
    %1113 = vmatprep.subr.mxu0 0.0
    %1114 = vmatpush1.msra.mxu0 0.0
    %1115 = vmatprep.subr.mxu0 0.0
    %1116 = vmatpush1.msra.mxu0 0.0
    %1117 = vmatprep.subr.mxu0 0.0
    %1118 = vmatpush1.msra.mxu0 0.0
    %1119 = vmatprep.subr.mxu0 0.0
    %1120 = vmatpush1.msra.mxu0 0.0
    %1121 = vmatprep.subr.mxu0 0.0
    %1122 = vmatpush1.msra.mxu0 0.0
    %1123 = vmatprep.subr.mxu0 0.0
    %1124 = vmatpush1.msra.mxu0 0.0
    %1125 = vmatprep.subr.mxu0 0.0
    %1126 = vmatpush1.msra.mxu0 0.0
    %1127 = vmatprep.subr.mxu0 0.0
    %1128 = vmatpush1.msra.mxu0 0.0
    %1129 = vmatprep.subr.mxu0 0.0
    %1130 = vmatpush1.msra.mxu0 0.0
    %1131 = vmatprep.subr.mxu0 0.0
    %1132 = vmatpush1.msra.mxu0 0.0
    %1133 = vmatprep.subr.mxu0 0.0
    %1134 = vmatpush1.msra.mxu0 0.0
    %1135 = vmatprep.subr.mxu0 0.0
    %1136 = vmatpush1.msra.mxu0 0.0
    %1137 = vmatprep.subr.mxu0 0.0
    %1138 = vmatpush1.msra.mxu0 0.0
    %1139 = vmatprep.subr.mxu0 0.0
    %1140 = vmatpush1.msra.mxu0 0.0
    %1141 = vmatprep.subr.mxu0 0.0
    %1142 = vmatpush1.msra.mxu0 0.0
    %1143 = vmatprep.subr.mxu0 0.0
    %1144 = vmatpush1.msra.mxu0 0.0
    %1145 = vmatprep.subr.mxu0 0.0
    %1146 = vmatpush1.msra.mxu0 0.0
    %1147 = vmatprep.subr.mxu0 0.0
    %1148 = vmatpush1.msra.mxu0 0.0
    %1149 = vmatprep.subr.mxu0 0.0
    %1150 = vmatpush1.msra.mxu0 0.0
    %1151 = vmatprep.subr.mxu0 0.0
    %1152 = vmatpush1.msra.mxu0 0.0
    %1153 = vmatprep.subr.mxu0 0.0
    %1154 = vmatpush1.msra.mxu0 0.0
    %1155 = vmatprep.subr.mxu0 0.0
    %1156 = vmatpush1.msra.mxu0 0.0
    %1157 = vmatprep.subr.mxu0 0.0
    %1158 = vmatpush1.msra.mxu0 0.0
    %1159 = vmatprep.subr.mxu0 0.0
    %1160 = vmatpush1.msra.mxu0 0.0
    %1161 = vmatprep.subr.mxu0 0.0
    %1162 = vmatpush1.msra.mxu0 0.0
    %1163 = vmatprep.subr.mxu0 0.0
    %1164 = vmatpush1.msra.mxu0 0.0
    %1165 = vmatprep.subr.mxu0 0.0
    %1166 = vmatpush1.msra.mxu0 0.0
    %1167 = vmatprep.subr.mxu0 0.0
    %1168 = vmatpush1.msra.mxu0 0.0
    %1169 = vmatprep.mubr.f32.mxu0 0.0
    %1170 = vmatmul.mubr.f32.gmra.mrb[0].mxu0 %v1103
    %v1171 = vpop.f32.mrb[0].mxu0
    %v1172 = vadd.f32 0.0, %v1171
    %v1173 = vpop.f32.mrb[0].mxu0
    %1174 = vdwg.mxu0
    %1175 = vrot.lane.b32.xlu0 %v225, 64
    %v1176 = vpop.permute.xlu0 %1175
    %v1179 = vsel %vm236, %v942, 0
    %1181 = vmatprep.subr.mxu0 0.0
    %1182 = vmatpush1.msra.mxu0 %v1176
    %1183 = vmatprep.subr.mxu0 0.0
    %1184 = vmatpush1.msra.mxu0 0.0
    %1185 = vmatprep.subr.mxu0 0.0
    %1186 = vmatpush1.msra.mxu0 0.0
    %1187 = vmatprep.subr.mxu0 0.0
    %1188 = vmatpush1.msra.mxu0 0.0
    %1189 = vmatprep.subr.mxu0 0.0
    %1190 = vmatpush1.msra.mxu0 0.0
    %1191 = vmatprep.subr.mxu0 0.0
    %1192 = vmatpush1.msra.mxu0 0.0
    %1193 = vmatprep.subr.mxu0 0.0
    %1194 = vmatpush1.msra.mxu0 0.0
    %1195 = vmatprep.subr.mxu0 0.0
    %1196 = vmatpush1.msra.mxu0 0.0
    %1197 = vmatprep.subr.mxu0 0.0
    %1198 = vmatpush1.msra.mxu0 0.0
    %1199 = vmatprep.subr.mxu0 0.0
    %1200 = vmatpush1.msra.mxu0 0.0
    %1201 = vmatprep.subr.mxu0 0.0
    %1202 = vmatpush1.msra.mxu0 0.0
    %1203 = vmatprep.subr.mxu0 0.0
    %1204 = vmatpush1.msra.mxu0 0.0
    %1205 = vmatprep.subr.mxu0 0.0
    %1206 = vmatpush1.msra.mxu0 0.0
    %1207 = vmatprep.subr.mxu0 0.0
    %1208 = vmatpush1.msra.mxu0 0.0
    %1209 = vmatprep.subr.mxu0 0.0
    %1210 = vmatpush1.msra.mxu0 0.0
    %1211 = vmatprep.subr.mxu0 0.0
    %1212 = vmatpush1.msra.mxu0 0.0
    %1213 = vmatprep.subr.mxu0 0.0
    %1214 = vmatpush1.msra.mxu0 0.0
    %1215 = vmatprep.subr.mxu0 0.0
    %1216 = vmatpush1.msra.mxu0 0.0
    %1217 = vmatprep.subr.mxu0 0.0
    %1218 = vmatpush1.msra.mxu0 0.0
    %1219 = vmatprep.subr.mxu0 0.0
    %1220 = vmatpush1.msra.mxu0 0.0
    %1221 = vmatprep.subr.mxu0 0.0
    %1222 = vmatpush1.msra.mxu0 0.0
    %1223 = vmatprep.subr.mxu0 0.0
    %1224 = vmatpush1.msra.mxu0 0.0
    %1225 = vmatprep.subr.mxu0 0.0
    %1226 = vmatpush1.msra.mxu0 0.0
    %1227 = vmatprep.subr.mxu0 0.0
    %1228 = vmatpush1.msra.mxu0 0.0
    %1229 = vmatprep.subr.mxu0 0.0
    %1230 = vmatpush1.msra.mxu0 0.0
    %1231 = vmatprep.subr.mxu0 0.0
    %1232 = vmatpush1.msra.mxu0 0.0
    %1233 = vmatprep.subr.mxu0 0.0
    %1234 = vmatpush1.msra.mxu0 0.0
    %1235 = vmatprep.subr.mxu0 0.0
    %1236 = vmatpush1.msra.mxu0 0.0
    %1237 = vmatprep.subr.mxu0 0.0
    %1238 = vmatpush1.msra.mxu0 0.0
    %1239 = vmatprep.subr.mxu0 0.0
    %1240 = vmatpush1.msra.mxu0 0.0
    %1241 = vmatprep.subr.mxu0 0.0
    %1242 = vmatpush1.msra.mxu0 0.0
    %1243 = vmatprep.subr.mxu0 0.0
    %1244 = vmatpush1.msra.mxu0 0.0
    %1245 = vmatprep.mubr.f32.mxu0 0.0
    %1246 = vmatmul.mubr.f32.gmra.mrb[0].mxu0 %v1179
    %v1247 = vpop.f32.mrb[0].mxu0
    %v1248 = vadd.f32 0.0, %v1247
    %v1249 = vpop.f32.mrb[0].mxu0
    %1250 = vdwg.mxu0
    %1251 = vrot.lane.b32.xlu0 %v227, 64
    %v1252 = vpop.permute.xlu0 %1251
    %v1255 = vsel %vm236, %v943, 0
    %1257 = vmatprep.subr.mxu0 0.0
    %1258 = vmatpush1.msra.mxu0 %v1252
    %1259 = vmatprep.subr.mxu0 0.0
    %1260 = vmatpush1.msra.mxu0 0.0
    %1261 = vmatprep.subr.mxu0 0.0
    %1262 = vmatpush1.msra.mxu0 0.0
    %1263 = vmatprep.subr.mxu0 0.0
    %1264 = vmatpush1.msra.mxu0 0.0
    %1265 = vmatprep.subr.mxu0 0.0
    %1266 = vmatpush1.msra.mxu0 0.0
    %1267 = vmatprep.subr.mxu0 0.0
    %1268 = vmatpush1.msra.mxu0 0.0
    %1269 = vmatprep.subr.mxu0 0.0
    %1270 = vmatpush1.msra.mxu0 0.0
    %1271 = vmatprep.subr.mxu0 0.0
    %1272 = vmatpush1.msra.mxu0 0.0
    %1273 = vmatprep.subr.mxu0 0.0
    %1274 = vmatpush1.msra.mxu0 0.0
    %1275 = vmatprep.subr.mxu0 0.0
    %1276 = vmatpush1.msra.mxu0 0.0
    %1277 = vmatprep.subr.mxu0 0.0
    %1278 = vmatpush1.msra.mxu0 0.0
    %1279 = vmatprep.subr.mxu0 0.0
    %1280 = vmatpush1.msra.mxu0 0.0
    %1281 = vmatprep.subr.mxu0 0.0
    %1282 = vmatpush1.msra.mxu0 0.0
    %1283 = vmatprep.subr.mxu0 0.0
    %1284 = vmatpush1.msra.mxu0 0.0
    %1285 = vmatprep.subr.mxu0 0.0
    %1286 = vmatpush1.msra.mxu0 0.0
    %1287 = vmatprep.subr.mxu0 0.0
    %1288 = vmatpush1.msra.mxu0 0.0
    %1289 = vmatprep.subr.mxu0 0.0
    %1290 = vmatpush1.msra.mxu0 0.0
    %1291 = vmatprep.subr.mxu0 0.0
    %1292 = vmatpush1.msra.mxu0 0.0
    %1293 = vmatprep.subr.mxu0 0.0
    %1294 = vmatpush1.msra.mxu0 0.0
    %1295 = vmatprep.subr.mxu0 0.0
    %1296 = vmatpush1.msra.mxu0 0.0
    %1297 = vmatprep.subr.mxu0 0.0
    %1298 = vmatpush1.msra.mxu0 0.0
    %1299 = vmatprep.subr.mxu0 0.0
    %1300 = vmatpush1.msra.mxu0 0.0
    %1301 = vmatprep.subr.mxu0 0.0
    %1302 = vmatpush1.msra.mxu0 0.0
    %1303 = vmatprep.subr.mxu0 0.0
    %1304 = vmatpush1.msra.mxu0 0.0
    %1305 = vmatprep.subr.mxu0 0.0
    %1306 = vmatpush1.msra.mxu0 0.0
    %1307 = vmatprep.subr.mxu0 0.0
    %1308 = vmatpush1.msra.mxu0 0.0
    %1309 = vmatprep.subr.mxu0 0.0
    %1310 = vmatpush1.msra.mxu0 0.0
    %1311 = vmatprep.subr.mxu0 0.0
    %1312 = vmatpush1.msra.mxu0 0.0
    %1313 = vmatprep.subr.mxu0 0.0
    %1314 = vmatpush1.msra.mxu0 0.0
    %1315 = vmatprep.subr.mxu0 0.0
    %1316 = vmatpush1.msra.mxu0 0.0
    %1317 = vmatprep.subr.mxu0 0.0
    %1318 = vmatpush1.msra.mxu0 0.0
    %1319 = vmatprep.subr.mxu0 0.0
    %1320 = vmatpush1.msra.mxu0 0.0
    %1321 = vmatprep.mubr.f32.mxu0 0.0
    %1322 = vmatmul.mubr.f32.gmra.mrb[0].mxu0 %v1255
    %v1323 = vpop.f32.mrb[0].mxu0
    %v1324 = vadd.f32 0.0, %v1323
    %v1325 = vpop.f32.mrb[0].mxu0
    %1326 = vdwg.mxu0
    %1327 = vrot.lane.b32.xlu0 %v229, 64
    %v1328 = vpop.permute.xlu0 %1327
    %v1331 = vsel %vm236, %v944, 0
    %1333 = vmatprep.subr.mxu0 0.0
    %1334 = vmatpush1.msra.mxu0 %v1328
    %1335 = vmatprep.subr.mxu0 0.0
    %1336 = vmatpush1.msra.mxu0 0.0
    %1337 = vmatprep.subr.mxu0 0.0
    %1338 = vmatpush1.msra.mxu0 0.0
    %1339 = vmatprep.subr.mxu0 0.0
    %1340 = vmatpush1.msra.mxu0 0.0
    %1341 = vmatprep.subr.mxu0 0.0
    %1342 = vmatpush1.msra.mxu0 0.0
    %1343 = vmatprep.subr.mxu0 0.0
    %1344 = vmatpush1.msra.mxu0 0.0
    %1345 = vmatprep.subr.mxu0 0.0
    %1346 = vmatpush1.msra.mxu0 0.0
    %1347 = vmatprep.subr.mxu0 0.0
    %1348 = vmatpush1.msra.mxu0 0.0
    %1349 = vmatprep.subr.mxu0 0.0
    %1350 = vmatpush1.msra.mxu0 0.0
    %1351 = vmatprep.subr.mxu0 0.0
    %1352 = vmatpush1.msra.mxu0 0.0
    %1353 = vmatprep.subr.mxu0 0.0
    %1354 = vmatpush1.msra.mxu0 0.0
    %1355 = vmatprep.subr.mxu0 0.0
    %1356 = vmatpush1.msra.mxu0 0.0
    %1357 = vmatprep.subr.mxu0 0.0
    %1358 = vmatpush1.msra.mxu0 0.0
    %1359 = vmatprep.subr.mxu0 0.0
    %1360 = vmatpush1.msra.mxu0 0.0
    %1361 = vmatprep.subr.mxu0 0.0
    %1362 = vmatpush1.msra.mxu0 0.0
    %1363 = vmatprep.subr.mxu0 0.0
    %1364 = vmatpush1.msra.mxu0 0.0
    %1365 = vmatprep.subr.mxu0 0.0
    %1366 = vmatpush1.msra.mxu0 0.0
    %1367 = vmatprep.subr.mxu0 0.0
    %1368 = vmatpush1.msra.mxu0 0.0
    %1369 = vmatprep.subr.mxu0 0.0
    %1370 = vmatpush1.msra.mxu0 0.0
    %1371 = vmatprep.subr.mxu0 0.0
    %1372 = vmatpush1.msra.mxu0 0.0
    %1373 = vmatprep.subr.mxu0 0.0
    %1374 = vmatpush1.msra.mxu0 0.0
    %1375 = vmatprep.subr.mxu0 0.0
    %1376 = vmatpush1.msra.mxu0 0.0
    %1377 = vmatprep.subr.mxu0 0.0
    %1378 = vmatpush1.msra.mxu0 0.0
    %1379 = vmatprep.subr.mxu0 0.0
    %1380 = vmatpush1.msra.mxu0 0.0
    %1381 = vmatprep.subr.mxu0 0.0
    %1382 = vmatpush1.msra.mxu0 0.0
    %1383 = vmatprep.subr.mxu0 0.0
    %1384 = vmatpush1.msra.mxu0 0.0
    %1385 = vmatprep.subr.mxu0 0.0
    %1386 = vmatpush1.msra.mxu0 0.0
    %1387 = vmatprep.subr.mxu0 0.0
    %1388 = vmatpush1.msra.mxu0 0.0
    %1389 = vmatprep.subr.mxu0 0.0
    %1390 = vmatpush1.msra.mxu0 0.0
    %1391 = vmatprep.subr.mxu0 0.0
    %1392 = vmatpush1.msra.mxu0 0.0
    %1393 = vmatprep.subr.mxu0 0.0
    %1394 = vmatpush1.msra.mxu0 0.0
    %1395 = vmatprep.subr.mxu0 0.0
    %1396 = vmatpush1.msra.mxu0 0.0
    %1397 = vmatprep.mubr.f32.mxu0 0.0
    %1398 = vmatmul.mubr.f32.gmra.mrb[0].mxu0 %v1331
    %v1399 = vpop.f32.mrb[0].mxu0
    %v1400 = vadd.f32 0.0, %v1399
    %v1401 = vpop.f32.mrb[0].mxu0
    %1402 = vdwg.mxu0
    %1403 = vrot.lane.b32.xlu0 %v231, 64
    %v1404 = vpop.permute.xlu0 %1403
    %v1407 = vsel %vm236, %v945, 0
    %1409 = vmatprep.subr.mxu0 0.0
    %1410 = vmatpush1.msra.mxu0 %v1404
    %1411 = vmatprep.subr.mxu0 0.0
    %1412 = vmatpush1.msra.mxu0 0.0
    %1413 = vmatprep.subr.mxu0 0.0
    %1414 = vmatpush1.msra.mxu0 0.0
    %1415 = vmatprep.subr.mxu0 0.0
    %1416 = vmatpush1.msra.mxu0 0.0
    %1417 = vmatprep.subr.mxu0 0.0
    %1418 = vmatpush1.msra.mxu0 0.0
    %1419 = vmatprep.subr.mxu0 0.0
    %1420 = vmatpush1.msra.mxu0 0.0
    %1421 = vmatprep.subr.mxu0 0.0
    %1422 = vmatpush1.msra.mxu0 0.0
    %1423 = vmatprep.subr.mxu0 0.0
    %1424 = vmatpush1.msra.mxu0 0.0
    %1425 = vmatprep.subr.mxu0 0.0
    %1426 = vmatpush1.msra.mxu0 0.0
    %1427 = vmatprep.subr.mxu0 0.0
    %1428 = vmatpush1.msra.mxu0 0.0
    %1429 = vmatprep.subr.mxu0 0.0
    %1430 = vmatpush1.msra.mxu0 0.0
    %1431 = vmatprep.subr.mxu0 0.0
    %1432 = vmatpush1.msra.mxu0 0.0
    %1433 = vmatprep.subr.mxu0 0.0
    %1434 = vmatpush1.msra.mxu0 0.0
    %1435 = vmatprep.subr.mxu0 0.0
    %1436 = vmatpush1.msra.mxu0 0.0
    %1437 = vmatprep.subr.mxu0 0.0
    %1438 = vmatpush1.msra.mxu0 0.0
    %1439 = vmatprep.subr.mxu0 0.0
    %1440 = vmatpush1.msra.mxu0 0.0
    %1441 = vmatprep.subr.mxu0 0.0
    %1442 = vmatpush1.msra.mxu0 0.0
    %1443 = vmatprep.subr.mxu0 0.0
    %1444 = vmatpush1.msra.mxu0 0.0
    %1445 = vmatprep.subr.mxu0 0.0
    %1446 = vmatpush1.msra.mxu0 0.0
    %1447 = vmatprep.subr.mxu0 0.0
    %1448 = vmatpush1.msra.mxu0 0.0
    %1449 = vmatprep.subr.mxu0 0.0
    %1450 = vmatpush1.msra.mxu0 0.0
    %1451 = vmatprep.subr.mxu0 0.0
    %1452 = vmatpush1.msra.mxu0 0.0
    %1453 = vmatprep.subr.mxu0 0.0
    %1454 = vmatpush1.msra.mxu0 0.0
    %1455 = vmatprep.subr.mxu0 0.0
    %1456 = vmatpush1.msra.mxu0 0.0
    %1457 = vmatprep.subr.mxu0 0.0
    %1458 = vmatpush1.msra.mxu0 0.0
    %1459 = vmatprep.subr.mxu0 0.0
    %1460 = vmatpush1.msra.mxu0 0.0
    %1461 = vmatprep.subr.mxu0 0.0
    %1462 = vmatpush1.msra.mxu0 0.0
    %1463 = vmatprep.subr.mxu0 0.0
    %1464 = vmatpush1.msra.mxu0 0.0
    %1465 = vmatprep.subr.mxu0 0.0
    %1466 = vmatpush1.msra.mxu0 0.0
    %1467 = vmatprep.subr.mxu0 0.0
    %1468 = vmatpush1.msra.mxu0 0.0
    %1469 = vmatprep.subr.mxu0 0.0
    %1470 = vmatpush1.msra.mxu0 0.0
    %1471 = vmatprep.subr.mxu0 0.0
    %1472 = vmatpush1.msra.mxu0 0.0
    %1473 = vmatprep.mubr.f32.mxu0 0.0
    %1474 = vmatmul.mubr.f32.gmra.mrb[0].mxu0 %v1407
    %v1475 = vpop.f32.mrb[0].mxu0
    %v1476 = vadd.f32 0.0, %v1475
    %v1477 = vpop.f32.mrb[0].mxu0
    %1478 = vdwg.mxu0
    %1479 = vrot.lane.b32.xlu0 %v233, 64
    %v1480 = vpop.permute.xlu0 %1479
    %v1483 = vsel %vm236, %v946, 0
    %1485 = vmatprep.subr.mxu0 0.0
    %1486 = vmatpush1.msra.mxu0 %v1480
    %1487 = vmatprep.subr.mxu0 0.0
    %1488 = vmatpush1.msra.mxu0 0.0
    %1489 = vmatprep.subr.mxu0 0.0
    %1490 = vmatpush1.msra.mxu0 0.0
    %1491 = vmatprep.subr.mxu0 0.0
    %1492 = vmatpush1.msra.mxu0 0.0
    %1493 = vmatprep.subr.mxu0 0.0
    %1494 = vmatpush1.msra.mxu0 0.0
    %1495 = vmatprep.subr.mxu0 0.0
    %1496 = vmatpush1.msra.mxu0 0.0
    %1497 = vmatprep.subr.mxu0 0.0
    %1498 = vmatpush1.msra.mxu0 0.0
    %1499 = vmatprep.subr.mxu0 0.0
    %1500 = vmatpush1.msra.mxu0 0.0
    %1501 = vmatprep.subr.mxu0 0.0
    %1502 = vmatpush1.msra.mxu0 0.0
    %1503 = vmatprep.subr.mxu0 0.0
    %1504 = vmatpush1.msra.mxu0 0.0
    %1505 = vmatprep.subr.mxu0 0.0
    %1506 = vmatpush1.msra.mxu0 0.0
    %1507 = vmatprep.subr.mxu0 0.0
    %1508 = vmatpush1.msra.mxu0 0.0
    %1509 = vmatprep.subr.mxu0 0.0
    %1510 = vmatpush1.msra.mxu0 0.0
    %1511 = vmatprep.subr.mxu0 0.0
    %1512 = vmatpush1.msra.mxu0 0.0
    %1513 = vmatprep.subr.mxu0 0.0
    %1514 = vmatpush1.msra.mxu0 0.0
    %1515 = vmatprep.subr.mxu0 0.0
    %1516 = vmatpush1.msra.mxu0 0.0
    %1517 = vmatprep.subr.mxu0 0.0
    %1518 = vmatpush1.msra.mxu0 0.0
    %1519 = vmatprep.subr.mxu0 0.0
    %1520 = vmatpush1.msra.mxu0 0.0
    %1521 = vmatprep.subr.mxu0 0.0
    %1522 = vmatpush1.msra.mxu0 0.0
    %1523 = vmatprep.subr.mxu0 0.0
    %1524 = vmatpush1.msra.mxu0 0.0
    %1525 = vmatprep.subr.mxu0 0.0
    %1526 = vmatpush1.msra.mxu0 0.0
    %1527 = vmatprep.subr.mxu0 0.0
    %1528 = vmatpush1.msra.mxu0 0.0
    %1529 = vmatprep.subr.mxu0 0.0
    %1530 = vmatpush1.msra.mxu0 0.0
    %1531 = vmatprep.subr.mxu0 0.0
    %1532 = vmatpush1.msra.mxu0 0.0
    %1533 = vmatprep.subr.mxu0 0.0
    %1534 = vmatpush1.msra.mxu0 0.0
    %1535 = vmatprep.subr.mxu0 0.0
    %1536 = vmatpush1.msra.mxu0 0.0
    %1537 = vmatprep.subr.mxu0 0.0
    %1538 = vmatpush1.msra.mxu0 0.0
    %1539 = vmatprep.subr.mxu0 0.0
    %1540 = vmatpush1.msra.mxu0 0.0
    %1541 = vmatprep.subr.mxu0 0.0
    %1542 = vmatpush1.msra.mxu0 0.0
    %1543 = vmatprep.subr.mxu0 0.0
    %1544 = vmatpush1.msra.mxu0 0.0
    %1545 = vmatprep.subr.mxu0 0.0
    %1546 = vmatpush1.msra.mxu0 0.0
    %1547 = vmatprep.subr.mxu0 0.0
    %1548 = vmatpush1.msra.mxu0 0.0
    %1549 = vmatprep.mubr.f32.mxu0 0.0
    %1550 = vmatmul.mubr.f32.gmra.mrb[0].mxu0 %v1483
    %v1551 = vpop.f32.mrb[0].mxu0
    %v1552 = vadd.f32 0.0, %v1551
    %v1553 = vpop.f32.mrb[0].mxu0
    %1554 = vdwg.mxu0
    %1557 = vrot.lane.b32.xlu0 %v1172, 8
    %v1558 = vpop.permute.xlu0 %1557
    %1559 = vrot.lane.b32.xlu0 %v1248, 8
    %v1560 = vpop.permute.xlu0 %1559
    %1565 = vrot.lane.b32.xlu0 %v1324, 16
    %v1566 = vpop.permute.xlu0 %1565
    %1567 = vrot.lane.b32.xlu0 %v1400, 16
    %v1568 = vpop.permute.xlu0 %1567
    %1573 = vrot.lane.b32.xlu0 %v1476, 24
    %v1574 = vpop.permute.xlu0 %1573
    %1575 = vrot.lane.b32.xlu0 %v1552, 24
    %v1576 = vpop.permute.xlu0 %1575
    %v1579 = vsel %vm236, %v1020, %v1558
    %v1580 = vsel %vm236, %v1096, %v1560
    %vm1581 = vcmask 130048
    %v1582 = vsel %vm1581, %v1579, %v1566
    %v1583 = vsel %vm1581, %v1580, %v1568
    %vm1584 = vcmask 195584
    %v1585 = vsel %vm1584, %v1582, %v1574
    %v1586 = vsel %vm1584, %v1583, %v1576
    %v1587 = vld [vmem:[%s5] sm:$0xff]
    %v1588 = vld [vmem:[%s5 + $0x8] sm:$0xff]
    %v1589 = vld [vmem:[%s5 + $0x10] sm:$0xff]
    %v1590 = vld [vmem:[%s5 + $0x18] sm:$0xff]
    %v1592 = vsel %vm88, %v1585, 0
    %v1595 = vsel %vm88, %v1586, 0
    %1597 = vmatprep.subr.mxu0 0.0
    %1598 = vmatpush1.msra.mxu0 %v1587
    %1599 = vmatprep.subr.mxu0 0.0
    %1600 = vmatpush1.msra.mxu0 %v1588
    %1601 = vmatprep.subr.mxu0 0.0
    %1602 = vmatpush1.msra.mxu0 %v1589
    %1603 = vmatprep.subr.mxu0 0.0
    %1604 = vmatpush1.msra.mxu0 %v1590
    %1605 = vmatprep.subr.mxu0 0.0
    %1606 = vmatpush1.msra.mxu0 0.0
    %1607 = vmatprep.subr.mxu0 0.0
    %1608 = vmatpush1.msra.mxu0 0.0
    %1609 = vmatprep.subr.mxu0 0.0
    %1610 = vmatpush1.msra.mxu0 0.0
    %1611 = vmatprep.subr.mxu0 0.0
    %1612 = vmatpush1.msra.mxu0 0.0
    %1613 = vmatprep.subr.mxu0 0.0
    %1614 = vmatpush1.msra.mxu0 0.0
    %1615 = vmatprep.subr.mxu0 0.0
    %1616 = vmatpush1.msra.mxu0 0.0
    %1617 = vmatprep.subr.mxu0 0.0
    %1618 = vmatpush1.msra.mxu0 0.0
    %1619 = vmatprep.subr.mxu0 0.0
    %1620 = vmatpush1.msra.mxu0 0.0
    %1621 = vmatprep.subr.mxu0 0.0
    %1622 = vmatpush1.msra.mxu0 0.0
    %1623 = vmatprep.subr.mxu0 0.0
    %1624 = vmatpush1.msra.mxu0 0.0
    %1625 = vmatprep.subr.mxu0 0.0
    %1626 = vmatpush1.msra.mxu0 0.0
    %1627 = vmatprep.subr.mxu0 0.0
    %1628 = vmatpush1.msra.mxu0 0.0
    %1629 = vmatprep.subr.mxu0 0.0
    %1630 = vmatpush1.msra.mxu0 0.0
    %1631 = vmatprep.subr.mxu0 0.0
    %1632 = vmatpush1.msra.mxu0 0.0
    %1633 = vmatprep.subr.mxu0 0.0
    %1634 = vmatpush1.msra.mxu0 0.0
    %1635 = vmatprep.subr.mxu0 0.0
    %1636 = vmatpush1.msra.mxu0 0.0
    %1637 = vmatprep.subr.mxu0 0.0
    %1638 = vmatpush1.msra.mxu0 0.0
    %1639 = vmatprep.subr.mxu0 0.0
    %1640 = vmatpush1.msra.mxu0 0.0
    %1641 = vmatprep.subr.mxu0 0.0
    %1642 = vmatpush1.msra.mxu0 0.0
    %1643 = vmatprep.subr.mxu0 0.0
    %1644 = vmatpush1.msra.mxu0 0.0
    %1645 = vmatprep.subr.mxu0 0.0
    %1646 = vmatpush1.msra.mxu0 0.0
    %1647 = vmatprep.subr.mxu0 0.0
    %1648 = vmatpush1.msra.mxu0 0.0
    %1649 = vmatprep.subr.mxu0 0.0
    %1650 = vmatpush1.msra.mxu0 0.0
    %1651 = vmatprep.subr.mxu0 0.0
    %1652 = vmatpush1.msra.mxu0 0.0
    %1653 = vmatprep.subr.mxu0 0.0
    %1654 = vmatpush1.msra.mxu0 0.0
    %1655 = vmatprep.subr.mxu0 0.0
    %1656 = vmatpush1.msra.mxu0 0.0
    %1657 = vmatprep.subr.mxu0 0.0
    %1658 = vmatpush1.msra.mxu0 0.0
    %1659 = vmatprep.subr.mxu0 0.0
    %1660 = vmatpush1.msra.mxu0 0.0
    %1661 = vmatprep.mubr.f32.mxu0 0.0
    %1662 = vmatmul.mubr.f32.gmra.mrb[0].mxu0 %v1592
    %v1663 = vpop.f32.mrb[0].mxu0
    %v1664 = vadd.f32 0.0, %v1663
    %v1665 = vpop.f32.mrb[0].mxu0
    %1666 = vmatprep.mubr.f32.mxu0 0.0
    %1667 = vmatmul.mubr.f32.gmra.mrb[0].mxu0 %v1595
    %v1668 = vpop.f32.mrb[0].mxu0
    %v1669 = vadd.f32 0.0, %v1668
    %v1670 = vpop.f32.mrb[0].mxu0
    %1671 = vdwg.mxu0
    %v1672 = vadd.f32 %v66, %v1664
    %v1673 = vadd.f32 %v67, %v1669
    %v1674 = vld [vmem:[%s6] sm:$0x1]
    %v1676 = vlaneseq
    %v1677 = vshrl.u32 %v1676, 7
    %v1678 = vsub.s32 0, %v1677
    %v1679 = vrot.slane %v1674, %v1678
    %v1681 = vadd.f32 %v1672, %v1679
    %v1682 = vadd.f32 %v1673, %v1679
    %v1683 = vld [vmem:[#allocation4 + $0x2] sm:$0x1]
    %v1684 = vld [vmem:[#allocation4 + $0x3] sm:$0x1]
    %v1685 = vsel %vm88, %v1681, 0.0
    %1686 = vadd.xlane.f32.xlu0 %v1685
    %v1687 = vpop.xlane.xlu0 %1686
    %v1688 = vsel %vm88, %v1682, 0.0
    %1689 = vadd.xlane.f32.xlu0 %v1688
    %v1690 = vpop.xlane.xlu0 %1689
    %v1691 = vmul.f32 %v1687, %v95
    %v1692 = vmul.f32 %v1690, %v95
    %v1693 = vsub.f32 %v1681, %v1691
    %v1694 = vsub.f32 %v1682, %v1692
    %v1695 = vmul.f32 %v1693, %v1693
    %v1696 = vmul.f32 %v1694, %v1694
    %v1697 = vsel %vm88, %v1695, 0.0
    %1698 = vadd.xlane.f32.xlu0 %v1697
    %v1699 = vpop.xlane.xlu0 %1698
    %v1700 = vsel %vm88, %v1696, 0.0
    %1701 = vadd.xlane.f32.xlu0 %v1700
    %v1702 = vpop.xlane.xlu0 %1701
    %v1703 = vmul.f32 %v1699, %v95
    %v1704 = vmul.f32 %v1702, %v95
    %v1705 = vadd.f32 %v1703, 1e-06
    %v1706 = vadd.f32 %v1704, 1e-06
    %v1707 = vrsqrt.pop %v1705
    %v1708 = vrsqrt.pop %v1706
    %v1709 = vmul.f32 %v1693, %v1707
    %v1710 = vmul.f32 %v1694, %v1708
    %v1711 = vlaneseq
    %v1712 = vshrl.u32 %v1711, 7
    %v1713 = vsub.s32 0, %v1712
    %v1714 = vrot.slane %v1683, %v1713
    %v1715 = vmul.f32 %v1709, %v1714
    %v1716 = vmul.f32 %v1710, %v1714
    %v1717 = vlaneseq
    %v1718 = vshrl.u32 %v1717, 7
    %v1719 = vsub.s32 0, %v1718
    %v1720 = vrot.slane %v1684, %v1719
    %v1721 = vadd.f32 %v1715, %v1720
    %v1722 = vadd.f32 %v1716, %v1720
    %v1723 = vld [vmem:[%s7] sm:$0xff]
    %v1724 = vld [vmem:[%s7 + $0x8] sm:$0xff]
    %v1725 = vld [vmem:[%s7 + $0x10] sm:$0xff]
    %v1726 = vld [vmem:[%s7 + $0x18] sm:$0xff]
    %v1727 = vld [vmem:[%s8] sm:$0x1]
    %v1729 = vlaneseq
    %v1730 = vshrl.u32 %v1729, 7
    %v1731 = vsub.s32 0, %v1730
    %v1732 = vrot.slane %v1727, %v1731
    %v1735 = vsel %vm88, %v1721, 0
    %v1738 = vsel %vm88, %v1722, 0
    %1740 = vmatprep.subr.mxu0 0.0
    %1741 = vmatpush1.msra.mxu0 %v1723
    %1742 = vmatprep.subr.mxu0 0.0
    %1743 = vmatpush1.msra.mxu0 %v1724
    %1744 = vmatprep.subr.mxu0 0.0
    %1745 = vmatpush1.msra.mxu0 %v1725
    %1746 = vmatprep.subr.mxu0 0.0
    %1747 = vmatpush1.msra.mxu0 %v1726
    %1748 = vmatprep.subr.mxu0 0.0
    %1749 = vmatpush1.msra.mxu0 0.0
    %1750 = vmatprep.subr.mxu0 0.0
    %1751 = vmatpush1.msra.mxu0 0.0
    %1752 = vmatprep.subr.mxu0 0.0
    %1753 = vmatpush1.msra.mxu0 0.0
    %1754 = vmatprep.subr.mxu0 0.0
    %1755 = vmatpush1.msra.mxu0 0.0
    %1756 = vmatprep.subr.mxu0 0.0
    %1757 = vmatpush1.msra.mxu0 0.0
    %1758 = vmatprep.subr.mxu0 0.0
    %1759 = vmatpush1.msra.mxu0 0.0
    %1760 = vmatprep.subr.mxu0 0.0
    %1761 = vmatpush1.msra.mxu0 0.0
    %1762 = vmatprep.subr.mxu0 0.0
    %1763 = vmatpush1.msra.mxu0 0.0
    %1764 = vmatprep.subr.mxu0 0.0
    %1765 = vmatpush1.msra.mxu0 0.0
    %1766 = vmatprep.subr.mxu0 0.0
    %1767 = vmatpush1.msra.mxu0 0.0
    %1768 = vmatprep.subr.mxu0 0.0
    %1769 = vmatpush1.msra.mxu0 0.0
    %1770 = vmatprep.subr.mxu0 0.0
    %1771 = vmatpush1.msra.mxu0 0.0
    %1772 = vmatprep.subr.mxu0 0.0
    %1773 = vmatpush1.msra.mxu0 0.0
    %1774 = vmatprep.subr.mxu0 0.0
    %1775 = vmatpush1.msra.mxu0 0.0
    %1776 = vmatprep.subr.mxu0 0.0
    %1777 = vmatpush1.msra.mxu0 0.0
    %1778 = vmatprep.subr.mxu0 0.0
    %1779 = vmatpush1.msra.mxu0 0.0
    %1780 = vmatprep.subr.mxu0 0.0
    %1781 = vmatpush1.msra.mxu0 0.0
    %1782 = vmatprep.subr.mxu0 0.0
    %1783 = vmatpush1.msra.mxu0 0.0
    %1784 = vmatprep.subr.mxu0 0.0
    %1785 = vmatpush1.msra.mxu0 0.0
    %1786 = vmatprep.subr.mxu0 0.0
    %1787 = vmatpush1.msra.mxu0 0.0
    %1788 = vmatprep.subr.mxu0 0.0
    %1789 = vmatpush1.msra.mxu0 0.0
    %1790 = vmatprep.subr.mxu0 0.0
    %1791 = vmatpush1.msra.mxu0 0.0
    %1792 = vmatprep.subr.mxu0 0.0
    %1793 = vmatpush1.msra.mxu0 0.0
    %1794 = vmatprep.subr.mxu0 0.0
    %1795 = vmatpush1.msra.mxu0 0.0
    %1796 = vmatprep.subr.mxu0 0.0
    %1797 = vmatpush1.msra.mxu0 0.0
    %1798 = vmatprep.subr.mxu0 0.0
    %1799 = vmatpush1.msra.mxu0 0.0
    %1800 = vmatprep.subr.mxu0 0.0
    %1801 = vmatpush1.msra.mxu0 0.0
    %1802 = vmatprep.subr.mxu0 0.0
    %1803 = vmatpush1.msra.mxu0 0.0
    %1804 = vmatprep.mubr.f32.mxu0 0.0
    %1805 = vmatmul.mubr.f32.gmra.mrb[0].mxu0 %v1735
    %v1806 = vpop.f32.mrb[0].mxu0
    %v1807 = vadd.f32 %v1732, %v1806
    %v1808 = vpop.f32.mrb[0].mxu0
    %1809 = vmatprep.mubr.f32.mxu0 0.0
    %1810 = vmatmul.mubr.f32.gmra.mrb[0].mxu0 %v1738
    %v1811 = vpop.f32.mrb[0].mxu0
    %v1812 = vadd.f32 %v1732, %v1811
    %v1813 = vpop.f32.mrb[0].mxu0
    %1814 = vdwg.mxu0
    %v1815 = vmax.f32 %v1807, 0.0
    %v1816 = vmax.f32 %v1812, 0.0
    %v1817 = vld [vmem:[%s9] sm:$0xff]
    %v1818 = vld [vmem:[%s9 + $0x8] sm:$0xff]
    %v1819 = vld [vmem:[%s9 + $0x10] sm:$0xff]
    %v1820 = vld [vmem:[%s9 + $0x18] sm:$0xff]
    %v1821 = vld [vmem:[%s9 + $0x20] sm:$0xff]
    %v1822 = vld [vmem:[%s9 + $0x28] sm:$0xff]
    %v1823 = vld [vmem:[%s9 + $0x30] sm:$0xff]
    %v1824 = vld [vmem:[%s9 + $0x38] sm:$0xff]
    %vm1825 = vcmask 523264
    %v1827 = vsel %vm1825, %v1815, 0
    %v1830 = vsel %vm1825, %v1816, 0
    %1832 = vmatprep.subr.mxu0 0.0
    %1833 = vmatpush1.msra.mxu0 %v1817
    %1834 = vmatprep.subr.mxu0 0.0
    %1835 = vmatpush1.msra.mxu0 %v1818
    %1836 = vmatprep.subr.mxu0 0.0
    %1837 = vmatpush1.msra.mxu0 %v1819
    %1838 = vmatprep.subr.mxu0 0.0
    %1839 = vmatpush1.msra.mxu0 %v1820
    %1840 = vmatprep.subr.mxu0 0.0
    %1841 = vmatpush1.msra.mxu0 %v1821
    %1842 = vmatprep.subr.mxu0 0.0
    %1843 = vmatpush1.msra.mxu0 %v1822
    %1844 = vmatprep.subr.mxu0 0.0
    %1845 = vmatpush1.msra.mxu0 %v1823
    %1846 = vmatprep.subr.mxu0 0.0
    %1847 = vmatpush1.msra.mxu0 %v1824
    %1848 = vmatprep.subr.mxu0 0.0
    %1849 = vmatpush1.msra.mxu0 0.0
    %1850 = vmatprep.subr.mxu0 0.0
    %1851 = vmatpush1.msra.mxu0 0.0
    %1852 = vmatprep.subr.mxu0 0.0
    %1853 = vmatpush1.msra.mxu0 0.0
    %1854 = vmatprep.subr.mxu0 0.0
    %1855 = vmatpush1.msra.mxu0 0.0
    %1856 = vmatprep.subr.mxu0 0.0
    %1857 = vmatpush1.msra.mxu0 0.0
    %1858 = vmatprep.subr.mxu0 0.0
    %1859 = vmatpush1.msra.mxu0 0.0
    %1860 = vmatprep.subr.mxu0 0.0
    %1861 = vmatpush1.msra.mxu0 0.0
    %1862 = vmatprep.subr.mxu0 0.0
    %1863 = vmatpush1.msra.mxu0 0.0
    %1864 = vmatprep.subr.mxu0 0.0
    %1865 = vmatpush1.msra.mxu0 0.0
    %1866 = vmatprep.subr.mxu0 0.0
    %1867 = vmatpush1.msra.mxu0 0.0
    %1868 = vmatprep.subr.mxu0 0.0
    %1869 = vmatpush1.msra.mxu0 0.0
    %1870 = vmatprep.subr.mxu0 0.0
    %1871 = vmatpush1.msra.mxu0 0.0
    %1872 = vmatprep.subr.mxu0 0.0
    %1873 = vmatpush1.msra.mxu0 0.0
    %1874 = vmatprep.subr.mxu0 0.0
    %1875 = vmatpush1.msra.mxu0 0.0
    %1876 = vmatprep.subr.mxu0 0.0
    %1877 = vmatpush1.msra.mxu0 0.0
    %1878 = vmatprep.subr.mxu0 0.0
    %1879 = vmatpush1.msra.mxu0 0.0
    %1880 = vmatprep.subr.mxu0 0.0
    %1881 = vmatpush1.msra.mxu0 0.0
    %1882 = vmatprep.subr.mxu0 0.0
    %1883 = vmatpush1.msra.mxu0 0.0
    %1884 = vmatprep.subr.mxu0 0.0
    %1885 = vmatpush1.msra.mxu0 0.0
    %1886 = vmatprep.subr.mxu0 0.0
    %1887 = vmatpush1.msra.mxu0 0.0
    %1888 = vmatprep.subr.mxu0 0.0
    %1889 = vmatpush1.msra.mxu0 0.0
    %1890 = vmatprep.subr.mxu0 0.0
    %1891 = vmatpush1.msra.mxu0 0.0
    %1892 = vmatprep.subr.mxu0 0.0
    %1893 = vmatpush1.msra.mxu0 0.0
    %1894 = vmatprep.subr.mxu0 0.0
    %1895 = vmatpush1.msra.mxu0 0.0
    %1896 = vmatprep.mubr.f32.mxu0 0.0
    %1897 = vmatmul.mubr.f32.gmra.mrb[0].mxu0 %v1827
    %v1898 = vpop.f32.mrb[0].mxu0
    %v1899 = vadd.f32 0.0, %v1898
    %v1900 = vpop.f32.mrb[0].mxu0
    %1901 = vmatprep.mubr.f32.mxu0 0.0
    %1902 = vmatmul.mubr.f32.gmra.mrb[0].mxu0 %v1830
    %v1903 = vpop.f32.mrb[0].mxu0
    %v1904 = vadd.f32 0.0, %v1903
    %v1905 = vpop.f32.mrb[0].mxu0
    %1906 = vdwg.mxu0
    %v1907 = vadd.f32 %v1681, %v1899
    %v1908 = vadd.f32 %v1682, %v1904
    %v1909 = vld [vmem:[%s10] sm:$0x1]
    %v1911 = vlaneseq
    %v1912 = vshrl.u32 %v1911, 7
    %v1913 = vsub.s32 0, %v1912
    %v1914 = vrot.slane %v1909, %v1913
    %v1916 = vadd.f32 %v1907, %v1914
    %v1917 = vadd.f32 %v1908, %v1914
    %v1918 = vld [vmem:[#allocation4 + $0x4] sm:$0x1]
    %v1919 = vld [vmem:[#allocation4 + $0x5] sm:$0x1]
    %v1920 = vsel %vm88, %v1916, 0.0
    %1921 = vadd.xlane.f32.xlu0 %v1920
    %v1922 = vpop.xlane.xlu0 %1921
    %v1923 = vsel %vm88, %v1917, 0.0
    %1924 = vadd.xlane.f32.xlu0 %v1923
    %v1925 = vpop.xlane.xlu0 %1924
    %v1926 = vmul.f32 %v1922, %v95
    %v1927 = vmul.f32 %v1925, %v95
    %v1928 = vsub.f32 %v1916, %v1926
    %v1929 = vsub.f32 %v1917, %v1927
    %v1930 = vmul.f32 %v1928, %v1928
    %v1931 = vmul.f32 %v1929, %v1929
    %v1932 = vsel %vm88, %v1930, 0.0
    %1933 = vadd.xlane.f32.xlu0 %v1932
    %v1934 = vpop.xlane.xlu0 %1933
    %v1935 = vsel %vm88, %v1931, 0.0
    %1936 = vadd.xlane.f32.xlu0 %v1935
    %v1937 = vpop.xlane.xlu0 %1936
    %v1938 = vmul.f32 %v1934, %v95
    %v1939 = vmul.f32 %v1937, %v95
    %v1940 = vadd.f32 %v1938, 1e-06
    %v1941 = vadd.f32 %v1939, 1e-06
    %v1942 = vrsqrt.pop %v1940
    %v1943 = vrsqrt.pop %v1941
    %v1944 = vmul.f32 %v1928, %v1942
    %v1945 = vmul.f32 %v1929, %v1943
    %v1946 = vlaneseq
    %v1947 = vshrl.u32 %v1946, 7
    %v1948 = vsub.s32 0, %v1947
    %v1949 = vrot.slane %v1918, %v1948
    %v1950 = vmul.f32 %v1944, %v1949
    %v1951 = vmul.f32 %v1945, %v1949
    %v1952 = vlaneseq
    %v1953 = vshrl.u32 %v1952, 7
    %v1954 = vsub.s32 0, %v1953
    %v1955 = vrot.slane %v1919, %v1954
    %v1956 = vadd.f32 %v1950, %v1955
    %v1957 = vadd.f32 %v1951, %v1955
    %s1958 = scalar_lea.vmem %s3, 32
    %v1959 = vld [vmem:[%s1958] sm:$0xff]
    %v1960 = vld [vmem:[%s1958 + $0x8] sm:$0xff]
    %v1961 = vld [vmem:[%s1958 + $0x10] sm:$0xff]
    %v1962 = vld [vmem:[%s1958 + $0x18] sm:$0xff]
    %s1963 = scalar_lea.vmem %s4, 1
    %v1964 = vld [vmem:[%s1963] sm:$0x1]
    %v1966 = vlaneseq
    %v1967 = vshrl.u32 %v1966, 7
    %v1968 = vsub.s32 0, %v1967
    %v1969 = vrot.slane %v1964, %v1968
    %v1972 = vsel %vm88, %v1956, 0
    %v1975 = vsel %vm88, %v1957, 0
    %1977 = vmatprep.subr.mxu0 0.0
    %1978 = vmatpush1.msra.mxu0 %v1959
    %1979 = vmatprep.subr.mxu0 0.0
    %1980 = vmatpush1.msra.mxu0 %v1960
    %1981 = vmatprep.subr.mxu0 0.0
    %1982 = vmatpush1.msra.mxu0 %v1961
    %1983 = vmatprep.subr.mxu0 0.0
    %1984 = vmatpush1.msra.mxu0 %v1962
    %1985 = vmatprep.subr.mxu0 0.0
    %1986 = vmatpush1.msra.mxu0 0.0
    %1987 = vmatprep.subr.mxu0 0.0
    %1988 = vmatpush1.msra.mxu0 0.0
    %1989 = vmatprep.subr.mxu0 0.0
    %1990 = vmatpush1.msra.mxu0 0.0
    %1991 = vmatprep.subr.mxu0 0.0
    %1992 = vmatpush1.msra.mxu0 0.0
    %1993 = vmatprep.subr.mxu0 0.0
    %1994 = vmatpush1.msra.mxu0 0.0
    %1995 = vmatprep.subr.mxu0 0.0
    %1996 = vmatpush1.msra.mxu0 0.0
    %1997 = vmatprep.subr.mxu0 0.0
    %1998 = vmatpush1.msra.mxu0 0.0
    %1999 = vmatprep.subr.mxu0 0.0
    %2000 = vmatpush1.msra.mxu0 0.0
    %2001 = vmatprep.subr.mxu0 0.0
    %2002 = vmatpush1.msra.mxu0 0.0
    %2003 = vmatprep.subr.mxu0 0.0
    %2004 = vmatpush1.msra.mxu0 0.0
    %2005 = vmatprep.subr.mxu0 0.0
    %2006 = vmatpush1.msra.mxu0 0.0
    %2007 = vmatprep.subr.mxu0 0.0
    %2008 = vmatpush1.msra.mxu0 0.0
    %2009 = vmatprep.subr.mxu0 0.0
    %2010 = vmatpush1.msra.mxu0 0.0
    %2011 = vmatprep.subr.mxu0 0.0
    %2012 = vmatpush1.msra.mxu0 0.0
    %2013 = vmatprep.subr.mxu0 0.0
    %2014 = vmatpush1.msra.mxu0 0.0
    %2015 = vmatprep.subr.mxu0 0.0
    %2016 = vmatpush1.msra.mxu0 0.0
    %2017 = vmatprep.subr.mxu0 0.0
    %2018 = vmatpush1.msra.mxu0 0.0
    %2019 = vmatprep.subr.mxu0 0.0
    %2020 = vmatpush1.msra.mxu0 0.0
    %2021 = vmatprep.subr.mxu0 0.0
    %2022 = vmatpush1.msra.mxu0 0.0
    %2023 = vmatprep.subr.mxu0 0.0
    %2024 = vmatpush1.msra.mxu0 0.0
    %2025 = vmatprep.subr.mxu0 0.0
    %2026 = vmatpush1.msra.mxu0 0.0
    %2027 = vmatprep.subr.mxu0 0.0
    %2028 = vmatpush1.msra.mxu0 0.0
    %2029 = vmatprep.subr.mxu0 0.0
    %2030 = vmatpush1.msra.mxu0 0.0
    %2031 = vmatprep.subr.mxu0 0.0
    %2032 = vmatpush1.msra.mxu0 0.0
    %2033 = vmatprep.subr.mxu0 0.0
    %2034 = vmatpush1.msra.mxu0 0.0
    %2035 = vmatprep.subr.mxu0 0.0
    %2036 = vmatpush1.msra.mxu0 0.0
    %2037 = vmatprep.subr.mxu0 0.0
    %2038 = vmatpush1.msra.mxu0 0.0
    %2039 = vmatprep.subr.mxu0 0.0
    %2040 = vmatpush1.msra.mxu0 0.0
    %2041 = vmatprep.mubr.f32.mxu0 0.0
    %2042 = vmatmul.mubr.f32.gmra.mrb[0].mxu0 %v1972
    %v2043 = vpop.f32.mrb[0].mxu0
    %v2044 = vadd.f32 %v1969, %v2043
    %v2045 = vpop.f32.mrb[0].mxu0
    %2046 = vmatprep.mubr.f32.mxu0 0.0
    %2047 = vmatmul.mubr.f32.gmra.mrb[0].mxu0 %v1975
    %v2048 = vpop.f32.mrb[0].mxu0
    %v2049 = vadd.f32 %v1969, %v2048
    %v2050 = vpop.f32.mrb[0].mxu0
    %2051 = vdwg.mxu0
    %2054 = vrot.lane.b32.xlu0 %v2044, 120
    %v2055 = vpop.permute.xlu0 %2054
    %2056 = vrot.lane.b32.xlu0 %v2049, 120
    %v2057 = vpop.permute.xlu0 %2056
    %2058 = vrot.lane.b32.xlu0 %v2044, 112
    %v2059 = vpop.permute.xlu0 %2058
    %2060 = vrot.lane.b32.xlu0 %v2049, 112
    %v2061 = vpop.permute.xlu0 %2060
    %2062 = vrot.lane.b32.xlu0 %v2044, 104
    %v2063 = vpop.permute.xlu0 %2062
    %2064 = vrot.lane.b32.xlu0 %v2049, 104
    %v2065 = vpop.permute.xlu0 %2064
    %2066 = vrot.lane.b32.xlu0 %v2044, 96
    %v2067 = vpop.permute.xlu0 %2066
    %v2068 = vsel %vm236, %v2044, 0
    %v2070 = vsel %vm236, %v2067, 0
    %2072 = vmatprep.subr.mxu0 0.0
    %2073 = vmatpush1.xpose.msra.mxu0 %v2070
    %2074 = vmatprep.subr.mxu0 0.0
    %2075 = vmatpush1.xpose.msra.mxu0 0.0
    %2076 = vmatprep.subr.mxu0 0.0
    %2077 = vmatpush1.xpose.msra.mxu0 0.0
    %2078 = vmatprep.subr.mxu0 0.0
    %2079 = vmatpush1.xpose.msra.mxu0 0.0
    %2080 = vmatprep.subr.mxu0 0.0
    %2081 = vmatpush1.xpose.msra.mxu0 0.0
    %2082 = vmatprep.subr.mxu0 0.0
    %2083 = vmatpush1.xpose.msra.mxu0 0.0
    %2084 = vmatprep.subr.mxu0 0.0
    %2085 = vmatpush1.xpose.msra.mxu0 0.0
    %2086 = vmatprep.subr.mxu0 0.0
    %2087 = vmatpush1.xpose.msra.mxu0 0.0
    %2088 = vmatprep.subr.mxu0 0.0
    %2089 = vmatpush1.xpose.msra.mxu0 0.0
    %2090 = vmatprep.subr.mxu0 0.0
    %2091 = vmatpush1.xpose.msra.mxu0 0.0
    %2092 = vmatprep.subr.mxu0 0.0
    %2093 = vmatpush1.xpose.msra.mxu0 0.0
    %2094 = vmatprep.subr.mxu0 0.0
    %2095 = vmatpush1.xpose.msra.mxu0 0.0
    %2096 = vmatprep.subr.mxu0 0.0
    %2097 = vmatpush1.xpose.msra.mxu0 0.0
    %2098 = vmatprep.subr.mxu0 0.0
    %2099 = vmatpush1.xpose.msra.mxu0 0.0
    %2100 = vmatprep.subr.mxu0 0.0
    %2101 = vmatpush1.xpose.msra.mxu0 0.0
    %2102 = vmatprep.subr.mxu0 0.0
    %2103 = vmatpush1.xpose.msra.mxu0 0.0
    %2104 = vmatprep.subr.mxu0 0.0
    %2105 = vmatpush1.xpose.msra.mxu0 0.0
    %2106 = vmatprep.subr.mxu0 0.0
    %2107 = vmatpush1.xpose.msra.mxu0 0.0
    %2108 = vmatprep.subr.mxu0 0.0
    %2109 = vmatpush1.xpose.msra.mxu0 0.0
    %2110 = vmatprep.subr.mxu0 0.0
    %2111 = vmatpush1.xpose.msra.mxu0 0.0
    %2112 = vmatprep.subr.mxu0 0.0
    %2113 = vmatpush1.xpose.msra.mxu0 0.0
    %2114 = vmatprep.subr.mxu0 0.0
    %2115 = vmatpush1.xpose.msra.mxu0 0.0
    %2116 = vmatprep.subr.mxu0 0.0
    %2117 = vmatpush1.xpose.msra.mxu0 0.0
    %2118 = vmatprep.subr.mxu0 0.0
    %2119 = vmatpush1.xpose.msra.mxu0 0.0
    %2120 = vmatprep.subr.mxu0 0.0
    %2121 = vmatpush1.xpose.msra.mxu0 0.0
    %2122 = vmatprep.subr.mxu0 0.0
    %2123 = vmatpush1.xpose.msra.mxu0 0.0
    %2124 = vmatprep.subr.mxu0 0.0
    %2125 = vmatpush1.xpose.msra.mxu0 0.0
    %2126 = vmatprep.subr.mxu0 0.0
    %2127 = vmatpush1.xpose.msra.mxu0 0.0
    %2128 = vmatprep.subr.mxu0 0.0
    %2129 = vmatpush1.xpose.msra.mxu0 0.0
    %2130 = vmatprep.subr.mxu0 0.0
    %2131 = vmatpush1.xpose.msra.mxu0 0.0
    %2132 = vmatprep.subr.mxu0 0.0
    %2133 = vmatpush1.xpose.msra.mxu0 0.0
    %2134 = vmatprep.subr.mxu0 0.0
    %2135 = vmatpush1.xpose.msra.mxu0 0.0
    %2136 = vmatprep.mubr.f32.mxu0 0.0
    %2137 = vmatmul.mubr.f32.gmra.mrb[0].mxu0 %v2068
    %v2138 = vpop.f32.mrb[0].mxu0
    %v2139 = vadd.f32 0.0, %v2138
    %v2140 = vpop.f32.mrb[0].mxu0
    %2141 = vdwg.mxu0
    %2142 = vrot.lane.b32.xlu0 %v2049, 96
    %v2143 = vpop.permute.xlu0 %2142
    %v2144 = vsel %vm236, %v2049, 0
    %v2146 = vsel %vm236, %v2143, 0
    %2148 = vmatprep.subr.mxu0 0.0
    %2149 = vmatpush1.xpose.msra.mxu0 %v2146
    %2150 = vmatprep.subr.mxu0 0.0
    %2151 = vmatpush1.xpose.msra.mxu0 0.0
    %2152 = vmatprep.subr.mxu0 0.0
    %2153 = vmatpush1.xpose.msra.mxu0 0.0
    %2154 = vmatprep.subr.mxu0 0.0
    %2155 = vmatpush1.xpose.msra.mxu0 0.0
    %2156 = vmatprep.subr.mxu0 0.0
    %2157 = vmatpush1.xpose.msra.mxu0 0.0
    %2158 = vmatprep.subr.mxu0 0.0
    %2159 = vmatpush1.xpose.msra.mxu0 0.0
    %2160 = vmatprep.subr.mxu0 0.0
    %2161 = vmatpush1.xpose.msra.mxu0 0.0
    %2162 = vmatprep.subr.mxu0 0.0
    %2163 = vmatpush1.xpose.msra.mxu0 0.0
    %2164 = vmatprep.subr.mxu0 0.0
    %2165 = vmatpush1.xpose.msra.mxu0 0.0
    %2166 = vmatprep.subr.mxu0 0.0
    %2167 = vmatpush1.xpose.msra.mxu0 0.0
    %2168 = vmatprep.subr.mxu0 0.0
    %2169 = vmatpush1.xpose.msra.mxu0 0.0
    %2170 = vmatprep.subr.mxu0 0.0
    %2171 = vmatpush1.xpose.msra.mxu0 0.0
    %2172 = vmatprep.subr.mxu0 0.0
    %2173 = vmatpush1.xpose.msra.mxu0 0.0
    %2174 = vmatprep.subr.mxu0 0.0
    %2175 = vmatpush1.xpose.msra.mxu0 0.0
    %2176 = vmatprep.subr.mxu0 0.0
    %2177 = vmatpush1.xpose.msra.mxu0 0.0
    %2178 = vmatprep.subr.mxu0 0.0
    %2179 = vmatpush1.xpose.msra.mxu0 0.0
    %2180 = vmatprep.subr.mxu0 0.0
    %2181 = vmatpush1.xpose.msra.mxu0 0.0
    %2182 = vmatprep.subr.mxu0 0.0
    %2183 = vmatpush1.xpose.msra.mxu0 0.0
    %2184 = vmatprep.subr.mxu0 0.0
    %2185 = vmatpush1.xpose.msra.mxu0 0.0
    %2186 = vmatprep.subr.mxu0 0.0
    %2187 = vmatpush1.xpose.msra.mxu0 0.0
    %2188 = vmatprep.subr.mxu0 0.0
    %2189 = vmatpush1.xpose.msra.mxu0 0.0
    %2190 = vmatprep.subr.mxu0 0.0
    %2191 = vmatpush1.xpose.msra.mxu0 0.0
    %2192 = vmatprep.subr.mxu0 0.0
    %2193 = vmatpush1.xpose.msra.mxu0 0.0
    %2194 = vmatprep.subr.mxu0 0.0
    %2195 = vmatpush1.xpose.msra.mxu0 0.0
    %2196 = vmatprep.subr.mxu0 0.0
    %2197 = vmatpush1.xpose.msra.mxu0 0.0
    %2198 = vmatprep.subr.mxu0 0.0
    %2199 = vmatpush1.xpose.msra.mxu0 0.0
    %2200 = vmatprep.subr.mxu0 0.0
    %2201 = vmatpush1.xpose.msra.mxu0 0.0
    %2202 = vmatprep.subr.mxu0 0.0
    %2203 = vmatpush1.xpose.msra.mxu0 0.0
    %2204 = vmatprep.subr.mxu0 0.0
    %2205 = vmatpush1.xpose.msra.mxu0 0.0
    %2206 = vmatprep.subr.mxu0 0.0
    %2207 = vmatpush1.xpose.msra.mxu0 0.0
    %2208 = vmatprep.subr.mxu0 0.0
    %2209 = vmatpush1.xpose.msra.mxu0 0.0
    %2210 = vmatprep.subr.mxu0 0.0
    %2211 = vmatpush1.xpose.msra.mxu0 0.0
    %2212 = vmatprep.mubr.f32.mxu0 0.0
    %2213 = vmatmul.mubr.f32.gmra.mrb[0].mxu0 %v2144
    %v2214 = vpop.f32.mrb[0].mxu0
    %v2215 = vadd.f32 0.0, %v2214
    %v2216 = vpop.f32.mrb[0].mxu0
    %2217 = vdwg.mxu0
    %2218 = vrot.lane.b32.xlu0 %v2055, 96
    %v2219 = vpop.permute.xlu0 %2218
    %v2220 = vsel %vm236, %v2055, 0
    %v2222 = vsel %vm236, %v2219, 0
    %2224 = vmatprep.subr.mxu0 0.0
    %2225 = vmatpush1.xpose.msra.mxu0 %v2222
    %2226 = vmatprep.subr.mxu0 0.0
    %2227 = vmatpush1.xpose.msra.mxu0 0.0
    %2228 = vmatprep.subr.mxu0 0.0
    %2229 = vmatpush1.xpose.msra.mxu0 0.0
    %2230 = vmatprep.subr.mxu0 0.0
    %2231 = vmatpush1.xpose.msra.mxu0 0.0
    %2232 = vmatprep.subr.mxu0 0.0
    %2233 = vmatpush1.xpose.msra.mxu0 0.0
    %2234 = vmatprep.subr.mxu0 0.0
    %2235 = vmatpush1.xpose.msra.mxu0 0.0
    %2236 = vmatprep.subr.mxu0 0.0
    %2237 = vmatpush1.xpose.msra.mxu0 0.0
    %2238 = vmatprep.subr.mxu0 0.0
    %2239 = vmatpush1.xpose.msra.mxu0 0.0
    %2240 = vmatprep.subr.mxu0 0.0
    %2241 = vmatpush1.xpose.msra.mxu0 0.0
    %2242 = vmatprep.subr.mxu0 0.0
    %2243 = vmatpush1.xpose.msra.mxu0 0.0
    %2244 = vmatprep.subr.mxu0 0.0
    %2245 = vmatpush1.xpose.msra.mxu0 0.0
    %2246 = vmatprep.subr.mxu0 0.0
    %2247 = vmatpush1.xpose.msra.mxu0 0.0
    %2248 = vmatprep.subr.mxu0 0.0
    %2249 = vmatpush1.xpose.msra.mxu0 0.0
    %2250 = vmatprep.subr.mxu0 0.0
    %2251 = vmatpush1.xpose.msra.mxu0 0.0
    %2252 = vmatprep.subr.mxu0 0.0
    %2253 = vmatpush1.xpose.msra.mxu0 0.0
    %2254 = vmatprep.subr.mxu0 0.0
    %2255 = vmatpush1.xpose.msra.mxu0 0.0
    %2256 = vmatprep.subr.mxu0 0.0
    %2257 = vmatpush1.xpose.msra.mxu0 0.0
    %2258 = vmatprep.subr.mxu0 0.0
    %2259 = vmatpush1.xpose.msra.mxu0 0.0
    %2260 = vmatprep.subr.mxu0 0.0
    %2261 = vmatpush1.xpose.msra.mxu0 0.0
    %2262 = vmatprep.subr.mxu0 0.0
    %2263 = vmatpush1.xpose.msra.mxu0 0.0
    %2264 = vmatprep.subr.mxu0 0.0
    %2265 = vmatpush1.xpose.msra.mxu0 0.0
    %2266 = vmatprep.subr.mxu0 0.0
    %2267 = vmatpush1.xpose.msra.mxu0 0.0
    %2268 = vmatprep.subr.mxu0 0.0
    %2269 = vmatpush1.xpose.msra.mxu0 0.0
    %2270 = vmatprep.subr.mxu0 0.0
    %2271 = vmatpush1.xpose.msra.mxu0 0.0
    %2272 = vmatprep.subr.mxu0 0.0
    %2273 = vmatpush1.xpose.msra.mxu0 0.0
    %2274 = vmatprep.subr.mxu0 0.0
    %2275 = vmatpush1.xpose.msra.mxu0 0.0
    %2276 = vmatprep.subr.mxu0 0.0
    %2277 = vmatpush1.xpose.msra.mxu0 0.0
    %2278 = vmatprep.subr.mxu0 0.0
    %2279 = vmatpush1.xpose.msra.mxu0 0.0
    %2280 = vmatprep.subr.mxu0 0.0
    %2281 = vmatpush1.xpose.msra.mxu0 0.0
    %2282 = vmatprep.subr.mxu0 0.0
    %2283 = vmatpush1.xpose.msra.mxu0 0.0
    %2284 = vmatprep.subr.mxu0 0.0
    %2285 = vmatpush1.xpose.msra.mxu0 0.0
    %2286 = vmatprep.subr.mxu0 0.0
    %2287 = vmatpush1.xpose.msra.mxu0 0.0
    %2288 = vmatprep.mubr.f32.mxu0 0.0
    %2289 = vmatmul.mubr.f32.gmra.mrb[0].mxu0 %v2220
    %v2290 = vpop.f32.mrb[0].mxu0
    %v2291 = vadd.f32 0.0, %v2290
    %v2292 = vpop.f32.mrb[0].mxu0
    %2293 = vdwg.mxu0
    %2294 = vrot.lane.b32.xlu0 %v2057, 96
    %v2295 = vpop.permute.xlu0 %2294
    %v2296 = vsel %vm236, %v2057, 0
    %v2298 = vsel %vm236, %v2295, 0
    %2300 = vmatprep.subr.mxu0 0.0
    %2301 = vmatpush1.xpose.msra.mxu0 %v2298
    %2302 = vmatprep.subr.mxu0 0.0
    %2303 = vmatpush1.xpose.msra.mxu0 0.0
    %2304 = vmatprep.subr.mxu0 0.0
    %2305 = vmatpush1.xpose.msra.mxu0 0.0
    %2306 = vmatprep.subr.mxu0 0.0
    %2307 = vmatpush1.xpose.msra.mxu0 0.0
    %2308 = vmatprep.subr.mxu0 0.0
    %2309 = vmatpush1.xpose.msra.mxu0 0.0
    %2310 = vmatprep.subr.mxu0 0.0
    %2311 = vmatpush1.xpose.msra.mxu0 0.0
    %2312 = vmatprep.subr.mxu0 0.0
    %2313 = vmatpush1.xpose.msra.mxu0 0.0
    %2314 = vmatprep.subr.mxu0 0.0
    %2315 = vmatpush1.xpose.msra.mxu0 0.0
    %2316 = vmatprep.subr.mxu0 0.0
    %2317 = vmatpush1.xpose.msra.mxu0 0.0
    %2318 = vmatprep.subr.mxu0 0.0
    %2319 = vmatpush1.xpose.msra.mxu0 0.0
    %2320 = vmatprep.subr.mxu0 0.0
    %2321 = vmatpush1.xpose.msra.mxu0 0.0
    %2322 = vmatprep.subr.mxu0 0.0
    %2323 = vmatpush1.xpose.msra.mxu0 0.0
    %2324 = vmatprep.subr.mxu0 0.0
    %2325 = vmatpush1.xpose.msra.mxu0 0.0
    %2326 = vmatprep.subr.mxu0 0.0
    %2327 = vmatpush1.xpose.msra.mxu0 0.0
    %2328 = vmatprep.subr.mxu0 0.0
    %2329 = vmatpush1.xpose.msra.mxu0 0.0
    %2330 = vmatprep.subr.mxu0 0.0
    %2331 = vmatpush1.xpose.msra.mxu0 0.0
    %2332 = vmatprep.subr.mxu0 0.0
    %2333 = vmatpush1.xpose.msra.mxu0 0.0
    %2334 = vmatprep.subr.mxu0 0.0
    %2335 = vmatpush1.xpose.msra.mxu0 0.0
    %2336 = vmatprep.subr.mxu0 0.0
    %2337 = vmatpush1.xpose.msra.mxu0 0.0
    %2338 = vmatprep.subr.mxu0 0.0
    %2339 = vmatpush1.xpose.msra.mxu0 0.0
    %2340 = vmatprep.subr.mxu0 0.0
    %2341 = vmatpush1.xpose.msra.mxu0 0.0
    %2342 = vmatprep.subr.mxu0 0.0
    %2343 = vmatpush1.xpose.msra.mxu0 0.0
    %2344 = vmatprep.subr.mxu0 0.0
    %2345 = vmatpush1.xpose.msra.mxu0 0.0
    %2346 = vmatprep.subr.mxu0 0.0
    %2347 = vmatpush1.xpose.msra.mxu0 0.0
    %2348 = vmatprep.subr.mxu0 0.0
    %2349 = vmatpush1.xpose.msra.mxu0 0.0
    %2350 = vmatprep.subr.mxu0 0.0
    %2351 = vmatpush1.xpose.msra.mxu0 0.0
    %2352 = vmatprep.subr.mxu0 0.0
    %2353 = vmatpush1.xpose.msra.mxu0 0.0
    %2354 = vmatprep.subr.mxu0 0.0
    %2355 = vmatpush1.xpose.msra.mxu0 0.0
    %2356 = vmatprep.subr.mxu0 0.0
    %2357 = vmatpush1.xpose.msra.mxu0 0.0
    %2358 = vmatprep.subr.mxu0 0.0
    %2359 = vmatpush1.xpose.msra.mxu0 0.0
    %2360 = vmatprep.subr.mxu0 0.0
    %2361 = vmatpush1.xpose.msra.mxu0 0.0
    %2362 = vmatprep.subr.mxu0 0.0
    %2363 = vmatpush1.xpose.msra.mxu0 0.0
    %2364 = vmatprep.mubr.f32.mxu0 0.0
    %2365 = vmatmul.mubr.f32.gmra.mrb[0].mxu0 %v2296
    %v2366 = vpop.f32.mrb[0].mxu0
    %v2367 = vadd.f32 0.0, %v2366
    %v2368 = vpop.f32.mrb[0].mxu0
    %2369 = vdwg.mxu0
    %2370 = vrot.lane.b32.xlu0 %v2059, 96
    %v2371 = vpop.permute.xlu0 %2370
    %v2372 = vsel %vm236, %v2059, 0
    %v2374 = vsel %vm236, %v2371, 0
    %2376 = vmatprep.subr.mxu0 0.0
    %2377 = vmatpush1.xpose.msra.mxu0 %v2374
    %2378 = vmatprep.subr.mxu0 0.0
    %2379 = vmatpush1.xpose.msra.mxu0 0.0
    %2380 = vmatprep.subr.mxu0 0.0
    %2381 = vmatpush1.xpose.msra.mxu0 0.0
    %2382 = vmatprep.subr.mxu0 0.0
    %2383 = vmatpush1.xpose.msra.mxu0 0.0
    %2384 = vmatprep.subr.mxu0 0.0
    %2385 = vmatpush1.xpose.msra.mxu0 0.0
    %2386 = vmatprep.subr.mxu0 0.0
    %2387 = vmatpush1.xpose.msra.mxu0 0.0
    %2388 = vmatprep.subr.mxu0 0.0
    %2389 = vmatpush1.xpose.msra.mxu0 0.0
    %2390 = vmatprep.subr.mxu0 0.0
    %2391 = vmatpush1.xpose.msra.mxu0 0.0
    %2392 = vmatprep.subr.mxu0 0.0
    %2393 = vmatpush1.xpose.msra.mxu0 0.0
    %2394 = vmatprep.subr.mxu0 0.0
    %2395 = vmatpush1.xpose.msra.mxu0 0.0
    %2396 = vmatprep.subr.mxu0 0.0
    %2397 = vmatpush1.xpose.msra.mxu0 0.0
    %2398 = vmatprep.subr.mxu0 0.0
    %2399 = vmatpush1.xpose.msra.mxu0 0.0
    %2400 = vmatprep.subr.mxu0 0.0
    %2401 = vmatpush1.xpose.msra.mxu0 0.0
    %2402 = vmatprep.subr.mxu0 0.0
    %2403 = vmatpush1.xpose.msra.mxu0 0.0
    %2404 = vmatprep.subr.mxu0 0.0
    %2405 = vmatpush1.xpose.msra.mxu0 0.0
    %2406 = vmatprep.subr.mxu0 0.0
    %2407 = vmatpush1.xpose.msra.mxu0 0.0
    %2408 = vmatprep.subr.mxu0 0.0
    %2409 = vmatpush1.xpose.msra.mxu0 0.0
    %2410 = vmatprep.subr.mxu0 0.0
    %2411 = vmatpush1.xpose.msra.mxu0 0.0
    %2412 = vmatprep.subr.mxu0 0.0
    %2413 = vmatpush1.xpose.msra.mxu0 0.0
    %2414 = vmatprep.subr.mxu0 0.0
    %2415 = vmatpush1.xpose.msra.mxu0 0.0
    %2416 = vmatprep.subr.mxu0 0.0
    %2417 = vmatpush1.xpose.msra.mxu0 0.0
    %2418 = vmatprep.subr.mxu0 0.0
    %2419 = vmatpush1.xpose.msra.mxu0 0.0
    %2420 = vmatprep.subr.mxu0 0.0
    %2421 = vmatpush1.xpose.msra.mxu0 0.0
    %2422 = vmatprep.subr.mxu0 0.0
    %2423 = vmatpush1.xpose.msra.mxu0 0.0
    %2424 = vmatprep.subr.mxu0 0.0
    %2425 = vmatpush1.xpose.msra.mxu0 0.0
    %2426 = vmatprep.subr.mxu0 0.0
    %2427 = vmatpush1.xpose.msra.mxu0 0.0
    %2428 = vmatprep.subr.mxu0 0.0
    %2429 = vmatpush1.xpose.msra.mxu0 0.0
    %2430 = vmatprep.subr.mxu0 0.0
    %2431 = vmatpush1.xpose.msra.mxu0 0.0
    %2432 = vmatprep.subr.mxu0 0.0
    %2433 = vmatpush1.xpose.msra.mxu0 0.0
    %2434 = vmatprep.subr.mxu0 0.0
    %2435 = vmatpush1.xpose.msra.mxu0 0.0
    %2436 = vmatprep.subr.mxu0 0.0
    %2437 = vmatpush1.xpose.msra.mxu0 0.0
    %2438 = vmatprep.subr.mxu0 0.0
    %2439 = vmatpush1.xpose.msra.mxu0 0.0
    %2440 = vmatprep.mubr.f32.mxu0 0.0
    %2441 = vmatmul.mubr.f32.gmra.mrb[0].mxu0 %v2372
    %v2442 = vpop.f32.mrb[0].mxu0
    %v2443 = vadd.f32 0.0, %v2442
    %v2444 = vpop.f32.mrb[0].mxu0
    %2445 = vdwg.mxu0
    %2446 = vrot.lane.b32.xlu0 %v2061, 96
    %v2447 = vpop.permute.xlu0 %2446
    %v2448 = vsel %vm236, %v2061, 0
    %v2450 = vsel %vm236, %v2447, 0
    %2452 = vmatprep.subr.mxu0 0.0
    %2453 = vmatpush1.xpose.msra.mxu0 %v2450
    %2454 = vmatprep.subr.mxu0 0.0
    %2455 = vmatpush1.xpose.msra.mxu0 0.0
    %2456 = vmatprep.subr.mxu0 0.0
    %2457 = vmatpush1.xpose.msra.mxu0 0.0
    %2458 = vmatprep.subr.mxu0 0.0
    %2459 = vmatpush1.xpose.msra.mxu0 0.0
    %2460 = vmatprep.subr.mxu0 0.0
    %2461 = vmatpush1.xpose.msra.mxu0 0.0
    %2462 = vmatprep.subr.mxu0 0.0
    %2463 = vmatpush1.xpose.msra.mxu0 0.0
    %2464 = vmatprep.subr.mxu0 0.0
    %2465 = vmatpush1.xpose.msra.mxu0 0.0
    %2466 = vmatprep.subr.mxu0 0.0
    %2467 = vmatpush1.xpose.msra.mxu0 0.0
    %2468 = vmatprep.subr.mxu0 0.0
    %2469 = vmatpush1.xpose.msra.mxu0 0.0
    %2470 = vmatprep.subr.mxu0 0.0
    %2471 = vmatpush1.xpose.msra.mxu0 0.0
    %2472 = vmatprep.subr.mxu0 0.0
    %2473 = vmatpush1.xpose.msra.mxu0 0.0
    %2474 = vmatprep.subr.mxu0 0.0
    %2475 = vmatpush1.xpose.msra.mxu0 0.0
    %2476 = vmatprep.subr.mxu0 0.0
    %2477 = vmatpush1.xpose.msra.mxu0 0.0
    %2478 = vmatprep.subr.mxu0 0.0
    %2479 = vmatpush1.xpose.msra.mxu0 0.0
    %2480 = vmatprep.subr.mxu0 0.0
    %2481 = vmatpush1.xpose.msra.mxu0 0.0
    %2482 = vmatprep.subr.mxu0 0.0
    %2483 = vmatpush1.xpose.msra.mxu0 0.0
    %2484 = vmatprep.subr.mxu0 0.0
    %2485 = vmatpush1.xpose.msra.mxu0 0.0
    %2486 = vmatprep.subr.mxu0 0.0
    %2487 = vmatpush1.xpose.msra.mxu0 0.0
    %2488 = vmatprep.subr.mxu0 0.0
    %2489 = vmatpush1.xpose.msra.mxu0 0.0
    %2490 = vmatprep.subr.mxu0 0.0
    %2491 = vmatpush1.xpose.msra.mxu0 0.0
    %2492 = vmatprep.subr.mxu0 0.0
    %2493 = vmatpush1.xpose.msra.mxu0 0.0
    %2494 = vmatprep.subr.mxu0 0.0
    %2495 = vmatpush1.xpose.msra.mxu0 0.0
    %2496 = vmatprep.subr.mxu0 0.0
    %2497 = vmatpush1.xpose.msra.mxu0 0.0
    %2498 = vmatprep.subr.mxu0 0.0
    %2499 = vmatpush1.xpose.msra.mxu0 0.0
    %2500 = vmatprep.subr.mxu0 0.0
    %2501 = vmatpush1.xpose.msra.mxu0 0.0
    %2502 = vmatprep.subr.mxu0 0.0
    %2503 = vmatpush1.xpose.msra.mxu0 0.0
    %2504 = vmatprep.subr.mxu0 0.0
    %2505 = vmatpush1.xpose.msra.mxu0 0.0
    %2506 = vmatprep.subr.mxu0 0.0
    %2507 = vmatpush1.xpose.msra.mxu0 0.0
    %2508 = vmatprep.subr.mxu0 0.0
    %2509 = vmatpush1.xpose.msra.mxu0 0.0
    %2510 = vmatprep.subr.mxu0 0.0
    %2511 = vmatpush1.xpose.msra.mxu0 0.0
    %2512 = vmatprep.subr.mxu0 0.0
    %2513 = vmatpush1.xpose.msra.mxu0 0.0
    %2514 = vmatprep.subr.mxu0 0.0
    %2515 = vmatpush1.xpose.msra.mxu0 0.0
    %2516 = vmatprep.mubr.f32.mxu0 0.0
    %2517 = vmatmul.mubr.f32.gmra.mrb[0].mxu0 %v2448
    %v2518 = vpop.f32.mrb[0].mxu0
    %v2519 = vadd.f32 0.0, %v2518
    %v2520 = vpop.f32.mrb[0].mxu0
    %2521 = vdwg.mxu0
    %2522 = vrot.lane.b32.xlu0 %v2063, 96
    %v2523 = vpop.permute.xlu0 %2522
    %v2524 = vsel %vm236, %v2063, 0
    %v2526 = vsel %vm236, %v2523, 0
    %2528 = vmatprep.subr.mxu0 0.0
    %2529 = vmatpush1.xpose.msra.mxu0 %v2526
    %2530 = vmatprep.subr.mxu0 0.0
    %2531 = vmatpush1.xpose.msra.mxu0 0.0
    %2532 = vmatprep.subr.mxu0 0.0
    %2533 = vmatpush1.xpose.msra.mxu0 0.0
    %2534 = vmatprep.subr.mxu0 0.0
    %2535 = vmatpush1.xpose.msra.mxu0 0.0
    %2536 = vmatprep.subr.mxu0 0.0
    %2537 = vmatpush1.xpose.msra.mxu0 0.0
    %2538 = vmatprep.subr.mxu0 0.0
    %2539 = vmatpush1.xpose.msra.mxu0 0.0
    %2540 = vmatprep.subr.mxu0 0.0
    %2541 = vmatpush1.xpose.msra.mxu0 0.0
    %2542 = vmatprep.subr.mxu0 0.0
    %2543 = vmatpush1.xpose.msra.mxu0 0.0
    %2544 = vmatprep.subr.mxu0 0.0
    %2545 = vmatpush1.xpose.msra.mxu0 0.0
    %2546 = vmatprep.subr.mxu0 0.0
    %2547 = vmatpush1.xpose.msra.mxu0 0.0
    %2548 = vmatprep.subr.mxu0 0.0
    %2549 = vmatpush1.xpose.msra.mxu0 0.0
    %2550 = vmatprep.subr.mxu0 0.0
    %2551 = vmatpush1.xpose.msra.mxu0 0.0
    %2552 = vmatprep.subr.mxu0 0.0
    %2553 = vmatpush1.xpose.msra.mxu0 0.0
    %2554 = vmatprep.subr.mxu0 0.0
    %2555 = vmatpush1.xpose.msra.mxu0 0.0
    %2556 = vmatprep.subr.mxu0 0.0
    %2557 = vmatpush1.xpose.msra.mxu0 0.0
    %2558 = vmatprep.subr.mxu0 0.0
    %2559 = vmatpush1.xpose.msra.mxu0 0.0
    %2560 = vmatprep.subr.mxu0 0.0
    %2561 = vmatpush1.xpose.msra.mxu0 0.0
    %2562 = vmatprep.subr.mxu0 0.0
    %2563 = vmatpush1.xpose.msra.mxu0 0.0
    %2564 = vmatprep.subr.mxu0 0.0
    %2565 = vmatpush1.xpose.msra.mxu0 0.0
    %2566 = vmatprep.subr.mxu0 0.0
    %2567 = vmatpush1.xpose.msra.mxu0 0.0
    %2568 = vmatprep.subr.mxu0 0.0
    %2569 = vmatpush1.xpose.msra.mxu0 0.0
    %2570 = vmatprep.subr.mxu0 0.0
    %2571 = vmatpush1.xpose.msra.mxu0 0.0
    %2572 = vmatprep.subr.mxu0 0.0
    %2573 = vmatpush1.xpose.msra.mxu0 0.0
    %2574 = vmatprep.subr.mxu0 0.0
    %2575 = vmatpush1.xpose.msra.mxu0 0.0
    %2576 = vmatprep.subr.mxu0 0.0
    %2577 = vmatpush1.xpose.msra.mxu0 0.0
    %2578 = vmatprep.subr.mxu0 0.0
    %2579 = vmatpush1.xpose.msra.mxu0 0.0
    %2580 = vmatprep.subr.mxu0 0.0
    %2581 = vmatpush1.xpose.msra.mxu0 0.0
    %2582 = vmatprep.subr.mxu0 0.0
    %2583 = vmatpush1.xpose.msra.mxu0 0.0
    %2584 = vmatprep.subr.mxu0 0.0
    %2585 = vmatpush1.xpose.msra.mxu0 0.0
    %2586 = vmatprep.subr.mxu0 0.0
    %2587 = vmatpush1.xpose.msra.mxu0 0.0
    %2588 = vmatprep.subr.mxu0 0.0
    %2589 = vmatpush1.xpose.msra.mxu0 0.0
    %2590 = vmatprep.subr.mxu0 0.0
    %2591 = vmatpush1.xpose.msra.mxu0 0.0
    %2592 = vmatprep.mubr.f32.mxu0 0.0
    %2593 = vmatmul.mubr.f32.gmra.mrb[0].mxu0 %v2524
    %v2594 = vpop.f32.mrb[0].mxu0
    %v2595 = vadd.f32 0.0, %v2594
    %v2596 = vpop.f32.mrb[0].mxu0
    %2597 = vdwg.mxu0
    %2598 = vrot.lane.b32.xlu0 %v2065, 96
    %v2599 = vpop.permute.xlu0 %2598
    %v2600 = vsel %vm236, %v2065, 0
    %v2602 = vsel %vm236, %v2599, 0
    %2604 = vmatprep.subr.mxu0 0.0
    %2605 = vmatpush1.xpose.msra.mxu0 %v2602
    %2606 = vmatprep.subr.mxu0 0.0
    %2607 = vmatpush1.xpose.msra.mxu0 0.0
    %2608 = vmatprep.subr.mxu0 0.0
    %2609 = vmatpush1.xpose.msra.mxu0 0.0
    %2610 = vmatprep.subr.mxu0 0.0
    %2611 = vmatpush1.xpose.msra.mxu0 0.0
    %2612 = vmatprep.subr.mxu0 0.0
    %2613 = vmatpush1.xpose.msra.mxu0 0.0
    %2614 = vmatprep.subr.mxu0 0.0
    %2615 = vmatpush1.xpose.msra.mxu0 0.0
    %2616 = vmatprep.subr.mxu0 0.0
    %2617 = vmatpush1.xpose.msra.mxu0 0.0
    %2618 = vmatprep.subr.mxu0 0.0
    %2619 = vmatpush1.xpose.msra.mxu0 0.0
    %2620 = vmatprep.subr.mxu0 0.0
    %2621 = vmatpush1.xpose.msra.mxu0 0.0
    %2622 = vmatprep.subr.mxu0 0.0
    %2623 = vmatpush1.xpose.msra.mxu0 0.0
    %2624 = vmatprep.subr.mxu0 0.0
    %2625 = vmatpush1.xpose.msra.mxu0 0.0
    %2626 = vmatprep.subr.mxu0 0.0
    %2627 = vmatpush1.xpose.msra.mxu0 0.0
    %2628 = vmatprep.subr.mxu0 0.0
    %2629 = vmatpush1.xpose.msra.mxu0 0.0
    %2630 = vmatprep.subr.mxu0 0.0
    %2631 = vmatpush1.xpose.msra.mxu0 0.0
    %2632 = vmatprep.subr.mxu0 0.0
    %2633 = vmatpush1.xpose.msra.mxu0 0.0
    %2634 = vmatprep.subr.mxu0 0.0
    %2635 = vmatpush1.xpose.msra.mxu0 0.0
    %2636 = vmatprep.subr.mxu0 0.0
    %2637 = vmatpush1.xpose.msra.mxu0 0.0
    %2638 = vmatprep.subr.mxu0 0.0
    %2639 = vmatpush1.xpose.msra.mxu0 0.0
    %2640 = vmatprep.subr.mxu0 0.0
    %2641 = vmatpush1.xpose.msra.mxu0 0.0
    %2642 = vmatprep.subr.mxu0 0.0
    %2643 = vmatpush1.xpose.msra.mxu0 0.0
    %2644 = vmatprep.subr.mxu0 0.0
    %2645 = vmatpush1.xpose.msra.mxu0 0.0
    %2646 = vmatprep.subr.mxu0 0.0
    %2647 = vmatpush1.xpose.msra.mxu0 0.0
    %2648 = vmatprep.subr.mxu0 0.0
    %2649 = vmatpush1.xpose.msra.mxu0 0.0
    %2650 = vmatprep.subr.mxu0 0.0
    %2651 = vmatpush1.xpose.msra.mxu0 0.0
    %2652 = vmatprep.subr.mxu0 0.0
    %2653 = vmatpush1.xpose.msra.mxu0 0.0
    %2654 = vmatprep.subr.mxu0 0.0
    %2655 = vmatpush1.xpose.msra.mxu0 0.0
    %2656 = vmatprep.subr.mxu0 0.0
    %2657 = vmatpush1.xpose.msra.mxu0 0.0
    %2658 = vmatprep.subr.mxu0 0.0
    %2659 = vmatpush1.xpose.msra.mxu0 0.0
    %2660 = vmatprep.subr.mxu0 0.0
    %2661 = vmatpush1.xpose.msra.mxu0 0.0
    %2662 = vmatprep.subr.mxu0 0.0
    %2663 = vmatpush1.xpose.msra.mxu0 0.0
    %2664 = vmatprep.subr.mxu0 0.0
    %2665 = vmatpush1.xpose.msra.mxu0 0.0
    %2666 = vmatprep.subr.mxu0 0.0
    %2667 = vmatpush1.xpose.msra.mxu0 0.0
    %2668 = vmatprep.mubr.f32.mxu0 0.0
    %2669 = vmatmul.mubr.f32.gmra.mrb[0].mxu0 %v2600
    %v2670 = vpop.f32.mrb[0].mxu0
    %v2671 = vadd.f32 0.0, %v2670
    %v2672 = vpop.f32.mrb[0].mxu0
    %2673 = vdwg.mxu0
    %v2674 = vmul.f32 %v2139, 0.35355338
    %v2675 = vmul.f32 %v2215, 0.35355338
    %v2676 = vmul.f32 %v2291, 0.35355338
    %v2677 = vmul.f32 %v2367, 0.35355338
    %v2678 = vmul.f32 %v2443, 0.35355338
    %v2679 = vmul.f32 %v2519, 0.35355338
    %v2680 = vmul.f32 %v2595, 0.35355338
    %v2681 = vmul.f32 %v2671, 0.35355338
    %v2682 = vadd.f32 %v2674, %v79
    %v2683 = vadd.f32 %v2675, %v83
    %v2684 = vadd.f32 %v2676, %v79
    %v2685 = vadd.f32 %v2677, %v83
    %v2686 = vadd.f32 %v2678, %v79
    %v2687 = vadd.f32 %v2679, %v83
    %v2688 = vadd.f32 %v2680, %v79
    %v2689 = vadd.f32 %v2681, %v83
    %v2690 = vsel %vm236, %v2682, -inf
    %2691 = vmax.xlane.f32.xlu0 %v2690
    %v2692 = vpop.xlane.xlu0 %2691
    %v2693 = vsel %vm236, %v2683, -inf
    %2694 = vmax.xlane.f32.xlu0 %v2693
    %v2695 = vpop.xlane.xlu0 %2694
    %v2696 = vsel %vm236, %v2684, -inf
    %2697 = vmax.xlane.f32.xlu0 %v2696
    %v2698 = vpop.xlane.xlu0 %2697
    %v2699 = vsel %vm236, %v2685, -inf
    %2700 = vmax.xlane.f32.xlu0 %v2699
    %v2701 = vpop.xlane.xlu0 %2700
    %v2702 = vsel %vm236, %v2686, -inf
    %2703 = vmax.xlane.f32.xlu0 %v2702
    %v2704 = vpop.xlane.xlu0 %2703
    %v2705 = vsel %vm236, %v2687, -inf
    %2706 = vmax.xlane.f32.xlu0 %v2705
    %v2707 = vpop.xlane.xlu0 %2706
    %v2708 = vsel %vm236, %v2688, -inf
    %2709 = vmax.xlane.f32.xlu0 %v2708
    %v2710 = vpop.xlane.xlu0 %2709
    %v2711 = vsel %vm236, %v2689, -inf
    %2712 = vmax.xlane.f32.xlu0 %v2711
    %v2713 = vpop.xlane.xlu0 %2712
    %v2714 = vsub.f32 %v2682, %v2692
    %v2715 = vsub.f32 %v2683, %v2695
    %v2716 = vsub.f32 %v2684, %v2698
    %v2717 = vsub.f32 %v2685, %v2701
    %v2718 = vsub.f32 %v2686, %v2704
    %v2719 = vsub.f32 %v2687, %v2707
    %v2720 = vsub.f32 %v2688, %v2710
    %v2721 = vsub.f32 %v2689, %v2713
    %v2722 = vmul.f32 %v2714, 1.442695
    %v2723 = vpow.pop %v2722
    %v2724 = vmul.f32 %v2715, 1.442695
    %v2725 = vpow.pop %v2724
    %v2726 = vmul.f32 %v2716, 1.442695
    %v2727 = vpow.pop %v2726
    %v2728 = vmul.f32 %v2717, 1.442695
    %v2729 = vpow.pop %v2728
    %v2730 = vmul.f32 %v2718, 1.442695
    %v2731 = vpow.pop %v2730
    %v2732 = vmul.f32 %v2719, 1.442695
    %v2733 = vpow.pop %v2732
    %v2734 = vmul.f32 %v2720, 1.442695
    %v2735 = vpow.pop %v2734
    %v2736 = vmul.f32 %v2721, 1.442695
    %v2737 = vpow.pop %v2736
    %v2738 = vsel %vm236, %v2723, 0.0
    %2739 = vadd.xlane.f32.xlu0 %v2738
    %v2740 = vpop.xlane.xlu0 %2739
    %v2741 = vsel %vm236, %v2725, 0.0
    %2742 = vadd.xlane.f32.xlu0 %v2741
    %v2743 = vpop.xlane.xlu0 %2742
    %v2744 = vsel %vm236, %v2727, 0.0
    %2745 = vadd.xlane.f32.xlu0 %v2744
    %v2746 = vpop.xlane.xlu0 %2745
    %v2747 = vsel %vm236, %v2729, 0.0
    %2748 = vadd.xlane.f32.xlu0 %v2747
    %v2749 = vpop.xlane.xlu0 %2748
    %v2750 = vsel %vm236, %v2731, 0.0
    %2751 = vadd.xlane.f32.xlu0 %v2750
    %v2752 = vpop.xlane.xlu0 %2751
    %v2753 = vsel %vm236, %v2733, 0.0
    %2754 = vadd.xlane.f32.xlu0 %v2753
    %v2755 = vpop.xlane.xlu0 %2754
    %v2756 = vsel %vm236, %v2735, 0.0
    %2757 = vadd.xlane.f32.xlu0 %v2756
    %v2758 = vpop.xlane.xlu0 %2757
    %v2759 = vsel %vm236, %v2737, 0.0
    %2760 = vadd.xlane.f32.xlu0 %v2759
    %v2761 = vpop.xlane.xlu0 %2760
    %v2762 = vrcp.pop %v2740
    %v2763 = vrcp.pop %v2743
    %v2764 = vrcp.pop %v2746
    %v2765 = vrcp.pop %v2749
    %v2766 = vrcp.pop %v2752
    %v2767 = vrcp.pop %v2755
    %v2768 = vrcp.pop %v2758
    %v2769 = vrcp.pop %v2761
    %v2770 = vmul.f32 %v2723, %v2762
    %v2771 = vmul.f32 %v2725, %v2763
    %v2772 = vmul.f32 %v2727, %v2764
    %v2773 = vmul.f32 %v2729, %v2765
    %v2774 = vmul.f32 %v2731, %v2766
    %v2775 = vmul.f32 %v2733, %v2767
    %v2776 = vmul.f32 %v2735, %v2768
    %v2777 = vmul.f32 %v2737, %v2769
    %2778 = vrot.lane.b32.xlu0 %v2044, 64
    %v2779 = vpop.permute.xlu0 %2778
    %v2782 = vsel %vm236, %v2770, 0
    %2784 = vmatprep.subr.mxu0 0.0
    %2785 = vmatpush1.msra.mxu0 %v2779
    %2786 = vmatprep.subr.mxu0 0.0
    %2787 = vmatpush1.msra.mxu0 0.0
    %2788 = vmatprep.subr.mxu0 0.0
    %2789 = vmatpush1.msra.mxu0 0.0
    %2790 = vmatprep.subr.mxu0 0.0
    %2791 = vmatpush1.msra.mxu0 0.0
    %2792 = vmatprep.subr.mxu0 0.0
    %2793 = vmatpush1.msra.mxu0 0.0
    %2794 = vmatprep.subr.mxu0 0.0
    %2795 = vmatpush1.msra.mxu0 0.0
    %2796 = vmatprep.subr.mxu0 0.0
    %2797 = vmatpush1.msra.mxu0 0.0
    %2798 = vmatprep.subr.mxu0 0.0
    %2799 = vmatpush1.msra.mxu0 0.0
    %2800 = vmatprep.subr.mxu0 0.0
    %2801 = vmatpush1.msra.mxu0 0.0
    %2802 = vmatprep.subr.mxu0 0.0
    %2803 = vmatpush1.msra.mxu0 0.0
    %2804 = vmatprep.subr.mxu0 0.0
    %2805 = vmatpush1.msra.mxu0 0.0
    %2806 = vmatprep.subr.mxu0 0.0
    %2807 = vmatpush1.msra.mxu0 0.0
    %2808 = vmatprep.subr.mxu0 0.0
    %2809 = vmatpush1.msra.mxu0 0.0
    %2810 = vmatprep.subr.mxu0 0.0
    %2811 = vmatpush1.msra.mxu0 0.0
    %2812 = vmatprep.subr.mxu0 0.0
    %2813 = vmatpush1.msra.mxu0 0.0
    %2814 = vmatprep.subr.mxu0 0.0
    %2815 = vmatpush1.msra.mxu0 0.0
    %2816 = vmatprep.subr.mxu0 0.0
    %2817 = vmatpush1.msra.mxu0 0.0
    %2818 = vmatprep.subr.mxu0 0.0
    %2819 = vmatpush1.msra.mxu0 0.0
    %2820 = vmatprep.subr.mxu0 0.0
    %2821 = vmatpush1.msra.mxu0 0.0
    %2822 = vmatprep.subr.mxu0 0.0
    %2823 = vmatpush1.msra.mxu0 0.0
    %2824 = vmatprep.subr.mxu0 0.0
    %2825 = vmatpush1.msra.mxu0 0.0
    %2826 = vmatprep.subr.mxu0 0.0
    %2827 = vmatpush1.msra.mxu0 0.0
    %2828 = vmatprep.subr.mxu0 0.0
    %2829 = vmatpush1.msra.mxu0 0.0
    %2830 = vmatprep.subr.mxu0 0.0
    %2831 = vmatpush1.msra.mxu0 0.0
    %2832 = vmatprep.subr.mxu0 0.0
    %2833 = vmatpush1.msra.mxu0 0.0
    %2834 = vmatprep.subr.mxu0 0.0
    %2835 = vmatpush1.msra.mxu0 0.0
    %2836 = vmatprep.subr.mxu0 0.0
    %2837 = vmatpush1.msra.mxu0 0.0
    %2838 = vmatprep.subr.mxu0 0.0
    %2839 = vmatpush1.msra.mxu0 0.0
    %2840 = vmatprep.subr.mxu0 0.0
    %2841 = vmatpush1.msra.mxu0 0.0
    %2842 = vmatprep.subr.mxu0 0.0
    %2843 = vmatpush1.msra.mxu0 0.0
    %2844 = vmatprep.subr.mxu0 0.0
    %2845 = vmatpush1.msra.mxu0 0.0
    %2846 = vmatprep.subr.mxu0 0.0
    %2847 = vmatpush1.msra.mxu0 0.0
    %2848 = vmatprep.mubr.f32.mxu0 0.0
    %2849 = vmatmul.mubr.f32.gmra.mrb[0].mxu0 %v2782
    %v2850 = vpop.f32.mrb[0].mxu0
    %v2851 = vadd.f32 0.0, %v2850
    %v2852 = vpop.f32.mrb[0].mxu0
    %2853 = vdwg.mxu0
    %2854 = vrot.lane.b32.xlu0 %v2049, 64
    %v2855 = vpop.permute.xlu0 %2854
    %v2858 = vsel %vm236, %v2771, 0
    %2860 = vmatprep.subr.mxu0 0.0
    %2861 = vmatpush1.msra.mxu0 %v2855
    %2862 = vmatprep.subr.mxu0 0.0
    %2863 = vmatpush1.msra.mxu0 0.0
    %2864 = vmatprep.subr.mxu0 0.0
    %2865 = vmatpush1.msra.mxu0 0.0
    %2866 = vmatprep.subr.mxu0 0.0
    %2867 = vmatpush1.msra.mxu0 0.0
    %2868 = vmatprep.subr.mxu0 0.0
    %2869 = vmatpush1.msra.mxu0 0.0
    %2870 = vmatprep.subr.mxu0 0.0
    %2871 = vmatpush1.msra.mxu0 0.0
    %2872 = vmatprep.subr.mxu0 0.0
    %2873 = vmatpush1.msra.mxu0 0.0
    %2874 = vmatprep.subr.mxu0 0.0
    %2875 = vmatpush1.msra.mxu0 0.0
    %2876 = vmatprep.subr.mxu0 0.0
    %2877 = vmatpush1.msra.mxu0 0.0
    %2878 = vmatprep.subr.mxu0 0.0
    %2879 = vmatpush1.msra.mxu0 0.0
    %2880 = vmatprep.subr.mxu0 0.0
    %2881 = vmatpush1.msra.mxu0 0.0
    %2882 = vmatprep.subr.mxu0 0.0
    %2883 = vmatpush1.msra.mxu0 0.0
    %2884 = vmatprep.subr.mxu0 0.0
    %2885 = vmatpush1.msra.mxu0 0.0
    %2886 = vmatprep.subr.mxu0 0.0
    %2887 = vmatpush1.msra.mxu0 0.0
    %2888 = vmatprep.subr.mxu0 0.0
    %2889 = vmatpush1.msra.mxu0 0.0
    %2890 = vmatprep.subr.mxu0 0.0
    %2891 = vmatpush1.msra.mxu0 0.0
    %2892 = vmatprep.subr.mxu0 0.0
    %2893 = vmatpush1.msra.mxu0 0.0
    %2894 = vmatprep.subr.mxu0 0.0
    %2895 = vmatpush1.msra.mxu0 0.0
    %2896 = vmatprep.subr.mxu0 0.0
    %2897 = vmatpush1.msra.mxu0 0.0
    %2898 = vmatprep.subr.mxu0 0.0
    %2899 = vmatpush1.msra.mxu0 0.0
    %2900 = vmatprep.subr.mxu0 0.0
    %2901 = vmatpush1.msra.mxu0 0.0
    %2902 = vmatprep.subr.mxu0 0.0
    %2903 = vmatpush1.msra.mxu0 0.0
    %2904 = vmatprep.subr.mxu0 0.0
    %2905 = vmatpush1.msra.mxu0 0.0
    %2906 = vmatprep.subr.mxu0 0.0
    %2907 = vmatpush1.msra.mxu0 0.0
    %2908 = vmatprep.subr.mxu0 0.0
    %2909 = vmatpush1.msra.mxu0 0.0
    %2910 = vmatprep.subr.mxu0 0.0
    %2911 = vmatpush1.msra.mxu0 0.0
    %2912 = vmatprep.subr.mxu0 0.0
    %2913 = vmatpush1.msra.mxu0 0.0
    %2914 = vmatprep.subr.mxu0 0.0
    %2915 = vmatpush1.msra.mxu0 0.0
    %2916 = vmatprep.subr.mxu0 0.0
    %2917 = vmatpush1.msra.mxu0 0.0
    %2918 = vmatprep.subr.mxu0 0.0
    %2919 = vmatpush1.msra.mxu0 0.0
    %2920 = vmatprep.subr.mxu0 0.0
    %2921 = vmatpush1.msra.mxu0 0.0
    %2922 = vmatprep.subr.mxu0 0.0
    %2923 = vmatpush1.msra.mxu0 0.0
    %2924 = vmatprep.mubr.f32.mxu0 0.0
    %2925 = vmatmul.mubr.f32.gmra.mrb[0].mxu0 %v2858
    %v2926 = vpop.f32.mrb[0].mxu0
    %v2927 = vadd.f32 0.0, %v2926
    %v2928 = vpop.f32.mrb[0].mxu0
    %2929 = vdwg.mxu0
    %2930 = vrot.lane.b32.xlu0 %v2055, 64
    %v2931 = vpop.permute.xlu0 %2930
    %v2934 = vsel %vm236, %v2772, 0
    %2936 = vmatprep.subr.mxu0 0.0
    %2937 = vmatpush1.msra.mxu0 %v2931
    %2938 = vmatprep.subr.mxu0 0.0
    %2939 = vmatpush1.msra.mxu0 0.0
    %2940 = vmatprep.subr.mxu0 0.0
    %2941 = vmatpush1.msra.mxu0 0.0
    %2942 = vmatprep.subr.mxu0 0.0
    %2943 = vmatpush1.msra.mxu0 0.0
    %2944 = vmatprep.subr.mxu0 0.0
    %2945 = vmatpush1.msra.mxu0 0.0
    %2946 = vmatprep.subr.mxu0 0.0
    %2947 = vmatpush1.msra.mxu0 0.0
    %2948 = vmatprep.subr.mxu0 0.0
    %2949 = vmatpush1.msra.mxu0 0.0
    %2950 = vmatprep.subr.mxu0 0.0
    %2951 = vmatpush1.msra.mxu0 0.0
    %2952 = vmatprep.subr.mxu0 0.0
    %2953 = vmatpush1.msra.mxu0 0.0
    %2954 = vmatprep.subr.mxu0 0.0
    %2955 = vmatpush1.msra.mxu0 0.0
    %2956 = vmatprep.subr.mxu0 0.0
    %2957 = vmatpush1.msra.mxu0 0.0
    %2958 = vmatprep.subr.mxu0 0.0
    %2959 = vmatpush1.msra.mxu0 0.0
    %2960 = vmatprep.subr.mxu0 0.0
    %2961 = vmatpush1.msra.mxu0 0.0
    %2962 = vmatprep.subr.mxu0 0.0
    %2963 = vmatpush1.msra.mxu0 0.0
    %2964 = vmatprep.subr.mxu0 0.0
    %2965 = vmatpush1.msra.mxu0 0.0
    %2966 = vmatprep.subr.mxu0 0.0
    %2967 = vmatpush1.msra.mxu0 0.0
    %2968 = vmatprep.subr.mxu0 0.0
    %2969 = vmatpush1.msra.mxu0 0.0
    %2970 = vmatprep.subr.mxu0 0.0
    %2971 = vmatpush1.msra.mxu0 0.0
    %2972 = vmatprep.subr.mxu0 0.0
    %2973 = vmatpush1.msra.mxu0 0.0
    %2974 = vmatprep.subr.mxu0 0.0
    %2975 = vmatpush1.msra.mxu0 0.0
    %2976 = vmatprep.subr.mxu0 0.0
    %2977 = vmatpush1.msra.mxu0 0.0
    %2978 = vmatprep.subr.mxu0 0.0
    %2979 = vmatpush1.msra.mxu0 0.0
    %2980 = vmatprep.subr.mxu0 0.0
    %2981 = vmatpush1.msra.mxu0 0.0
    %2982 = vmatprep.subr.mxu0 0.0
    %2983 = vmatpush1.msra.mxu0 0.0
    %2984 = vmatprep.subr.mxu0 0.0
    %2985 = vmatpush1.msra.mxu0 0.0
    %2986 = vmatprep.subr.mxu0 0.0
    %2987 = vmatpush1.msra.mxu0 0.0
    %2988 = vmatprep.subr.mxu0 0.0
    %2989 = vmatpush1.msra.mxu0 0.0
    %2990 = vmatprep.subr.mxu0 0.0
    %2991 = vmatpush1.msra.mxu0 0.0
    %2992 = vmatprep.subr.mxu0 0.0
    %2993 = vmatpush1.msra.mxu0 0.0
    %2994 = vmatprep.subr.mxu0 0.0
    %2995 = vmatpush1.msra.mxu0 0.0
    %2996 = vmatprep.subr.mxu0 0.0
    %2997 = vmatpush1.msra.mxu0 0.0
    %2998 = vmatprep.subr.mxu0 0.0
    %2999 = vmatpush1.msra.mxu0 0.0
    %3000 = vmatprep.mubr.f32.mxu0 0.0
    %3001 = vmatmul.mubr.f32.gmra.mrb[0].mxu0 %v2934
    %v3002 = vpop.f32.mrb[0].mxu0
    %v3003 = vadd.f32 0.0, %v3002
    %v3004 = vpop.f32.mrb[0].mxu0
    %3005 = vdwg.mxu0
    %3006 = vrot.lane.b32.xlu0 %v2057, 64
    %v3007 = vpop.permute.xlu0 %3006
    %v3010 = vsel %vm236, %v2773, 0
    %3012 = vmatprep.subr.mxu0 0.0
    %3013 = vmatpush1.msra.mxu0 %v3007
    %3014 = vmatprep.subr.mxu0 0.0
    %3015 = vmatpush1.msra.mxu0 0.0
    %3016 = vmatprep.subr.mxu0 0.0
    %3017 = vmatpush1.msra.mxu0 0.0
    %3018 = vmatprep.subr.mxu0 0.0
    %3019 = vmatpush1.msra.mxu0 0.0
    %3020 = vmatprep.subr.mxu0 0.0
    %3021 = vmatpush1.msra.mxu0 0.0
    %3022 = vmatprep.subr.mxu0 0.0
    %3023 = vmatpush1.msra.mxu0 0.0
    %3024 = vmatprep.subr.mxu0 0.0
    %3025 = vmatpush1.msra.mxu0 0.0
    %3026 = vmatprep.subr.mxu0 0.0
    %3027 = vmatpush1.msra.mxu0 0.0
    %3028 = vmatprep.subr.mxu0 0.0
    %3029 = vmatpush1.msra.mxu0 0.0
    %3030 = vmatprep.subr.mxu0 0.0
    %3031 = vmatpush1.msra.mxu0 0.0
    %3032 = vmatprep.subr.mxu0 0.0
    %3033 = vmatpush1.msra.mxu0 0.0
    %3034 = vmatprep.subr.mxu0 0.0
    %3035 = vmatpush1.msra.mxu0 0.0
    %3036 = vmatprep.subr.mxu0 0.0
    %3037 = vmatpush1.msra.mxu0 0.0
    %3038 = vmatprep.subr.mxu0 0.0
    %3039 = vmatpush1.msra.mxu0 0.0
    %3040 = vmatprep.subr.mxu0 0.0
    %3041 = vmatpush1.msra.mxu0 0.0
    %3042 = vmatprep.subr.mxu0 0.0
    %3043 = vmatpush1.msra.mxu0 0.0
    %3044 = vmatprep.subr.mxu0 0.0
    %3045 = vmatpush1.msra.mxu0 0.0
    %3046 = vmatprep.subr.mxu0 0.0
    %3047 = vmatpush1.msra.mxu0 0.0
    %3048 = vmatprep.subr.mxu0 0.0
    %3049 = vmatpush1.msra.mxu0 0.0
    %3050 = vmatprep.subr.mxu0 0.0
    %3051 = vmatpush1.msra.mxu0 0.0
    %3052 = vmatprep.subr.mxu0 0.0
    %3053 = vmatpush1.msra.mxu0 0.0
    %3054 = vmatprep.subr.mxu0 0.0
    %3055 = vmatpush1.msra.mxu0 0.0
    %3056 = vmatprep.subr.mxu0 0.0
    %3057 = vmatpush1.msra.mxu0 0.0
    %3058 = vmatprep.subr.mxu0 0.0
    %3059 = vmatpush1.msra.mxu0 0.0
    %3060 = vmatprep.subr.mxu0 0.0
    %3061 = vmatpush1.msra.mxu0 0.0
    %3062 = vmatprep.subr.mxu0 0.0
    %3063 = vmatpush1.msra.mxu0 0.0
    %3064 = vmatprep.subr.mxu0 0.0
    %3065 = vmatpush1.msra.mxu0 0.0
    %3066 = vmatprep.subr.mxu0 0.0
    %3067 = vmatpush1.msra.mxu0 0.0
    %3068 = vmatprep.subr.mxu0 0.0
    %3069 = vmatpush1.msra.mxu0 0.0
    %3070 = vmatprep.subr.mxu0 0.0
    %3071 = vmatpush1.msra.mxu0 0.0
    %3072 = vmatprep.subr.mxu0 0.0
    %3073 = vmatpush1.msra.mxu0 0.0
    %3074 = vmatprep.subr.mxu0 0.0
    %3075 = vmatpush1.msra.mxu0 0.0
    %3076 = vmatprep.mubr.f32.mxu0 0.0
    %3077 = vmatmul.mubr.f32.gmra.mrb[0].mxu0 %v3010
    %v3078 = vpop.f32.mrb[0].mxu0
    %v3079 = vadd.f32 0.0, %v3078
    %v3080 = vpop.f32.mrb[0].mxu0
    %3081 = vdwg.mxu0
    %3082 = vrot.lane.b32.xlu0 %v2059, 64
    %v3083 = vpop.permute.xlu0 %3082
    %v3086 = vsel %vm236, %v2774, 0
    %3088 = vmatprep.subr.mxu0 0.0
    %3089 = vmatpush1.msra.mxu0 %v3083
    %3090 = vmatprep.subr.mxu0 0.0
    %3091 = vmatpush1.msra.mxu0 0.0
    %3092 = vmatprep.subr.mxu0 0.0
    %3093 = vmatpush1.msra.mxu0 0.0
    %3094 = vmatprep.subr.mxu0 0.0
    %3095 = vmatpush1.msra.mxu0 0.0
    %3096 = vmatprep.subr.mxu0 0.0
    %3097 = vmatpush1.msra.mxu0 0.0
    %3098 = vmatprep.subr.mxu0 0.0
    %3099 = vmatpush1.msra.mxu0 0.0
    %3100 = vmatprep.subr.mxu0 0.0
    %3101 = vmatpush1.msra.mxu0 0.0
    %3102 = vmatprep.subr.mxu0 0.0
    %3103 = vmatpush1.msra.mxu0 0.0
    %3104 = vmatprep.subr.mxu0 0.0
    %3105 = vmatpush1.msra.mxu0 0.0
    %3106 = vmatprep.subr.mxu0 0.0
    %3107 = vmatpush1.msra.mxu0 0.0
    %3108 = vmatprep.subr.mxu0 0.0
    %3109 = vmatpush1.msra.mxu0 0.0
    %3110 = vmatprep.subr.mxu0 0.0
    %3111 = vmatpush1.msra.mxu0 0.0
    %3112 = vmatprep.subr.mxu0 0.0
    %3113 = vmatpush1.msra.mxu0 0.0
    %3114 = vmatprep.subr.mxu0 0.0
    %3115 = vmatpush1.msra.mxu0 0.0
    %3116 = vmatprep.subr.mxu0 0.0
    %3117 = vmatpush1.msra.mxu0 0.0
    %3118 = vmatprep.subr.mxu0 0.0
    %3119 = vmatpush1.msra.mxu0 0.0
    %3120 = vmatprep.subr.mxu0 0.0
    %3121 = vmatpush1.msra.mxu0 0.0
    %3122 = vmatprep.subr.mxu0 0.0
    %3123 = vmatpush1.msra.mxu0 0.0
    %3124 = vmatprep.subr.mxu0 0.0
    %3125 = vmatpush1.msra.mxu0 0.0
    %3126 = vmatprep.subr.mxu0 0.0
    %3127 = vmatpush1.msra.mxu0 0.0
    %3128 = vmatprep.subr.mxu0 0.0
    %3129 = vmatpush1.msra.mxu0 0.0
    %3130 = vmatprep.subr.mxu0 0.0
    %3131 = vmatpush1.msra.mxu0 0.0
    %3132 = vmatprep.subr.mxu0 0.0
    %3133 = vmatpush1.msra.mxu0 0.0
    %3134 = vmatprep.subr.mxu0 0.0
    %3135 = vmatpush1.msra.mxu0 0.0
    %3136 = vmatprep.subr.mxu0 0.0
    %3137 = vmatpush1.msra.mxu0 0.0
    %3138 = vmatprep.subr.mxu0 0.0
    %3139 = vmatpush1.msra.mxu0 0.0
    %3140 = vmatprep.subr.mxu0 0.0
    %3141 = vmatpush1.msra.mxu0 0.0
    %3142 = vmatprep.subr.mxu0 0.0
    %3143 = vmatpush1.msra.mxu0 0.0
    %3144 = vmatprep.subr.mxu0 0.0
    %3145 = vmatpush1.msra.mxu0 0.0
    %3146 = vmatprep.subr.mxu0 0.0
    %3147 = vmatpush1.msra.mxu0 0.0
    %3148 = vmatprep.subr.mxu0 0.0
    %3149 = vmatpush1.msra.mxu0 0.0
    %3150 = vmatprep.subr.mxu0 0.0
    %3151 = vmatpush1.msra.mxu0 0.0
    %3152 = vmatprep.mubr.f32.mxu0 0.0
    %3153 = vmatmul.mubr.f32.gmra.mrb[0].mxu0 %v3086
    %v3154 = vpop.f32.mrb[0].mxu0
    %v3155 = vadd.f32 0.0, %v3154
    %v3156 = vpop.f32.mrb[0].mxu0
    %3157 = vdwg.mxu0
    %3158 = vrot.lane.b32.xlu0 %v2061, 64
    %v3159 = vpop.permute.xlu0 %3158
    %v3162 = vsel %vm236, %v2775, 0
    %3164 = vmatprep.subr.mxu0 0.0
    %3165 = vmatpush1.msra.mxu0 %v3159
    %3166 = vmatprep.subr.mxu0 0.0
    %3167 = vmatpush1.msra.mxu0 0.0
    %3168 = vmatprep.subr.mxu0 0.0
    %3169 = vmatpush1.msra.mxu0 0.0
    %3170 = vmatprep.subr.mxu0 0.0
    %3171 = vmatpush1.msra.mxu0 0.0
    %3172 = vmatprep.subr.mxu0 0.0
    %3173 = vmatpush1.msra.mxu0 0.0
    %3174 = vmatprep.subr.mxu0 0.0
    %3175 = vmatpush1.msra.mxu0 0.0
    %3176 = vmatprep.subr.mxu0 0.0
    %3177 = vmatpush1.msra.mxu0 0.0
    %3178 = vmatprep.subr.mxu0 0.0
    %3179 = vmatpush1.msra.mxu0 0.0
    %3180 = vmatprep.subr.mxu0 0.0
    %3181 = vmatpush1.msra.mxu0 0.0
    %3182 = vmatprep.subr.mxu0 0.0
    %3183 = vmatpush1.msra.mxu0 0.0
    %3184 = vmatprep.subr.mxu0 0.0
    %3185 = vmatpush1.msra.mxu0 0.0
    %3186 = vmatprep.subr.mxu0 0.0
    %3187 = vmatpush1.msra.mxu0 0.0
    %3188 = vmatprep.subr.mxu0 0.0
    %3189 = vmatpush1.msra.mxu0 0.0
    %3190 = vmatprep.subr.mxu0 0.0
    %3191 = vmatpush1.msra.mxu0 0.0
    %3192 = vmatprep.subr.mxu0 0.0
    %3193 = vmatpush1.msra.mxu0 0.0
    %3194 = vmatprep.subr.mxu0 0.0
    %3195 = vmatpush1.msra.mxu0 0.0
    %3196 = vmatprep.subr.mxu0 0.0
    %3197 = vmatpush1.msra.mxu0 0.0
    %3198 = vmatprep.subr.mxu0 0.0
    %3199 = vmatpush1.msra.mxu0 0.0
    %3200 = vmatprep.subr.mxu0 0.0
    %3201 = vmatpush1.msra.mxu0 0.0
    %3202 = vmatprep.subr.mxu0 0.0
    %3203 = vmatpush1.msra.mxu0 0.0
    %3204 = vmatprep.subr.mxu0 0.0
    %3205 = vmatpush1.msra.mxu0 0.0
    %3206 = vmatprep.subr.mxu0 0.0
    %3207 = vmatpush1.msra.mxu0 0.0
    %3208 = vmatprep.subr.mxu0 0.0
    %3209 = vmatpush1.msra.mxu0 0.0
    %3210 = vmatprep.subr.mxu0 0.0
    %3211 = vmatpush1.msra.mxu0 0.0
    %3212 = vmatprep.subr.mxu0 0.0
    %3213 = vmatpush1.msra.mxu0 0.0
    %3214 = vmatprep.subr.mxu0 0.0
    %3215 = vmatpush1.msra.mxu0 0.0
    %3216 = vmatprep.subr.mxu0 0.0
    %3217 = vmatpush1.msra.mxu0 0.0
    %3218 = vmatprep.subr.mxu0 0.0
    %3219 = vmatpush1.msra.mxu0 0.0
    %3220 = vmatprep.subr.mxu0 0.0
    %3221 = vmatpush1.msra.mxu0 0.0
    %3222 = vmatprep.subr.mxu0 0.0
    %3223 = vmatpush1.msra.mxu0 0.0
    %3224 = vmatprep.subr.mxu0 0.0
    %3225 = vmatpush1.msra.mxu0 0.0
    %3226 = vmatprep.subr.mxu0 0.0
    %3227 = vmatpush1.msra.mxu0 0.0
    %3228 = vmatprep.mubr.f32.mxu0 0.0
    %3229 = vmatmul.mubr.f32.gmra.mrb[0].mxu0 %v3162
    %v3230 = vpop.f32.mrb[0].mxu0
    %v3231 = vadd.f32 0.0, %v3230
    %v3232 = vpop.f32.mrb[0].mxu0
    %3233 = vdwg.mxu0
    %3234 = vrot.lane.b32.xlu0 %v2063, 64
    %v3235 = vpop.permute.xlu0 %3234
    %v3238 = vsel %vm236, %v2776, 0
    %3240 = vmatprep.subr.mxu0 0.0
    %3241 = vmatpush1.msra.mxu0 %v3235
    %3242 = vmatprep.subr.mxu0 0.0
    %3243 = vmatpush1.msra.mxu0 0.0
    %3244 = vmatprep.subr.mxu0 0.0
    %3245 = vmatpush1.msra.mxu0 0.0
    %3246 = vmatprep.subr.mxu0 0.0
    %3247 = vmatpush1.msra.mxu0 0.0
    %3248 = vmatprep.subr.mxu0 0.0
    %3249 = vmatpush1.msra.mxu0 0.0
    %3250 = vmatprep.subr.mxu0 0.0
    %3251 = vmatpush1.msra.mxu0 0.0
    %3252 = vmatprep.subr.mxu0 0.0
    %3253 = vmatpush1.msra.mxu0 0.0
    %3254 = vmatprep.subr.mxu0 0.0
    %3255 = vmatpush1.msra.mxu0 0.0
    %3256 = vmatprep.subr.mxu0 0.0
    %3257 = vmatpush1.msra.mxu0 0.0
    %3258 = vmatprep.subr.mxu0 0.0
    %3259 = vmatpush1.msra.mxu0 0.0
    %3260 = vmatprep.subr.mxu0 0.0
    %3261 = vmatpush1.msra.mxu0 0.0
    %3262 = vmatprep.subr.mxu0 0.0
    %3263 = vmatpush1.msra.mxu0 0.0
    %3264 = vmatprep.subr.mxu0 0.0
    %3265 = vmatpush1.msra.mxu0 0.0
    %3266 = vmatprep.subr.mxu0 0.0
    %3267 = vmatpush1.msra.mxu0 0.0
    %3268 = vmatprep.subr.mxu0 0.0
    %3269 = vmatpush1.msra.mxu0 0.0
    %3270 = vmatprep.subr.mxu0 0.0
    %3271 = vmatpush1.msra.mxu0 0.0
    %3272 = vmatprep.subr.mxu0 0.0
    %3273 = vmatpush1.msra.mxu0 0.0
    %3274 = vmatprep.subr.mxu0 0.0
    %3275 = vmatpush1.msra.mxu0 0.0
    %3276 = vmatprep.subr.mxu0 0.0
    %3277 = vmatpush1.msra.mxu0 0.0
    %3278 = vmatprep.subr.mxu0 0.0
    %3279 = vmatpush1.msra.mxu0 0.0
    %3280 = vmatprep.subr.mxu0 0.0
    %3281 = vmatpush1.msra.mxu0 0.0
    %3282 = vmatprep.subr.mxu0 0.0
    %3283 = vmatpush1.msra.mxu0 0.0
    %3284 = vmatprep.subr.mxu0 0.0
    %3285 = vmatpush1.msra.mxu0 0.0
    %3286 = vmatprep.subr.mxu0 0.0
    %3287 = vmatpush1.msra.mxu0 0.0
    %3288 = vmatprep.subr.mxu0 0.0
    %3289 = vmatpush1.msra.mxu0 0.0
    %3290 = vmatprep.subr.mxu0 0.0
    %3291 = vmatpush1.msra.mxu0 0.0
    %3292 = vmatprep.subr.mxu0 0.0
    %3293 = vmatpush1.msra.mxu0 0.0
    %3294 = vmatprep.subr.mxu0 0.0
    %3295 = vmatpush1.msra.mxu0 0.0
    %3296 = vmatprep.subr.mxu0 0.0
    %3297 = vmatpush1.msra.mxu0 0.0
    %3298 = vmatprep.subr.mxu0 0.0
    %3299 = vmatpush1.msra.mxu0 0.0
    %3300 = vmatprep.subr.mxu0 0.0
    %3301 = vmatpush1.msra.mxu0 0.0
    %3302 = vmatprep.subr.mxu0 0.0
    %3303 = vmatpush1.msra.mxu0 0.0
    %3304 = vmatprep.mubr.f32.mxu0 0.0
    %3305 = vmatmul.mubr.f32.gmra.mrb[0].mxu0 %v3238
    %v3306 = vpop.f32.mrb[0].mxu0
    %v3307 = vadd.f32 0.0, %v3306
    %v3308 = vpop.f32.mrb[0].mxu0
    %3309 = vdwg.mxu0
    %3310 = vrot.lane.b32.xlu0 %v2065, 64
    %v3311 = vpop.permute.xlu0 %3310
    %v3314 = vsel %vm236, %v2777, 0
    %3316 = vmatprep.subr.mxu0 0.0
    %3317 = vmatpush1.msra.mxu0 %v3311
    %3318 = vmatprep.subr.mxu0 0.0
    %3319 = vmatpush1.msra.mxu0 0.0
    %3320 = vmatprep.subr.mxu0 0.0
    %3321 = vmatpush1.msra.mxu0 0.0
    %3322 = vmatprep.subr.mxu0 0.0
    %3323 = vmatpush1.msra.mxu0 0.0
    %3324 = vmatprep.subr.mxu0 0.0
    %3325 = vmatpush1.msra.mxu0 0.0
    %3326 = vmatprep.subr.mxu0 0.0
    %3327 = vmatpush1.msra.mxu0 0.0
    %3328 = vmatprep.subr.mxu0 0.0
    %3329 = vmatpush1.msra.mxu0 0.0
    %3330 = vmatprep.subr.mxu0 0.0
    %3331 = vmatpush1.msra.mxu0 0.0
    %3332 = vmatprep.subr.mxu0 0.0
    %3333 = vmatpush1.msra.mxu0 0.0
    %3334 = vmatprep.subr.mxu0 0.0
    %3335 = vmatpush1.msra.mxu0 0.0
    %3336 = vmatprep.subr.mxu0 0.0
    %3337 = vmatpush1.msra.mxu0 0.0
    %3338 = vmatprep.subr.mxu0 0.0
    %3339 = vmatpush1.msra.mxu0 0.0
    %3340 = vmatprep.subr.mxu0 0.0
    %3341 = vmatpush1.msra.mxu0 0.0
    %3342 = vmatprep.subr.mxu0 0.0
    %3343 = vmatpush1.msra.mxu0 0.0
    %3344 = vmatprep.subr.mxu0 0.0
    %3345 = vmatpush1.msra.mxu0 0.0
    %3346 = vmatprep.subr.mxu0 0.0
    %3347 = vmatpush1.msra.mxu0 0.0
    %3348 = vmatprep.subr.mxu0 0.0
    %3349 = vmatpush1.msra.mxu0 0.0
    %3350 = vmatprep.subr.mxu0 0.0
    %3351 = vmatpush1.msra.mxu0 0.0
    %3352 = vmatprep.subr.mxu0 0.0
    %3353 = vmatpush1.msra.mxu0 0.0
    %3354 = vmatprep.subr.mxu0 0.0
    %3355 = vmatpush1.msra.mxu0 0.0
    %3356 = vmatprep.subr.mxu0 0.0
    %3357 = vmatpush1.msra.mxu0 0.0
    %3358 = vmatprep.subr.mxu0 0.0
    %3359 = vmatpush1.msra.mxu0 0.0
    %3360 = vmatprep.subr.mxu0 0.0
    %3361 = vmatpush1.msra.mxu0 0.0
    %3362 = vmatprep.subr.mxu0 0.0
    %3363 = vmatpush1.msra.mxu0 0.0
    %3364 = vmatprep.subr.mxu0 0.0
    %3365 = vmatpush1.msra.mxu0 0.0
    %3366 = vmatprep.subr.mxu0 0.0
    %3367 = vmatpush1.msra.mxu0 0.0
    %3368 = vmatprep.subr.mxu0 0.0
    %3369 = vmatpush1.msra.mxu0 0.0
    %3370 = vmatprep.subr.mxu0 0.0
    %3371 = vmatpush1.msra.mxu0 0.0
    %3372 = vmatprep.subr.mxu0 0.0
    %3373 = vmatpush1.msra.mxu0 0.0
    %3374 = vmatprep.subr.mxu0 0.0
    %3375 = vmatpush1.msra.mxu0 0.0
    %3376 = vmatprep.subr.mxu0 0.0
    %3377 = vmatpush1.msra.mxu0 0.0
    %3378 = vmatprep.subr.mxu0 0.0
    %3379 = vmatpush1.msra.mxu0 0.0
    %3380 = vmatprep.mubr.f32.mxu0 0.0
    %3381 = vmatmul.mubr.f32.gmra.mrb[0].mxu0 %v3314
    %v3382 = vpop.f32.mrb[0].mxu0
    %v3383 = vadd.f32 0.0, %v3382
    %v3384 = vpop.f32.mrb[0].mxu0
    %3385 = vdwg.mxu0
    %3388 = vrot.lane.b32.xlu0 %v3003, 8
    %v3389 = vpop.permute.xlu0 %3388
    %3390 = vrot.lane.b32.xlu0 %v3079, 8
    %v3391 = vpop.permute.xlu0 %3390
    %3396 = vrot.lane.b32.xlu0 %v3155, 16
    %v3397 = vpop.permute.xlu0 %3396
    %3398 = vrot.lane.b32.xlu0 %v3231, 16
    %v3399 = vpop.permute.xlu0 %3398
    %3404 = vrot.lane.b32.xlu0 %v3307, 24
    %v3405 = vpop.permute.xlu0 %3404
    %3406 = vrot.lane.b32.xlu0 %v3383, 24
    %v3407 = vpop.permute.xlu0 %3406
    %v3410 = vsel %vm236, %v2851, %v3389
    %v3411 = vsel %vm236, %v2927, %v3391
    %v3412 = vsel %vm1581, %v3410, %v3397
    %v3413 = vsel %vm1581, %v3411, %v3399
    %v3414 = vsel %vm1584, %v3412, %v3405
    %v3415 = vsel %vm1584, %v3413, %v3407
    %s3416 = scalar_lea.vmem %s5, 32
    %v3417 = vld [vmem:[%s3416] sm:$0xff]
    %v3418 = vld [vmem:[%s3416 + $0x8] sm:$0xff]
    %v3419 = vld [vmem:[%s3416 + $0x10] sm:$0xff]
    %v3420 = vld [vmem:[%s3416 + $0x18] sm:$0xff]
    %v3422 = vsel %vm88, %v3414, 0
    %v3425 = vsel %vm88, %v3415, 0
    %3427 = vmatprep.subr.mxu0 0.0
    %3428 = vmatpush1.msra.mxu0 %v3417
    %3429 = vmatprep.subr.mxu0 0.0
    %3430 = vmatpush1.msra.mxu0 %v3418
    %3431 = vmatprep.subr.mxu0 0.0
    %3432 = vmatpush1.msra.mxu0 %v3419
    %3433 = vmatprep.subr.mxu0 0.0
    %3434 = vmatpush1.msra.mxu0 %v3420
    %3435 = vmatprep.subr.mxu0 0.0
    %3436 = vmatpush1.msra.mxu0 0.0
    %3437 = vmatprep.subr.mxu0 0.0
    %3438 = vmatpush1.msra.mxu0 0.0
    %3439 = vmatprep.subr.mxu0 0.0
    %3440 = vmatpush1.msra.mxu0 0.0
    %3441 = vmatprep.subr.mxu0 0.0
    %3442 = vmatpush1.msra.mxu0 0.0
    %3443 = vmatprep.subr.mxu0 0.0
    %3444 = vmatpush1.msra.mxu0 0.0
    %3445 = vmatprep.subr.mxu0 0.0
    %3446 = vmatpush1.msra.mxu0 0.0
    %3447 = vmatprep.subr.mxu0 0.0
    %3448 = vmatpush1.msra.mxu0 0.0
    %3449 = vmatprep.subr.mxu0 0.0
    %3450 = vmatpush1.msra.mxu0 0.0
    %3451 = vmatprep.subr.mxu0 0.0
    %3452 = vmatpush1.msra.mxu0 0.0
    %3453 = vmatprep.subr.mxu0 0.0
    %3454 = vmatpush1.msra.mxu0 0.0
    %3455 = vmatprep.subr.mxu0 0.0
    %3456 = vmatpush1.msra.mxu0 0.0
    %3457 = vmatprep.subr.mxu0 0.0
    %3458 = vmatpush1.msra.mxu0 0.0
    %3459 = vmatprep.subr.mxu0 0.0
    %3460 = vmatpush1.msra.mxu0 0.0
    %3461 = vmatprep.subr.mxu0 0.0
    %3462 = vmatpush1.msra.mxu0 0.0
    %3463 = vmatprep.subr.mxu0 0.0
    %3464 = vmatpush1.msra.mxu0 0.0
    %3465 = vmatprep.subr.mxu0 0.0
    %3466 = vmatpush1.msra.mxu0 0.0
    %3467 = vmatprep.subr.mxu0 0.0
    %3468 = vmatpush1.msra.mxu0 0.0
    %3469 = vmatprep.subr.mxu0 0.0
    %3470 = vmatpush1.msra.mxu0 0.0
    %3471 = vmatprep.subr.mxu0 0.0
    %3472 = vmatpush1.msra.mxu0 0.0
    %3473 = vmatprep.subr.mxu0 0.0
    %3474 = vmatpush1.msra.mxu0 0.0
    %3475 = vmatprep.subr.mxu0 0.0
    %3476 = vmatpush1.msra.mxu0 0.0
    %3477 = vmatprep.subr.mxu0 0.0
    %3478 = vmatpush1.msra.mxu0 0.0
    %3479 = vmatprep.subr.mxu0 0.0
    %3480 = vmatpush1.msra.mxu0 0.0
    %3481 = vmatprep.subr.mxu0 0.0
    %3482 = vmatpush1.msra.mxu0 0.0
    %3483 = vmatprep.subr.mxu0 0.0
    %3484 = vmatpush1.msra.mxu0 0.0
    %3485 = vmatprep.subr.mxu0 0.0
    %3486 = vmatpush1.msra.mxu0 0.0
    %3487 = vmatprep.subr.mxu0 0.0
    %3488 = vmatpush1.msra.mxu0 0.0
    %3489 = vmatprep.subr.mxu0 0.0
    %3490 = vmatpush1.msra.mxu0 0.0
    %3491 = vmatprep.mubr.f32.mxu0 0.0
    %3492 = vmatmul.mubr.f32.gmra.mrb[0].mxu0 %v3422
    %v3493 = vpop.f32.mrb[0].mxu0
    %v3494 = vadd.f32 0.0, %v3493
    %v3495 = vpop.f32.mrb[0].mxu0
    %3496 = vmatprep.mubr.f32.mxu0 0.0
    %3497 = vmatmul.mubr.f32.gmra.mrb[0].mxu0 %v3425
    %v3498 = vpop.f32.mrb[0].mxu0
    %v3499 = vadd.f32 0.0, %v3498
    %v3500 = vpop.f32.mrb[0].mxu0
    %3501 = vdwg.mxu0
    %v3502 = vadd.f32 %v1916, %v3494
    %v3503 = vadd.f32 %v1917, %v3499
    %s3504 = scalar_lea.vmem %s6, 1
    %v3505 = vld [vmem:[%s3504] sm:$0x1]
    %v3507 = vlaneseq
    %v3508 = vshrl.u32 %v3507, 7
    %v3509 = vsub.s32 0, %v3508
    %v3510 = vrot.slane %v3505, %v3509
    %v3512 = vadd.f32 %v3502, %v3510
    %v3513 = vadd.f32 %v3503, %v3510
    %v3514 = vld [vmem:[#allocation4 + $0x6] sm:$0x1]
    %v3515 = vld [vmem:[#allocation4 + $0x7] sm:$0x1]
    %v3516 = vsel %vm88, %v3512, 0.0
    %3517 = vadd.xlane.f32.xlu0 %v3516
    %v3518 = vpop.xlane.xlu0 %3517
    %v3519 = vsel %vm88, %v3513, 0.0
    %3520 = vadd.xlane.f32.xlu0 %v3519
    %v3521 = vpop.xlane.xlu0 %3520
    %v3522 = vmul.f32 %v3518, %v95
    %v3523 = vmul.f32 %v3521, %v95
    %v3524 = vsub.f32 %v3512, %v3522
    %v3525 = vsub.f32 %v3513, %v3523
    %v3526 = vmul.f32 %v3524, %v3524
    %v3527 = vmul.f32 %v3525, %v3525
    %v3528 = vsel %vm88, %v3526, 0.0
    %3529 = vadd.xlane.f32.xlu0 %v3528
    %v3530 = vpop.xlane.xlu0 %3529
    %v3531 = vsel %vm88, %v3527, 0.0
    %3532 = vadd.xlane.f32.xlu0 %v3531
    %v3533 = vpop.xlane.xlu0 %3532
    %v3534 = vmul.f32 %v3530, %v95
    %v3535 = vmul.f32 %v3533, %v95
    %v3536 = vadd.f32 %v3534, 1e-06
    %v3537 = vadd.f32 %v3535, 1e-06
    %v3538 = vrsqrt.pop %v3536
    %v3539 = vrsqrt.pop %v3537
    %v3540 = vmul.f32 %v3524, %v3538
    %v3541 = vmul.f32 %v3525, %v3539
    %v3542 = vlaneseq
    %v3543 = vshrl.u32 %v3542, 7
    %v3544 = vsub.s32 0, %v3543
    %v3545 = vrot.slane %v3514, %v3544
    %v3546 = vmul.f32 %v3540, %v3545
    %v3547 = vmul.f32 %v3541, %v3545
    %v3548 = vlaneseq
    %v3549 = vshrl.u32 %v3548, 7
    %v3550 = vsub.s32 0, %v3549
    %v3551 = vrot.slane %v3515, %v3550
    %v3552 = vadd.f32 %v3546, %v3551
    %v3553 = vadd.f32 %v3547, %v3551
    %s3554 = scalar_lea.vmem %s7, 32
    %v3555 = vld [vmem:[%s3554] sm:$0xff]
    %v3556 = vld [vmem:[%s3554 + $0x8] sm:$0xff]
    %v3557 = vld [vmem:[%s3554 + $0x10] sm:$0xff]
    %v3558 = vld [vmem:[%s3554 + $0x18] sm:$0xff]
    %s3559 = scalar_lea.vmem %s8, 1
    %v3560 = vld [vmem:[%s3559] sm:$0x1]
    %v3562 = vlaneseq
    %v3563 = vshrl.u32 %v3562, 7
    %v3564 = vsub.s32 0, %v3563
    %v3565 = vrot.slane %v3560, %v3564
    %v3568 = vsel %vm88, %v3552, 0
    %v3571 = vsel %vm88, %v3553, 0
    %3573 = vmatprep.subr.mxu0 0.0
    %3574 = vmatpush1.msra.mxu0 %v3555
    %3575 = vmatprep.subr.mxu0 0.0
    %3576 = vmatpush1.msra.mxu0 %v3556
    %3577 = vmatprep.subr.mxu0 0.0
    %3578 = vmatpush1.msra.mxu0 %v3557
    %3579 = vmatprep.subr.mxu0 0.0
    %3580 = vmatpush1.msra.mxu0 %v3558
    %3581 = vmatprep.subr.mxu0 0.0
    %3582 = vmatpush1.msra.mxu0 0.0
    %3583 = vmatprep.subr.mxu0 0.0
    %3584 = vmatpush1.msra.mxu0 0.0
    %3585 = vmatprep.subr.mxu0 0.0
    %3586 = vmatpush1.msra.mxu0 0.0
    %3587 = vmatprep.subr.mxu0 0.0
    %3588 = vmatpush1.msra.mxu0 0.0
    %3589 = vmatprep.subr.mxu0 0.0
    %3590 = vmatpush1.msra.mxu0 0.0
    %3591 = vmatprep.subr.mxu0 0.0
    %3592 = vmatpush1.msra.mxu0 0.0
    %3593 = vmatprep.subr.mxu0 0.0
    %3594 = vmatpush1.msra.mxu0 0.0
    %3595 = vmatprep.subr.mxu0 0.0
    %3596 = vmatpush1.msra.mxu0 0.0
    %3597 = vmatprep.subr.mxu0 0.0
    %3598 = vmatpush1.msra.mxu0 0.0
    %3599 = vmatprep.subr.mxu0 0.0
    %3600 = vmatpush1.msra.mxu0 0.0
    %3601 = vmatprep.subr.mxu0 0.0
    %3602 = vmatpush1.msra.mxu0 0.0
    %3603 = vmatprep.subr.mxu0 0.0
    %3604 = vmatpush1.msra.mxu0 0.0
    %3605 = vmatprep.subr.mxu0 0.0
    %3606 = vmatpush1.msra.mxu0 0.0
    %3607 = vmatprep.subr.mxu0 0.0
    %3608 = vmatpush1.msra.mxu0 0.0
    %3609 = vmatprep.subr.mxu0 0.0
    %3610 = vmatpush1.msra.mxu0 0.0
    %3611 = vmatprep.subr.mxu0 0.0
    %3612 = vmatpush1.msra.mxu0 0.0
    %3613 = vmatprep.subr.mxu0 0.0
    %3614 = vmatpush1.msra.mxu0 0.0
    %3615 = vmatprep.subr.mxu0 0.0
    %3616 = vmatpush1.msra.mxu0 0.0
    %3617 = vmatprep.subr.mxu0 0.0
    %3618 = vmatpush1.msra.mxu0 0.0
    %3619 = vmatprep.subr.mxu0 0.0
    %3620 = vmatpush1.msra.mxu0 0.0
    %3621 = vmatprep.subr.mxu0 0.0
    %3622 = vmatpush1.msra.mxu0 0.0
    %3623 = vmatprep.subr.mxu0 0.0
    %3624 = vmatpush1.msra.mxu0 0.0
    %3625 = vmatprep.subr.mxu0 0.0
    %3626 = vmatpush1.msra.mxu0 0.0
    %3627 = vmatprep.subr.mxu0 0.0
    %3628 = vmatpush1.msra.mxu0 0.0
    %3629 = vmatprep.subr.mxu0 0.0
    %3630 = vmatpush1.msra.mxu0 0.0
    %3631 = vmatprep.subr.mxu0 0.0
    %3632 = vmatpush1.msra.mxu0 0.0
    %3633 = vmatprep.subr.mxu0 0.0
    %3634 = vmatpush1.msra.mxu0 0.0
    %3635 = vmatprep.subr.mxu0 0.0
    %3636 = vmatpush1.msra.mxu0 0.0
    %3637 = vmatprep.mubr.f32.mxu0 0.0
    %3638 = vmatmul.mubr.f32.gmra.mrb[0].mxu0 %v3568
    %v3639 = vpop.f32.mrb[0].mxu0
    %v3640 = vadd.f32 %v3565, %v3639
    %v3641 = vpop.f32.mrb[0].mxu0
    %3642 = vmatprep.mubr.f32.mxu0 0.0
    %3643 = vmatmul.mubr.f32.gmra.mrb[0].mxu0 %v3571
    %v3644 = vpop.f32.mrb[0].mxu0
    %v3645 = vadd.f32 %v3565, %v3644
    %v3646 = vpop.f32.mrb[0].mxu0
    %3647 = vdwg.mxu0
    %v3648 = vmax.f32 %v3640, 0.0
    %v3649 = vmax.f32 %v3645, 0.0
    %s3650 = scalar_lea.vmem %s9, 64
    %v3651 = vld [vmem:[%s3650] sm:$0xff]
    %v3652 = vld [vmem:[%s3650 + $0x8] sm:$0xff]
    %v3653 = vld [vmem:[%s3650 + $0x10] sm:$0xff]
    %v3654 = vld [vmem:[%s3650 + $0x18] sm:$0xff]
    %v3655 = vld [vmem:[%s3650 + $0x20] sm:$0xff]
    %v3656 = vld [vmem:[%s3650 + $0x28] sm:$0xff]
    %v3657 = vld [vmem:[%s3650 + $0x30] sm:$0xff]
    %v3658 = vld [vmem:[%s3650 + $0x38] sm:$0xff]
    %v3660 = vsel %vm1825, %v3648, 0
    %v3663 = vsel %vm1825, %v3649, 0
    %3665 = vmatprep.subr.mxu0 0.0
    %3666 = vmatpush1.msra.mxu0 %v3651
    %3667 = vmatprep.subr.mxu0 0.0
    %3668 = vmatpush1.msra.mxu0 %v3652
    %3669 = vmatprep.subr.mxu0 0.0
    %3670 = vmatpush1.msra.mxu0 %v3653
    %3671 = vmatprep.subr.mxu0 0.0
    %3672 = vmatpush1.msra.mxu0 %v3654
    %3673 = vmatprep.subr.mxu0 0.0
    %3674 = vmatpush1.msra.mxu0 %v3655
    %3675 = vmatprep.subr.mxu0 0.0
    %3676 = vmatpush1.msra.mxu0 %v3656
    %3677 = vmatprep.subr.mxu0 0.0
    %3678 = vmatpush1.msra.mxu0 %v3657
    %3679 = vmatprep.subr.mxu0 0.0
    %3680 = vmatpush1.msra.mxu0 %v3658
    %3681 = vmatprep.subr.mxu0 0.0
    %3682 = vmatpush1.msra.mxu0 0.0
    %3683 = vmatprep.subr.mxu0 0.0
    %3684 = vmatpush1.msra.mxu0 0.0
    %3685 = vmatprep.subr.mxu0 0.0
    %3686 = vmatpush1.msra.mxu0 0.0
    %3687 = vmatprep.subr.mxu0 0.0
    %3688 = vmatpush1.msra.mxu0 0.0
    %3689 = vmatprep.subr.mxu0 0.0
    %3690 = vmatpush1.msra.mxu0 0.0
    %3691 = vmatprep.subr.mxu0 0.0
    %3692 = vmatpush1.msra.mxu0 0.0
    %3693 = vmatprep.subr.mxu0 0.0
    %3694 = vmatpush1.msra.mxu0 0.0
    %3695 = vmatprep.subr.mxu0 0.0
    %3696 = vmatpush1.msra.mxu0 0.0
    %3697 = vmatprep.subr.mxu0 0.0
    %3698 = vmatpush1.msra.mxu0 0.0
    %3699 = vmatprep.subr.mxu0 0.0
    %3700 = vmatpush1.msra.mxu0 0.0
    %3701 = vmatprep.subr.mxu0 0.0
    %3702 = vmatpush1.msra.mxu0 0.0
    %3703 = vmatprep.subr.mxu0 0.0
    %3704 = vmatpush1.msra.mxu0 0.0
    %3705 = vmatprep.subr.mxu0 0.0
    %3706 = vmatpush1.msra.mxu0 0.0
    %3707 = vmatprep.subr.mxu0 0.0
    %3708 = vmatpush1.msra.mxu0 0.0
    %3709 = vmatprep.subr.mxu0 0.0
    %3710 = vmatpush1.msra.mxu0 0.0
    %3711 = vmatprep.subr.mxu0 0.0
    %3712 = vmatpush1.msra.mxu0 0.0
    %3713 = vmatprep.subr.mxu0 0.0
    %3714 = vmatpush1.msra.mxu0 0.0
    %3715 = vmatprep.subr.mxu0 0.0
    %3716 = vmatpush1.msra.mxu0 0.0
    %3717 = vmatprep.subr.mxu0 0.0
    %3718 = vmatpush1.msra.mxu0 0.0
    %3719 = vmatprep.subr.mxu0 0.0
    %3720 = vmatpush1.msra.mxu0 0.0
    %3721 = vmatprep.subr.mxu0 0.0
    %3722 = vmatpush1.msra.mxu0 0.0
    %3723 = vmatprep.subr.mxu0 0.0
    %3724 = vmatpush1.msra.mxu0 0.0
    %3725 = vmatprep.subr.mxu0 0.0
    %3726 = vmatpush1.msra.mxu0 0.0
    %3727 = vmatprep.subr.mxu0 0.0
    %3728 = vmatpush1.msra.mxu0 0.0
    %3729 = vmatprep.mubr.f32.mxu0 0.0
    %3730 = vmatmul.mubr.f32.gmra.mrb[0].mxu0 %v3660
    %v3731 = vpop.f32.mrb[0].mxu0
    %v3732 = vadd.f32 0.0, %v3731
    %v3733 = vpop.f32.mrb[0].mxu0
    %3734 = vmatprep.mubr.f32.mxu0 0.0
    %3735 = vmatmul.mubr.f32.gmra.mrb[0].mxu0 %v3663
    %v3736 = vpop.f32.mrb[0].mxu0
    %v3737 = vadd.f32 0.0, %v3736
    %v3738 = vpop.f32.mrb[0].mxu0
    %3739 = vdwg.mxu0
    %v3740 = vadd.f32 %v3512, %v3732
    %v3741 = vadd.f32 %v3513, %v3737
    %s3742 = scalar_lea.vmem %s10, 1
    %v3743 = vld [vmem:[%s3742] sm:$0x1]
    %v3745 = vlaneseq
    %v3746 = vshrl.u32 %v3745, 7
    %v3747 = vsub.s32 0, %v3746
    %v3748 = vrot.slane %v3743, %v3747
    %v3750 = vadd.f32 %v3740, %v3748
    %v3751 = vadd.f32 %v3741, %v3748
    %v3752 = vld [vmem:[#allocation4 + $0x8] sm:$0x1]
    %v3753 = vld [vmem:[#allocation4 + $0x9] sm:$0x1]
    %v3754 = vsel %vm88, %v3750, 0.0
    %3755 = vadd.xlane.f32.xlu0 %v3754
    %v3756 = vpop.xlane.xlu0 %3755
    %v3757 = vsel %vm88, %v3751, 0.0
    %3758 = vadd.xlane.f32.xlu0 %v3757
    %v3759 = vpop.xlane.xlu0 %3758
    %v3760 = vmul.f32 %v3756, %v95
    %v3761 = vmul.f32 %v3759, %v95
    %v3762 = vsub.f32 %v3750, %v3760
    %v3763 = vsub.f32 %v3751, %v3761
    %v3764 = vmul.f32 %v3762, %v3762
    %v3765 = vmul.f32 %v3763, %v3763
    %v3766 = vsel %vm88, %v3764, 0.0
    %3767 = vadd.xlane.f32.xlu0 %v3766
    %v3768 = vpop.xlane.xlu0 %3767
    %v3769 = vsel %vm88, %v3765, 0.0
    %3770 = vadd.xlane.f32.xlu0 %v3769
    %v3771 = vpop.xlane.xlu0 %3770
    %v3772 = vmul.f32 %v3768, %v95
    %v3773 = vmul.f32 %v3771, %v95
    %v3774 = vadd.f32 %v3772, 1e-06
    %v3775 = vadd.f32 %v3773, 1e-06
    %v3776 = vrsqrt.pop %v3774
    %v3777 = vrsqrt.pop %v3775
    %v3778 = vmul.f32 %v3762, %v3776
    %v3779 = vmul.f32 %v3763, %v3777
    %v3780 = vlaneseq
    %v3781 = vshrl.u32 %v3780, 7
    %v3782 = vsub.s32 0, %v3781
    %v3783 = vrot.slane %v3752, %v3782
    %v3784 = vmul.f32 %v3778, %v3783
    %v3785 = vmul.f32 %v3779, %v3783
    %v3786 = vlaneseq
    %v3787 = vshrl.u32 %v3786, 7
    %v3788 = vsub.s32 0, %v3787
    %v3789 = vrot.slane %v3753, %v3788
    %v3790 = vadd.f32 %v3784, %v3789
    %v3791 = vadd.f32 %v3785, %v3789
    %v3794 = vcombine.high %v3790, %v3790
    %v3795 = vcombine.high %v3791, %v3791
    %v3796 = vlaneseq
    %v3797 = vshrl.u32 %v3796, 7
    %v3798 = vsub.s32 0, %v3797
    %v3799 = vrot.slane %v3790, %v3798
    %v3800 = vlaneseq
    %v3801 = vshrl.u32 %v3800, 7
    %v3802 = vsub.s32 0, %v3801
    %v3803 = vrot.slane %v3794, %v3802
    %v3804 = vlaneseq
    %v3805 = vshrl.u32 %v3804, 7
    %v3806 = vsub.s32 0, %v3805
    %v3807 = vrot.slane %v3791, %v3806
    %v3808 = vlaneseq
    %v3809 = vshrl.u32 %v3808, 7
    %v3810 = vsub.s32 0, %v3809
    %v3811 = vrot.slane %v3795, %v3810
    %vm3812 = vcmask 1041409
    %v3813 = vsel %vm3812, %v3803, %v3799
    %vm3814 = vcmask 1042434
    %v3815 = vsel %vm3814, %v3807, %v3813
    %vm3816 = vcmask 1043459
    %v3817 = vsel %vm3816, %v3811, %v3815
    %v3819 = vlaneseq
    %v3820 = vshrl.u32 %v3819, 7
    %v3821 = vsub.s32 1, %v3820
    %v3822 = vrot.slane %v3790, %v3821
    %v3823 = vlaneseq
    %v3824 = vshrl.u32 %v3823, 7
    %v3825 = vsub.s32 1, %v3824
    %v3826 = vrot.slane %v3794, %v3825
    %v3827 = vlaneseq
    %v3828 = vshrl.u32 %v3827, 7
    %v3829 = vsub.s32 1, %v3828
    %v3830 = vrot.slane %v3791, %v3829
    %v3831 = vlaneseq
    %v3832 = vshrl.u32 %v3831, 7
    %v3833 = vsub.s32 1, %v3832
    %v3834 = vrot.slane %v3795, %v3833
    %v3835 = vsel %vm3812, %v3826, %v3822
    %v3836 = vsel %vm3814, %v3830, %v3835
    %v3837 = vsel %vm3816, %v3834, %v3836
    %3838 = vrot.lane.b32.xlu0 %v3837, 32
    %v3839 = vpop.permute.xlu0 %3838
    %v3841 = vlaneseq
    %v3842 = vshrl.u32 %v3841, 7
    %v3843 = vsub.s32 2, %v3842
    %v3844 = vrot.slane %v3790, %v3843
    %v3845 = vlaneseq
    %v3846 = vshrl.u32 %v3845, 7
    %v3847 = vsub.s32 2, %v3846
    %v3848 = vrot.slane %v3794, %v3847
    %v3849 = vlaneseq
    %v3850 = vshrl.u32 %v3849, 7
    %v3851 = vsub.s32 2, %v3850
    %v3852 = vrot.slane %v3791, %v3851
    %v3853 = vlaneseq
    %v3854 = vshrl.u32 %v3853, 7
    %v3855 = vsub.s32 2, %v3854
    %v3856 = vrot.slane %v3795, %v3855
    %v3857 = vsel %vm3812, %v3848, %v3844
    %v3858 = vsel %vm3814, %v3852, %v3857
    %v3859 = vsel %vm3816, %v3856, %v3858
    %3860 = vrot.lane.b32.xlu0 %v3859, 64
    %v3861 = vpop.permute.xlu0 %3860
    %v3863 = vlaneseq
    %v3864 = vshrl.u32 %v3863, 7
    %v3865 = vsub.s32 3, %v3864
    %v3866 = vrot.slane %v3790, %v3865
    %v3867 = vlaneseq
    %v3868 = vshrl.u32 %v3867, 7
    %v3869 = vsub.s32 3, %v3868
    %v3870 = vrot.slane %v3794, %v3869
    %v3871 = vlaneseq
    %v3872 = vshrl.u32 %v3871, 7
    %v3873 = vsub.s32 3, %v3872
    %v3874 = vrot.slane %v3791, %v3873
    %v3875 = vlaneseq
    %v3876 = vshrl.u32 %v3875, 7
    %v3877 = vsub.s32 3, %v3876
    %v3878 = vrot.slane %v3795, %v3877
    %v3879 = vsel %vm3812, %v3870, %v3866
    %v3880 = vsel %vm3814, %v3874, %v3879
    %v3881 = vsel %vm3816, %v3878, %v3880
    %3882 = vrot.lane.b32.xlu0 %v3881, 96
    %v3883 = vpop.permute.xlu0 %3882
    %v3885 = vsel %vm88, %v3817, %v3839
    %v3886 = vsel %vm1825, %v3885, %v3861
    %vm3887 = vcmask 785408
    %v3888 = vsel %vm3887, %v3886, %v3883
    %3889 = vst [vmem:[%s11] sm:$0xf] %v3888
    // Predicated region
    $region54: #{encoder_forward.1} parent=1 // pred_check
      _
    $region55: #{encoder_forward.1} parent=1 // pred_check_branch
      %3891 = sbr.rel (0) target = $region57
    $region56: #{encoder_forward.1} parent=1 // pred_region
      _
    $region57: #{encoder_forward.1} parent=1 // pred_fallthru
      _
    // Predicated region
    $region58: #{encoder_forward.1} parent=1 // pred_check
      _
    $region59: #{encoder_forward.1} parent=1 // pred_check_branch
      %3893 = sbr.rel (0) target = $region61
    $region60: #{encoder_forward.1} parent=1 // pred_region
      _
    $region61: #{encoder_forward.1} parent=1 // pred_fallthru
      _
    %3894 = vsyncpa [#allocation3], 1
    %3895 = vsyncpa [#allocation5], 1

</llo_original>
